<compile_context>
chip_gen: v7x
topology: tpu7x:2x2x1
jax: 0.10.0
libtpu: 0.0.40
codegen_flags: <defaults>
</compile_context>

<pallas_src>
import functools

import jax
import jax.numpy as jnp
from jax import lax
from jax.experimental import pallas as pl
from jax.experimental.pallas import tpu as pltpu


VMEM_LIMIT = 32 * 1024 * 1024  # explicit scoped-VMEM cap (safe on v5e/v6e/v7x)

# Tile targets (multiples of 128 so they map cleanly on v5e's 4x128 MXU and
# stay well under v7x's 64 MiB VMEM with double buffering:
# 2*(256*512 + 512*256 + 256*256)*4B ~= 2.6 MiB).
TM_TARGET = 256
TN_TARGET = 256
TK_TARGET = 512


def _pick_tile(dim, target):
    """Use `target` tile when it divides `dim`, else the full extent."""
    if dim >= target and dim % target == 0:
        return target
    return dim


# ----------------------------------------------------------------------------
# Fused tiled linear kernel: Y = act(X @ W + b) [+ residual] [-> layernorm]
# ----------------------------------------------------------------------------
def _make_linear_kernel(activation, has_residual, has_norm, eps):
    def kernel(*refs):
        x_ref, w_ref, b_ref = refs[:3]
        idx = 3
        r_ref = g_ref = bn_ref = None
        if has_residual:
            r_ref = refs[idx]
            idx += 1
        if has_norm:
            g_ref, bn_ref = refs[idx], refs[idx + 1]
            idx += 2
        o_ref, acc_ref = refs[idx], refs[idx + 1]

        @pl.when(pl.program_id(2) == 0)
        def _init():
            acc_ref[...] = jnp.zeros_like(acc_ref)

        acc_ref[...] += jnp.dot(
            x_ref[...], w_ref[...], preferred_element_type=jnp.float32)

        @pl.when(pl.program_id(2) == pl.num_programs(2) - 1)
        def _finalize():
            y = acc_ref[...] + b_ref[...].astype(jnp.float32)
            if activation == "gelu":
                y = jax.nn.gelu(y)
            if has_residual:
                y = y + r_ref[...].astype(jnp.float32)
            if has_norm:
                mean = jnp.mean(y, axis=-1, keepdims=True)
                yc = y - mean
                var = jnp.mean(yc * yc, axis=-1, keepdims=True)
                y = yc * lax.rsqrt(var + eps)
                y = (y * g_ref[...].astype(jnp.float32)
                     + bn_ref[...].astype(jnp.float32))
            o_ref[...] = y.astype(o_ref.dtype)

    return kernel


def linear(x, w, b, *, activation=None, residual=None, norm=None, eps=1e-5):
    """Tiled, pipelined linear layer with fused epilogue."""
    M, K = x.shape
    N = w.shape[1]

    tm = _pick_tile(M, TM_TARGET)
    tk = _pick_tile(K, TK_TARGET)
    # LayerNorm needs the full feature dim in one output block.
    tn = N if norm is not None else _pick_tile(N, TN_TARGET)

    grid = (M // tm, N // tn, K // tk)

    in_specs = [
        pl.BlockSpec((tm, tk), lambda i, j, k: (i, k)),
        pl.BlockSpec((tk, tn), lambda i, j, k: (k, j)),
        pl.BlockSpec((1, tn), lambda i, j, k: (0, j)),
    ]
    args = [x, w, b.reshape(1, N)]

    if residual is not None:
        in_specs.append(pl.BlockSpec((tm, tn), lambda i, j, k: (i, j)))
        args.append(residual)
    if norm is not None:
        g, bn = norm
        in_specs.append(pl.BlockSpec((1, tn), lambda i, j, k: (0, j)))
        in_specs.append(pl.BlockSpec((1, tn), lambda i, j, k: (0, j)))
        args += [g.reshape(1, N), bn.reshape(1, N)]

    kernel = _make_linear_kernel(activation, residual is not None,
                                 norm is not None, eps)
    return pl.pallas_call(
        kernel,
        out_shape=jax.ShapeDtypeStruct((M, N), x.dtype),
        grid=grid,
        in_specs=in_specs,
        out_specs=pl.BlockSpec((tm, tn), lambda i, j, k: (i, j)),
        scratch_shapes=[pltpu.VMEM((tm, tn), jnp.float32)],
        compiler_params=pltpu.CompilerParams(
            dimension_semantics=("parallel", "parallel", "arbitrary"),
            vmem_limit_bytes=VMEM_LIMIT,
        ),
    )(*args)


# ----------------------------------------------------------------------------
# Attention kernels (one batch element per grid step, heads packed in lanes)
# ----------------------------------------------------------------------------
def _mha_heads(q, k, v, nhead, scale):
    """Multi-head attention on packed (S, D) tiles via static head slices."""
    Sq, D = q.shape
    Dh = D // nhead
    outs = []
    for h in range(nhead):
        lo, hi = h * Dh, (h + 1) * Dh
        qh = q[:, lo:hi].astype(jnp.float32) * scale     # fold scale into q
        kh = k[:, lo:hi].astype(jnp.float32)
        vh = v[:, lo:hi].astype(jnp.float32)
        # contraction-explicit: contract last dims, no explicit K transpose
        s = lax.dot_general(qh, kh, (((1,), (1,)), ((), ())),
                            preferred_element_type=jnp.float32)   # (Sq, Sk)
        m = jnp.max(s, axis=-1, keepdims=True)
        p = jnp.exp(s - m)
        inv = pl.reciprocal(jnp.sum(p, axis=-1, keepdims=True), approx=True)
        outs.append(jnp.dot(p * inv, vh, preferred_element_type=jnp.float32))
    return jnp.concatenate(outs, axis=-1)


def _self_attn_kernel(qkv_ref, o_ref, *, nhead, scale):
    qkv = qkv_ref[0]                       # (Sq, 3D) packed q|k|v
    D = qkv.shape[-1] // 3
    o = _mha_heads(qkv[:, :D], qkv[:, D:2 * D], qkv[:, 2 * D:], nhead, scale)
    o_ref[0] = o.astype(o_ref.dtype)


def _cross_attn_kernel(q_ref, kv_ref, o_ref, *, nhead, scale):
    q = q_ref[0]                           # (Sq, D)
    kv = kv_ref[0]                         # (Sk, 2D) packed k|v
    D = q.shape[-1]
    o = _mha_heads(q, kv[:, :D], kv[:, D:], nhead, scale)
    o_ref[0] = o.astype(o_ref.dtype)


def self_attention(qkv, nhead):
    B, Sq, D3 = qkv.shape
    D = D3 // 3
    scale = 1.0 / float(D // nhead) ** 0.5
    return pl.pallas_call(
        functools.partial(_self_attn_kernel, nhead=nhead, scale=scale),
        out_shape=jax.ShapeDtypeStruct((B, Sq, D), qkv.dtype),
        grid=(B,),
        in_specs=[pl.BlockSpec((1, Sq, D3), lambda b: (b, 0, 0))],
        out_specs=pl.BlockSpec((1, Sq, D), lambda b: (b, 0, 0)),
        compiler_params=pltpu.CompilerParams(
            dimension_semantics=("parallel",),
            vmem_limit_bytes=VMEM_LIMIT,
        ),
    )(qkv)


def cross_attention(q, kv, nhead):
    B, Sq, D = q.shape
    _, Sk, D2 = kv.shape
    scale = 1.0 / float(D // nhead) ** 0.5
    return pl.pallas_call(
        functools.partial(_cross_attn_kernel, nhead=nhead, scale=scale),
        out_shape=jax.ShapeDtypeStruct((B, Sq, D), q.dtype),
        grid=(B,),
        in_specs=[pl.BlockSpec((1, Sq, D), lambda b: (b, 0, 0)),
                  pl.BlockSpec((1, Sk, D2), lambda b: (b, 0, 0))],
        out_specs=pl.BlockSpec((1, Sq, D), lambda b: (b, 0, 0)),
        compiler_params=pltpu.CompilerParams(
            dimension_semantics=("parallel",),
            vmem_limit_bytes=VMEM_LIMIT,
        ),
    )(q, kv)


# ----------------------------------------------------------------------------
# Decoder forward (glue in plain JAX; all heavy ops are the Pallas kernels)
# ----------------------------------------------------------------------------
def decoder_forward(x, memory, params, nhead, eps=1e-5):
    B, Sx, D = x.shape
    _, Sm, _ = memory.shape
    x2 = x.reshape(B * Sx, D)
    mem2 = memory.reshape(B * Sm, D)
    n_layers = len(params["layers"])

    for li, layer in enumerate(params["layers"]):
        # --- self attention (+ residual fused into output linear) -----------
        sp = layer["self_attn"]
        qkv = linear(x2, sp["w_qkv"], sp["b_qkv"])              # (B*Sx, 3D)
        attn = self_attention(qkv.reshape(B, Sx, 3 * D), nhead)  # (B, Sx, D)
        x2 = linear(attn.reshape(B * Sx, D), sp["wo"], sp["bo"], residual=x2)

        # --- cross attention (+ residual fused) ------------------------------
        cp = layer["cross_attn"]
        q = linear(x2, cp["wq"], cp["bq"])                       # (B*Sx, D)
        kv = linear(mem2, cp["w_kv"], cp["b_kv"])                # (B*Sm, 2D)
        attn = cross_attention(q.reshape(B, Sx, D),
                               kv.reshape(B, Sm, 2 * D), nhead)
        x2 = linear(attn.reshape(B * Sx, D), cp["wo"], cp["bo"], residual=x2)

        # --- feed forward (+ residual; last layer also fuses final LayerNorm)
        fp = layer["ff"]
        h = linear(x2, fp["w1"], fp["b1"], activation="gelu")
        norm = ((params["norm_g"], params["norm_b"])
                if li == n_layers - 1 else None)
        x2 = linear(h, fp["w2"], fp["b2"], residual=x2, norm=norm, eps=eps)

    return x2.reshape(B, Sx, D)


# ----------------------------------------------------------------------------
# Deterministic parameter init (synthetic; shapes follow the module __init__)
# ----------------------------------------------------------------------------
def _init_linear(key, fan_in, fan_out):
    kw, kb = jax.random.split(key)
    w = jax.random.normal(kw, (fan_in, fan_out), jnp.float32) * 0.02
    b = jax.random.normal(kb, (fan_out,), jnp.float32) * 0.02
    return w, b


def init_params(key, d_model, nhead, num_layers, dim_ff):
    layers = []
    for _ in range(num_layers):
        keys = jax.random.split(key, 11)
        key = keys[0]

        # self-attention: fused q|k|v projection
        wq, bq = _init_linear(keys[1], d_model, d_model)
        wk, bk = _init_linear(keys[2], d_model, d_model)
        wv, bv = _init_linear(keys[3], d_model, d_model)
        wo, bo = _init_linear(keys[4], d_model, d_model)
        self_attn = dict(
            w_qkv=jnp.concatenate([wq, wk, wv], axis=1),
            b_qkv=jnp.concatenate([bq, bk, bv], axis=0),
            wo=wo, bo=bo)

        # cross-attention: separate q, fused k|v projection
        wq, bq = _init_linear(keys[5], d_model, d_model)
        wk, bk = _init_linear(keys[6], d_model, d_model)
        wv, bv = _init_linear(keys[7], d_model, d_model)
        wo, bo = _init_linear(keys[8], d_model, d_model)
        cross_attn = dict(
            wq=wq, bq=bq,
            w_kv=jnp.concatenate([wk, wv], axis=1),
            b_kv=jnp.concatenate([bk, bv], axis=0),
            wo=wo, bo=bo)

        w1, b1 = _init_linear(keys[9], d_model, dim_ff)
        w2, b2 = _init_linear(keys[10], dim_ff, d_model)
        layers.append(dict(self_attn=self_attn, cross_attn=cross_attn,
                           ff=dict(w1=w1, b1=b1, w2=w2, b2=b2)))

    return dict(
        layers=layers,
        norm_g=jnp.ones((d_model,), jnp.float32),   # nn.LayerNorm default init
        norm_b=jnp.zeros((d_model,), jnp.float32),
    )


# ----------------------------------------------------------------------------
if __name__ == "__main__":
    d_model, nhead, num_layers, dim_feedforward = 32, 4, 2, 64
    B, S_x, S_mem = 2, 8, 8

    root = jax.random.PRNGKey(0)
    k_x, k_mem, k_p = jax.random.split(root, 3)
    x = jax.random.normal(k_x, (B, S_x, d_model), jnp.float32)
    memory = jax.random.normal(k_mem, (B, S_mem, d_model), jnp.float32)
    params = init_params(k_p, d_model, nhead, num_layers, dim_feedforward)

    fwd = jax.jit(decoder_forward, static_argnames=("nhead",))
    out = fwd(x, memory, params, nhead=nhead)
    out = jax.block_until_ready(out)
    assert out.shape == (B, S_x, d_model) and out.dtype == jnp.float32
    print("KERNEL_OK")
</pallas_src>

<mosaic_0001>
module attributes {stable_mosaic.version = 11 : i64} {
  func.func @kernel(%arg0: i32, %arg1: i32, %arg2: i32, %arg3: memref<16x32xf32, #tpu.memory_space<vmem>>, %arg4: memref<32x32xf32, #tpu.memory_space<vmem>>, %arg5: memref<1x32xf32, #tpu.memory_space<vmem>>, %arg6: memref<16x32xf32, #tpu.memory_space<vmem>>, %arg7: memref<16x32xf32, #tpu.memory_space<vmem>>) attributes {dimension_semantics = [#tpu.dimension_semantics<parallel>, #tpu.dimension_semantics<parallel>, #tpu.dimension_semantics<arbitrary>], iteration_bounds = array<i64: 1, 1, 1>, scalar_prefetch = 0 : i64, scratch_operands = 1 : i64, tpu.core_type = #tpu.core_type<tc>, window_params = [{transform_indices = @transform_0, window_bounds = array<i64: 16, 32>}, {transform_indices = @transform_1, window_bounds = array<i64: 32, 32>}, {transform_indices = @transform_2, window_bounds = array<i64: 1, 32>}, {transform_indices = @transform_3, window_bounds = array<i64: 16, 32>}]} {
    %c0_i32 = arith.constant 0 : i32
    %0 = arith.cmpi eq, %arg2, %c0_i32 : i32
    %1 = arith.extui %0 : i1 to i32
    %c0_i32_0 = arith.constant 0 : i32
    %2 = arith.cmpi ne, %1, %c0_i32_0 : i32
    scf.if %2 {
      %cst_10 = arith.constant 0.000000e+00 : f32
      %12 = vector.broadcast %cst_10 : f32 to vector<16x32xf32>
      %c0_11 = arith.constant 0 : index
      %c0_12 = arith.constant 0 : index
      %13 = vector.load %arg7[%c0_11, %c0_12] : memref<16x32xf32, #tpu.memory_space<vmem>>, vector<16x32xf32>
      tpu.vector_store %arg7[%c0_11, %c0_12], %12 {strides = array<i32>} : memref<16x32xf32, #tpu.memory_space<vmem>>, vector<16x32xf32>,
    } else {
    }
    %c0 = arith.constant 0 : index
    %c0_1 = arith.constant 0 : index
    %3 = vector.load %arg7[%c0, %c0_1] : memref<16x32xf32, #tpu.memory_space<vmem>>, vector<16x32xf32>
    %c0_2 = arith.constant 0 : index
    %c0_3 = arith.constant 0 : index
    %4 = vector.load %arg3[%c0_2, %c0_3] : memref<16x32xf32, #tpu.memory_space<vmem>>, vector<16x32xf32>
    %c0_4 = arith.constant 0 : index
    %c0_5 = arith.constant 0 : index
    %5 = vector.load %arg4[%c0_4, %c0_5] : memref<32x32xf32, #tpu.memory_space<vmem>>, vector<32x32xf32>
    %cst = arith.constant dense<0.000000e+00> : vector<16x32xf32>
    %6 = tpu.matmul %4, %5, %cst {dimension_numbers = #tpu.dot_dimension_numbers<[1], [0], [0], [1], [0, 0, 1, 1], [], []>} : vector<16x32xf32>, vector<32x32xf32>, vector<16x32xf32> -> vector<16x32xf32>
    %7 = arith.addf %3, %6 : vector<16x32xf32>
    %c0_6 = arith.constant 0 : index
    %c0_7 = arith.constant 0 : index
    %8 = vector.load %arg7[%c0_6, %c0_7] : memref<16x32xf32, #tpu.memory_space<vmem>>, vector<16x32xf32>
    tpu.vector_store %arg7[%c0_6, %c0_7], %7 {strides = array<i32>} : memref<16x32xf32, #tpu.memory_space<vmem>>, vector<16x32xf32>,
    %c0_i32_8 = arith.constant 0 : i32
    %9 = arith.cmpi eq, %arg2, %c0_i32_8 : i32
    %10 = arith.extui %9 : i1 to i32
    %c0_i32_9 = arith.constant 0 : i32
    %11 = arith.cmpi ne, %10, %c0_i32_9 : i32
    scf.if %11 {
      %c0_10 = arith.constant 0 : index
      %c0_11 = arith.constant 0 : index
      %12 = vector.load %arg7[%c0_10, %c0_11] : memref<16x32xf32, #tpu.memory_space<vmem>>, vector<16x32xf32>
      %c0_12 = arith.constant 0 : index
      %c0_13 = arith.constant 0 : index
      %13 = vector.load %arg5[%c0_12, %c0_13] : memref<1x32xf32, #tpu.memory_space<vmem>>, vector<1x32xf32>
      %14 = vector.broadcast %13 : vector<1x32xf32> to vector<16x32xf32>
      %15 = arith.addf %12, %14 : vector<16x32xf32>
      %c0_14 = arith.constant 0 : index
      %c0_15 = arith.constant 0 : index
      %16 = vector.load %arg6[%c0_14, %c0_15] : memref<16x32xf32, #tpu.memory_space<vmem>>, vector<16x32xf32>
      tpu.vector_store %arg6[%c0_14, %c0_15], %15 {strides = array<i32>} : memref<16x32xf32, #tpu.memory_space<vmem>>, vector<16x32xf32>,
    } else {
    }
    return
  }
  func.func @transform_0(%arg0: i32, %arg1: i32, %arg2: i32) -> (i32, i32) {
    %c0_i32 = arith.constant 0 : i32
    return %arg0, %arg2 : i32, i32
  }
  func.func @transform_1(%arg0: i32, %arg1: i32, %arg2: i32) -> (i32, i32) {
    %c0_i32 = arith.constant 0 : i32
    return %arg2, %arg1 : i32, i32
  }
  func.func @transform_2(%arg0: i32, %arg1: i32, %arg2: i32) -> (i32, i32) {
    %c0_i32 = arith.constant 0 : i32
    %c0_i32_0 = arith.constant 0 : i32
    return %c0_i32, %arg1 : i32, i32
  }
  func.func @transform_3(%arg0: i32, %arg1: i32, %arg2: i32) -> (i32, i32) {
    %c0_i32 = arith.constant 0 : i32
    return %arg0, %arg1 : i32, i32
  }
}

module attributes {stable_mosaic.version = 11 : i64} {
  func.func @_self_attn_kernel(%arg0: i32, %arg1: memref<1x8x96xf32, #tpu.memory_space<vmem>>, %arg2: memref<1x8x32xf32, #tpu.memory_space<vmem>>) attributes {dimension_semantics = [#tpu.dimension_semantics<parallel>], iteration_bounds = array<i64: 2>, scalar_prefetch = 0 : i64, scratch_operands = 0 : i64, tpu.core_type = #tpu.core_type<tc>, window_params = [{transform_indices = @transform_0, window_bounds = array<i64: 1, 8, 96>}, {transform_indices = @transform_1, window_bounds = array<i64: 1, 8, 32>}]} {
    %c0 = arith.constant 0 : index
    %c0_0 = arith.constant 0 : index
    %c0_1 = arith.constant 0 : index
    %0 = vector.load %arg1[%c0, %c0_0, %c0_1] : memref<1x8x96xf32, #tpu.memory_space<vmem>>, vector<1x8x96xf32>
    %1 = vector.shape_cast %0 : vector<1x8x96xf32> to vector<8x96xf32>
    %2 = vector.extract_strided_slice %1 {offsets = [0, 0], sizes = [8, 32], strides = [1, 1]} : vector<8x96xf32> to vector<8x32xf32>
    %3 = vector.extract_strided_slice %1 {offsets = [0, 32], sizes = [8, 32], strides = [1, 1]} : vector<8x96xf32> to vector<8x32xf32>
    %4 = vector.extract_strided_slice %1 {offsets = [0, 64], sizes = [8, 32], strides = [1, 1]} : vector<8x96xf32> to vector<8x32xf32>
    %5 = vector.extract_strided_slice %2 {offsets = [0, 0], sizes = [8, 8], strides = [1, 1]} : vector<8x32xf32> to vector<8x8xf32>
    %cst = arith.constant 0.353553385 : f32
    %6 = vector.broadcast %cst : f32 to vector<8x8xf32>
    %7 = arith.mulf %5, %6 : vector<8x8xf32>
    %8 = vector.extract_strided_slice %3 {offsets = [0, 0], sizes = [8, 8], strides = [1, 1]} : vector<8x32xf32> to vector<8x8xf32>
    %9 = vector.extract_strided_slice %4 {offsets = [0, 0], sizes = [8, 8], strides = [1, 1]} : vector<8x32xf32> to vector<8x8xf32>
    %cst_2 = arith.constant dense<0.000000e+00> : vector<8x8xf32>
    %10 = tpu.matmul %7, %8, %cst_2 {dimension_numbers = #tpu.dot_dimension_numbers<[1], [1], [0], [0], [0, 0, 1, 0], [], []>} : vector<8x8xf32>, vector<8x8xf32>, vector<8x8xf32> -> vector<8x8xf32>
    %cst_3 = arith.constant dense<0xFF800000> : vector<8xf32>
    %11 = vector.multi_reduction <maximumf>, %10, %cst_3 [1] : vector<8x8xf32> to vector<8xf32>
    %12 = vector.shape_cast %11 : vector<8xf32> to vector<8x1xf32>
    %13 = vector.broadcast %12 : vector<8x1xf32> to vector<8x8xf32>
    %14 = arith.subf %10, %13 : vector<8x8xf32>
    %15 = math.exp %14 : vector<8x8xf32>
    %cst_4 = arith.constant dense<0.000000e+00> : vector<8xf32>
    %16 = vector.multi_reduction <add>, %15, %cst_4 [1] : vector<8x8xf32> to vector<8xf32>
    %17 = vector.shape_cast %16 : vector<8xf32> to vector<8x1xf32>
    %18 = tpu.reciprocal %17 {approx = true} : vector<8x1xf32> -> vector<8x1xf32>
    %19 = vector.broadcast %18 : vector<8x1xf32> to vector<8x8xf32>
    %20 = arith.mulf %15, %19 : vector<8x8xf32>
    %cst_5 = arith.constant dense<0.000000e+00> : vector<8x8xf32>
    %21 = tpu.matmul %20, %9, %cst_5 {dimension_numbers = #tpu.dot_dimension_numbers<[1], [0], [0], [1], [0, 0, 1, 1], [], []>} : vector<8x8xf32>, vector<8x8xf32>, vector<8x8xf32> -> vector<8x8xf32>
    %22 = vector.extract_strided_slice %2 {offsets = [0, 8], sizes = [8, 8], strides = [1, 1]} : vector<8x32xf32> to vector<8x8xf32>
    %cst_6 = arith.constant 0.353553385 : f32
    %23 = vector.broadcast %cst_6 : f32 to vector<8x8xf32>
    %24 = arith.mulf %22, %23 : vector<8x8xf32>
    %25 = vector.extract_strided_slice %3 {offsets = [0, 8], sizes = [8, 8], strides = [1, 1]} : vector<8x32xf32> to vector<8x8xf32>
    %26 = vector.extract_strided_slice %4 {offsets = [0, 8], sizes = [8, 8], strides = [1, 1]} : vector<8x32xf32> to vector<8x8xf32>
    %cst_7 = arith.constant dense<0.000000e+00> : vector<8x8xf32>
    %27 = tpu.matmul %24, %25, %cst_7 {dimension_numbers = #tpu.dot_dimension_numbers<[1], [1], [0], [0], [0, 0, 1, 0], [], []>} : vector<8x8xf32>, vector<8x8xf32>, vector<8x8xf32> -> vector<8x8xf32>
    %cst_8 = arith.constant dense<0xFF800000> : vector<8xf32>
    %28 = vector.multi_reduction <maximumf>, %27, %cst_8 [1] : vector<8x8xf32> to vector<8xf32>
    %29 = vector.shape_cast %28 : vector<8xf32> to vector<8x1xf32>
    %30 = vector.broadcast %29 : vector<8x1xf32> to vector<8x8xf32>
    %31 = arith.subf %27, %30 : vector<8x8xf32>
    %32 = math.exp %31 : vector<8x8xf32>
    %cst_9 = arith.constant dense<0.000000e+00> : vector<8xf32>
    %33 = vector.multi_reduction <add>, %32, %cst_9 [1] : vector<8x8xf32> to vector<8xf32>
    %34 = vector.shape_cast %33 : vector<8xf32> to vector<8x1xf32>
    %35 = tpu.reciprocal %34 {approx = true} : vector<8x1xf32> -> vector<8x1xf32>
    %36 = vector.broadcast %35 : vector<8x1xf32> to vector<8x8xf32>
    %37 = arith.mulf %32, %36 : vector<8x8xf32>
    %cst_10 = arith.constant dense<0.000000e+00> : vector<8x8xf32>
    %38 = tpu.matmul %37, %26, %cst_10 {dimension_numbers = #tpu.dot_dimension_numbers<[1], [0], [0], [1], [0, 0, 1, 1], [], []>} : vector<8x8xf32>, vector<8x8xf32>, vector<8x8xf32> -> vector<8x8xf32>
    %39 = vector.extract_strided_slice %2 {offsets = [0, 16], sizes = [8, 8], strides = [1, 1]} : vector<8x32xf32> to vector<8x8xf32>
    %cst_11 = arith.constant 0.353553385 : f32
    %40 = vector.broadcast %cst_11 : f32 to vector<8x8xf32>
    %41 = arith.mulf %39, %40 : vector<8x8xf32>
    %42 = vector.extract_strided_slice %3 {offsets = [0, 16], sizes = [8, 8], strides = [1, 1]} : vector<8x32xf32> to vector<8x8xf32>
    %43 = vector.extract_strided_slice %4 {offsets = [0, 16], sizes = [8, 8], strides = [1, 1]} : vector<8x32xf32> to vector<8x8xf32>
    %cst_12 = arith.constant dense<0.000000e+00> : vector<8x8xf32>
    %44 = tpu.matmul %41, %42, %cst_12 {dimension_numbers = #tpu.dot_dimension_numbers<[1], [1], [0], [0], [0, 0, 1, 0], [], []>} : vector<8x8xf32>, vector<8x8xf32>, vector<8x8xf32> -> vector<8x8xf32>
    %cst_13 = arith.constant dense<0xFF800000> : vector<8xf32>
    %45 = vector.multi_reduction <maximumf>, %44, %cst_13 [1] : vector<8x8xf32> to vector<8xf32>
    %46 = vector.shape_cast %45 : vector<8xf32> to vector<8x1xf32>
    %47 = vector.broadcast %46 : vector<8x1xf32> to vector<8x8xf32>
    %48 = arith.subf %44, %47 : vector<8x8xf32>
    %49 = math.exp %48 : vector<8x8xf32>
    %cst_14 = arith.constant dense<0.000000e+00> : vector<8xf32>
    %50 = vector.multi_reduction <add>, %49, %cst_14 [1] : vector<8x8xf32> to vector<8xf32>
    %51 = vector.shape_cast %50 : vector<8xf32> to vector<8x1xf32>
    %52 = tpu.reciprocal %51 {approx = true} : vector<8x1xf32> -> vector<8x1xf32>
    %53 = vector.broadcast %52 : vector<8x1xf32> to vector<8x8xf32>
    %54 = arith.mulf %49, %53 : vector<8x8xf32>
    %cst_15 = arith.constant dense<0.000000e+00> : vector<8x8xf32>
    %55 = tpu.matmul %54, %43, %cst_15 {dimension_numbers = #tpu.dot_dimension_numbers<[1], [0], [0], [1], [0, 0, 1, 1], [], []>} : vector<8x8xf32>, vector<8x8xf32>, vector<8x8xf32> -> vector<8x8xf32>
    %56 = vector.extract_strided_slice %2 {offsets = [0, 24], sizes = [8, 8], strides = [1, 1]} : vector<8x32xf32> to vector<8x8xf32>
    %cst_16 = arith.constant 0.353553385 : f32
    %57 = vector.broadcast %cst_16 : f32 to vector<8x8xf32>
    %58 = arith.mulf %56, %57 : vector<8x8xf32>
    %59 = vector.extract_strided_slice %3 {offsets = [0, 24], sizes = [8, 8], strides = [1, 1]} : vector<8x32xf32> to vector<8x8xf32>
    %60 = vector.extract_strided_slice %4 {offsets = [0, 24], sizes = [8, 8], strides = [1, 1]} : vector<8x32xf32> to vector<8x8xf32>
    %cst_17 = arith.constant dense<0.000000e+00> : vector<8x8xf32>
    %61 = tpu.matmul %58, %59, %cst_17 {dimension_numbers = #tpu.dot_dimension_numbers<[1], [1], [0], [0], [0, 0, 1, 0], [], []>} : vector<8x8xf32>, vector<8x8xf32>, vector<8x8xf32> -> vector<8x8xf32>
    %cst_18 = arith.constant dense<0xFF800000> : vector<8xf32>
    %62 = vector.multi_reduction <maximumf>, %61, %cst_18 [1] : vector<8x8xf32> to vector<8xf32>
    %63 = vector.shape_cast %62 : vector<8xf32> to vector<8x1xf32>
    %64 = vector.broadcast %63 : vector<8x1xf32> to vector<8x8xf32>
    %65 = arith.subf %61, %64 : vector<8x8xf32>
    %66 = math.exp %65 : vector<8x8xf32>
    %cst_19 = arith.constant dense<0.000000e+00> : vector<8xf32>
    %67 = vector.multi_reduction <add>, %66, %cst_19 [1] : vector<8x8xf32> to vector<8xf32>
    %68 = vector.shape_cast %67 : vector<8xf32> to vector<8x1xf32>
    %69 = tpu.reciprocal %68 {approx = true} : vector<8x1xf32> -> vector<8x1xf32>
    %70 = vector.broadcast %69 : vector<8x1xf32> to vector<8x8xf32>
    %71 = arith.mulf %66, %70 : vector<8x8xf32>
    %cst_20 = arith.constant dense<0.000000e+00> : vector<8x8xf32>
    %72 = tpu.matmul %71, %60, %cst_20 {dimension_numbers = #tpu.dot_dimension_numbers<[1], [0], [0], [1], [0, 0, 1, 1], [], []>} : vector<8x8xf32>, vector<8x8xf32>, vector<8x8xf32> -> vector<8x8xf32>
    %73 = tpu.concatenate %21, %38, %55, %72 in 1 : vector<8x8xf32>, vector<8x8xf32>, vector<8x8xf32>, vector<8x8xf32> -> vector<8x32xf32>
    %c0_21 = arith.constant 0 : index
    %c0_22 = arith.constant 0 : index
    %c0_23 = arith.constant 0 : index
    %74 = vector.load %arg2[%c0_21, %c0_22, %c0_23] : memref<1x8x32xf32, #tpu.memory_space<vmem>>, vector<1x8x32xf32>
    %75 = vector.shape_cast %74 : vector<1x8x32xf32> to vector<8x32xf32>
    %76 = vector.shape_cast %73 : vector<8x32xf32> to vector<1x8x32xf32>
    tpu.vector_store %arg2[%c0_21, %c0_22, %c0_23], %76 {strides = array<i32>} : memref<1x8x32xf32, #tpu.memory_space<vmem>>, vector<1x8x32xf32>,
    return
  }
  func.func @transform_0(%arg0: i32) -> (i32, i32, i32) {
    %c0_i32 = arith.constant 0 : i32
    %c0_i32_0 = arith.constant 0 : i32
    %c0_i32_1 = arith.constant 0 : i32
    return %arg0, %c0_i32, %c0_i32_0 : i32, i32, i32
  }
  func.func @transform_1(%arg0: i32) -> (i32, i32, i32) {
    %c0_i32 = arith.constant 0 : i32
    %c0_i32_0 = arith.constant 0 : i32
    %c0_i32_1 = arith.constant 0 : i32
    return %arg0, %c0_i32, %c0_i32_0 : i32, i32, i32
  }
}

module attributes {stable_mosaic.version = 11 : i64} {
  func.func @kernel(%arg0: i32, %arg1: i32, %arg2: i32, %arg3: memref<16x32xf32, #tpu.memory_space<vmem>>, %arg4: memref<32x32xf32, #tpu.memory_space<vmem>>, %arg5: memref<1x32xf32, #tpu.memory_space<vmem>>, %arg6: memref<16x32xf32, #tpu.memory_space<vmem>>, %arg7: memref<16x32xf32, #tpu.memory_space<vmem>>, %arg8: memref<16x32xf32, #tpu.memory_space<vmem>>) attributes {dimension_semantics = [#tpu.dimension_semantics<parallel>, #tpu.dimension_semantics<parallel>, #tpu.dimension_semantics<arbitrary>], iteration_bounds = array<i64: 1, 1, 1>, scalar_prefetch = 0 : i64, scratch_operands = 1 : i64, tpu.core_type = #tpu.core_type<tc>, window_params = [{transform_indices = @transform_0, window_bounds = array<i64: 16, 32>}, {transform_indices = @transform_1, window_bounds = array<i64: 32, 32>}, {transform_indices = @transform_2, window_bounds = array<i64: 1, 32>}, {transform_indices = @transform_3, window_bounds = array<i64: 16, 32>}, {transform_indices = @transform_4, window_bounds = array<i64: 16, 32>}]} {
    %c0_i32 = arith.constant 0 : i32
    %0 = arith.cmpi eq, %arg2, %c0_i32 : i32
    %1 = arith.extui %0 : i1 to i32
    %c0_i32_0 = arith.constant 0 : i32
    %2 = arith.cmpi ne, %1, %c0_i32_0 : i32
    scf.if %2 {
      %cst_10 = arith.constant 0.000000e+00 : f32
      %12 = vector.broadcast %cst_10 : f32 to vector<16x32xf32>
      %c0_11 = arith.constant 0 : index
      %c0_12 = arith.constant 0 : index
      %13 = vector.load %arg8[%c0_11, %c0_12] : memref<16x32xf32, #tpu.memory_space<vmem>>, vector<16x32xf32>
      tpu.vector_store %arg8[%c0_11, %c0_12], %12 {strides = array<i32>} : memref<16x32xf32, #tpu.memory_space<vmem>>, vector<16x32xf32>,
    } else {
    }
    %c0 = arith.constant 0 : index
    %c0_1 = arith.constant 0 : index
    %3 = vector.load %arg8[%c0, %c0_1] : memref<16x32xf32, #tpu.memory_space<vmem>>, vector<16x32xf32>
    %c0_2 = arith.constant 0 : index
    %c0_3 = arith.constant 0 : index
    %4 = vector.load %arg3[%c0_2, %c0_3] : memref<16x32xf32, #tpu.memory_space<vmem>>, vector<16x32xf32>
    %c0_4 = arith.constant 0 : index
    %c0_5 = arith.constant 0 : index
    %5 = vector.load %arg4[%c0_4, %c0_5] : memref<32x32xf32, #tpu.memory_space<vmem>>, vector<32x32xf32>
    %cst = arith.constant dense<0.000000e+00> : vector<16x32xf32>
    %6 = tpu.matmul %4, %5, %cst {dimension_numbers = #tpu.dot_dimension_numbers<[1], [0], [0], [1], [0, 0, 1, 1], [], []>} : vector<16x32xf32>, vector<32x32xf32>, vector<16x32xf32> -> vector<16x32xf32>
    %7 = arith.addf %3, %6 : vector<16x32xf32>
    %c0_6 = arith.constant 0 : index
    %c0_7 = arith.constant 0 : index
    %8 = vector.load %arg8[%c0_6, %c0_7] : memref<16x32xf32, #tpu.memory_space<vmem>>, vector<16x32xf32>
    tpu.vector_store %arg8[%c0_6, %c0_7], %7 {strides = array<i32>} : memref<16x32xf32, #tpu.memory_space<vmem>>, vector<16x32xf32>,
    %c0_i32_8 = arith.constant 0 : i32
    %9 = arith.cmpi eq, %arg2, %c0_i32_8 : i32
    %10 = arith.extui %9 : i1 to i32
    %c0_i32_9 = arith.constant 0 : i32
    %11 = arith.cmpi ne, %10, %c0_i32_9 : i32
    scf.if %11 {
      %c0_10 = arith.constant 0 : index
      %c0_11 = arith.constant 0 : index
      %12 = vector.load %arg8[%c0_10, %c0_11] : memref<16x32xf32, #tpu.memory_space<vmem>>, vector<16x32xf32>
      %c0_12 = arith.constant 0 : index
      %c0_13 = arith.constant 0 : index
      %13 = vector.load %arg5[%c0_12, %c0_13] : memref<1x32xf32, #tpu.memory_space<vmem>>, vector<1x32xf32>
      %14 = vector.broadcast %13 : vector<1x32xf32> to vector<16x32xf32>
      %15 = arith.addf %12, %14 : vector<16x32xf32>
      %c0_14 = arith.constant 0 : index
      %c0_15 = arith.constant 0 : index
      %16 = vector.load %arg6[%c0_14, %c0_15] : memref<16x32xf32, #tpu.memory_space<vmem>>, vector<16x32xf32>
      %17 = arith.addf %15, %16 : vector<16x32xf32>
      %c0_16 = arith.constant 0 : index
      %c0_17 = arith.constant 0 : index
      %18 = vector.load %arg7[%c0_16, %c0_17] : memref<16x32xf32, #tpu.memory_space<vmem>>, vector<16x32xf32>
      tpu.vector_store %arg7[%c0_16, %c0_17], %17 {strides = array<i32>} : memref<16x32xf32, #tpu.memory_space<vmem>>, vector<16x32xf32>,
    } else {
    }
    return
  }
  func.func @transform_0(%arg0: i32, %arg1: i32, %arg2: i32) -> (i32, i32) {
    %c0_i32 = arith.constant 0 : i32
    return %arg0, %arg2 : i32, i32
  }
  func.func @transform_1(%arg0: i32, %arg1: i32, %arg2: i32) -> (i32, i32) {
    %c0_i32 = arith.constant 0 : i32
    return %arg2, %arg1 : i32, i32
  }
  func.func @transform_2(%arg0: i32, %arg1: i32, %arg2: i32) -> (i32, i32) {
    %c0_i32 = arith.constant 0 : i32
    %c0_i32_0 = arith.constant 0 : i32
    return %c0_i32, %arg1 : i32, i32
  }
  func.func @transform_3(%arg0: i32, %arg1: i32, %arg2: i32) -> (i32, i32) {
    %c0_i32 = arith.constant 0 : i32
    return %arg0, %arg1 : i32, i32
  }
  func.func @transform_4(%arg0: i32, %arg1: i32, %arg2: i32) -> (i32, i32) {
    %c0_i32 = arith.constant 0 : i32
    return %arg0, %arg1 : i32, i32
  }
}

module attributes {stable_mosaic.version = 11 : i64} {
  func.func @kernel(%arg0: i32, %arg1: i32, %arg2: i32, %arg3: memref<16x32xf32, #tpu.memory_space<vmem>>, %arg4: memref<32x96xf32, #tpu.memory_space<vmem>>, %arg5: memref<1x96xf32, #tpu.memory_space<vmem>>, %arg6: memref<16x96xf32, #tpu.memory_space<vmem>>, %arg7: memref<16x96xf32, #tpu.memory_space<vmem>>) attributes {dimension_semantics = [#tpu.dimension_semantics<parallel>, #tpu.dimension_semantics<parallel>, #tpu.dimension_semantics<arbitrary>], iteration_bounds = array<i64: 1, 1, 1>, scalar_prefetch = 0 : i64, scratch_operands = 1 : i64, tpu.core_type = #tpu.core_type<tc>, window_params = [{transform_indices = @transform_0, window_bounds = array<i64: 16, 32>}, {transform_indices = @transform_1, window_bounds = array<i64: 32, 96>}, {transform_indices = @transform_2, window_bounds = array<i64: 1, 96>}, {transform_indices = @transform_3, window_bounds = array<i64: 16, 96>}]} {
    %c0_i32 = arith.constant 0 : i32
    %0 = arith.cmpi eq, %arg2, %c0_i32 : i32
    %1 = arith.extui %0 : i1 to i32
    %c0_i32_0 = arith.constant 0 : i32
    %2 = arith.cmpi ne, %1, %c0_i32_0 : i32
    scf.if %2 {
      %cst_10 = arith.constant 0.000000e+00 : f32
      %12 = vector.broadcast %cst_10 : f32 to vector<16x96xf32>
      %c0_11 = arith.constant 0 : index
      %c0_12 = arith.constant 0 : index
      %13 = vector.load %arg7[%c0_11, %c0_12] : memref<16x96xf32, #tpu.memory_space<vmem>>, vector<16x96xf32>
      tpu.vector_store %arg7[%c0_11, %c0_12], %12 {strides = array<i32>} : memref<16x96xf32, #tpu.memory_space<vmem>>, vector<16x96xf32>,
    } else {
    }
    %c0 = arith.constant 0 : index
    %c0_1 = arith.constant 0 : index
    %3 = vector.load %arg7[%c0, %c0_1] : memref<16x96xf32, #tpu.memory_space<vmem>>, vector<16x96xf32>
    %c0_2 = arith.constant 0 : index
    %c0_3 = arith.constant 0 : index
    %4 = vector.load %arg3[%c0_2, %c0_3] : memref<16x32xf32, #tpu.memory_space<vmem>>, vector<16x32xf32>
    %c0_4 = arith.constant 0 : index
    %c0_5 = arith.constant 0 : index
    %5 = vector.load %arg4[%c0_4, %c0_5] : memref<32x96xf32, #tpu.memory_space<vmem>>, vector<32x96xf32>
    %cst = arith.constant dense<0.000000e+00> : vector<16x96xf32>
    %6 = tpu.matmul %4, %5, %cst {dimension_numbers = #tpu.dot_dimension_numbers<[1], [0], [0], [1], [0, 0, 1, 1], [], []>} : vector<16x32xf32>, vector<32x96xf32>, vector<16x96xf32> -> vector<16x96xf32>
    %7 = arith.addf %3, %6 : vector<16x96xf32>
    %c0_6 = arith.constant 0 : index
    %c0_7 = arith.constant 0 : index
    %8 = vector.load %arg7[%c0_6, %c0_7] : memref<16x96xf32, #tpu.memory_space<vmem>>, vector<16x96xf32>
    tpu.vector_store %arg7[%c0_6, %c0_7], %7 {strides = array<i32>} : memref<16x96xf32, #tpu.memory_space<vmem>>, vector<16x96xf32>,
    %c0_i32_8 = arith.constant 0 : i32
    %9 = arith.cmpi eq, %arg2, %c0_i32_8 : i32
    %10 = arith.extui %9 : i1 to i32
    %c0_i32_9 = arith.constant 0 : i32
    %11 = arith.cmpi ne, %10, %c0_i32_9 : i32
    scf.if %11 {
      %c0_10 = arith.constant 0 : index
      %c0_11 = arith.constant 0 : index
      %12 = vector.load %arg7[%c0_10, %c0_11] : memref<16x96xf32, #tpu.memory_space<vmem>>, vector<16x96xf32>
      %c0_12 = arith.constant 0 : index
      %c0_13 = arith.constant 0 : index
      %13 = vector.load %arg5[%c0_12, %c0_13] : memref<1x96xf32, #tpu.memory_space<vmem>>, vector<1x96xf32>
      %14 = vector.broadcast %13 : vector<1x96xf32> to vector<16x96xf32>
      %15 = arith.addf %12, %14 : vector<16x96xf32>
      %c0_14 = arith.constant 0 : index
      %c0_15 = arith.constant 0 : index
      %16 = vector.load %arg6[%c0_14, %c0_15] : memref<16x96xf32, #tpu.memory_space<vmem>>, vector<16x96xf32>
      tpu.vector_store %arg6[%c0_14, %c0_15], %15 {strides = array<i32>} : memref<16x96xf32, #tpu.memory_space<vmem>>, vector<16x96xf32>,
    } else {
    }
    return
  }
  func.func @transform_0(%arg0: i32, %arg1: i32, %arg2: i32) -> (i32, i32) {
    %c0_i32 = arith.constant 0 : i32
    return %arg0, %arg2 : i32, i32
  }
  func.func @transform_1(%arg0: i32, %arg1: i32, %arg2: i32) -> (i32, i32) {
    %c0_i32 = arith.constant 0 : i32
    return %arg2, %arg1 : i32, i32
  }
  func.func @transform_2(%arg0: i32, %arg1: i32, %arg2: i32) -> (i32, i32) {
    %c0_i32 = arith.constant 0 : i32
    %c0_i32_0 = arith.constant 0 : i32
    return %c0_i32, %arg1 : i32, i32
  }
  func.func @transform_3(%arg0: i32, %arg1: i32, %arg2: i32) -> (i32, i32) {
    %c0_i32 = arith.constant 0 : i32
    return %arg0, %arg1 : i32, i32
  }
}

module attributes {stable_mosaic.version = 11 : i64} {
  func.func @kernel(%arg0: i32, %arg1: i32, %arg2: i32, %arg3: memref<16x32xf32, #tpu.memory_space<vmem>>, %arg4: memref<32x64xf32, #tpu.memory_space<vmem>>, %arg5: memref<1x64xf32, #tpu.memory_space<vmem>>, %arg6: memref<16x64xf32, #tpu.memory_space<vmem>>, %arg7: memref<16x64xf32, #tpu.memory_space<vmem>>) attributes {dimension_semantics = [#tpu.dimension_semantics<parallel>, #tpu.dimension_semantics<parallel>, #tpu.dimension_semantics<arbitrary>], iteration_bounds = array<i64: 1, 1, 1>, scalar_prefetch = 0 : i64, scratch_operands = 1 : i64, tpu.core_type = #tpu.core_type<tc>, window_params = [{transform_indices = @transform_0, window_bounds = array<i64: 16, 32>}, {transform_indices = @transform_1, window_bounds = array<i64: 32, 64>}, {transform_indices = @transform_2, window_bounds = array<i64: 1, 64>}, {transform_indices = @transform_3, window_bounds = array<i64: 16, 64>}]} {
    %c0_i32 = arith.constant 0 : i32
    %0 = arith.cmpi eq, %arg2, %c0_i32 : i32
    %1 = arith.extui %0 : i1 to i32
    %c0_i32_0 = arith.constant 0 : i32
    %2 = arith.cmpi ne, %1, %c0_i32_0 : i32
    scf.if %2 {
      %cst_10 = arith.constant 0.000000e+00 : f32
      %12 = vector.broadcast %cst_10 : f32 to vector<16x64xf32>
      %c0_11 = arith.constant 0 : index
      %c0_12 = arith.constant 0 : index
      %13 = vector.load %arg7[%c0_11, %c0_12] : memref<16x64xf32, #tpu.memory_space<vmem>>, vector<16x64xf32>
      tpu.vector_store %arg7[%c0_11, %c0_12], %12 {strides = array<i32>} : memref<16x64xf32, #tpu.memory_space<vmem>>, vector<16x64xf32>,
    } else {
    }
    %c0 = arith.constant 0 : index
    %c0_1 = arith.constant 0 : index
    %3 = vector.load %arg7[%c0, %c0_1] : memref<16x64xf32, #tpu.memory_space<vmem>>, vector<16x64xf32>
    %c0_2 = arith.constant 0 : index
    %c0_3 = arith.constant 0 : index
    %4 = vector.load %arg3[%c0_2, %c0_3] : memref<16x32xf32, #tpu.memory_space<vmem>>, vector<16x32xf32>
    %c0_4 = arith.constant 0 : index
    %c0_5 = arith.constant 0 : index
    %5 = vector.load %arg4[%c0_4, %c0_5] : memref<32x64xf32, #tpu.memory_space<vmem>>, vector<32x64xf32>
    %cst = arith.constant dense<0.000000e+00> : vector<16x64xf32>
    %6 = tpu.matmul %4, %5, %cst {dimension_numbers = #tpu.dot_dimension_numbers<[1], [0], [0], [1], [0, 0, 1, 1], [], []>} : vector<16x32xf32>, vector<32x64xf32>, vector<16x64xf32> -> vector<16x64xf32>
    %7 = arith.addf %3, %6 : vector<16x64xf32>
    %c0_6 = arith.constant 0 : index
    %c0_7 = arith.constant 0 : index
    %8 = vector.load %arg7[%c0_6, %c0_7] : memref<16x64xf32, #tpu.memory_space<vmem>>, vector<16x64xf32>
    tpu.vector_store %arg7[%c0_6, %c0_7], %7 {strides = array<i32>} : memref<16x64xf32, #tpu.memory_space<vmem>>, vector<16x64xf32>,
    %c0_i32_8 = arith.constant 0 : i32
    %9 = arith.cmpi eq, %arg2, %c0_i32_8 : i32
    %10 = arith.extui %9 : i1 to i32
    %c0_i32_9 = arith.constant 0 : i32
    %11 = arith.cmpi ne, %10, %c0_i32_9 : i32
    scf.if %11 {
      %c0_10 = arith.constant 0 : index
      %c0_11 = arith.constant 0 : index
      %12 = vector.load %arg7[%c0_10, %c0_11] : memref<16x64xf32, #tpu.memory_space<vmem>>, vector<16x64xf32>
      %c0_12 = arith.constant 0 : index
      %c0_13 = arith.constant 0 : index
      %13 = vector.load %arg5[%c0_12, %c0_13] : memref<1x64xf32, #tpu.memory_space<vmem>>, vector<1x64xf32>
      %14 = vector.broadcast %13 : vector<1x64xf32> to vector<16x64xf32>
      %15 = arith.addf %12, %14 : vector<16x64xf32>
      %c0_14 = arith.constant 0 : index
      %c0_15 = arith.constant 0 : index
      %16 = vector.load %arg6[%c0_14, %c0_15] : memref<16x64xf32, #tpu.memory_space<vmem>>, vector<16x64xf32>
      tpu.vector_store %arg6[%c0_14, %c0_15], %15 {strides = array<i32>} : memref<16x64xf32, #tpu.memory_space<vmem>>, vector<16x64xf32>,
    } else {
    }
    return
  }
  func.func @transform_0(%arg0: i32, %arg1: i32, %arg2: i32) -> (i32, i32) {
    %c0_i32 = arith.constant 0 : i32
    return %arg0, %arg2 : i32, i32
  }
  func.func @transform_1(%arg0: i32, %arg1: i32, %arg2: i32) -> (i32, i32) {
    %c0_i32 = arith.constant 0 : i32
    return %arg2, %arg1 : i32, i32
  }
  func.func @transform_2(%arg0: i32, %arg1: i32, %arg2: i32) -> (i32, i32) {
    %c0_i32 = arith.constant 0 : i32
    %c0_i32_0 = arith.constant 0 : i32
    return %c0_i32, %arg1 : i32, i32
  }
  func.func @transform_3(%arg0: i32, %arg1: i32, %arg2: i32) -> (i32, i32) {
    %c0_i32 = arith.constant 0 : i32
    return %arg0, %arg1 : i32, i32
  }
}

module attributes {stable_mosaic.version = 11 : i64} {
  func.func @_cross_attn_kernel(%arg0: i32, %arg1: memref<1x8x32xf32, #tpu.memory_space<vmem>>, %arg2: memref<1x8x64xf32, #tpu.memory_space<vmem>>, %arg3: memref<1x8x32xf32, #tpu.memory_space<vmem>>) attributes {dimension_semantics = [#tpu.dimension_semantics<parallel>], iteration_bounds = array<i64: 2>, scalar_prefetch = 0 : i64, scratch_operands = 0 : i64, tpu.core_type = #tpu.core_type<tc>, window_params = [{transform_indices = @transform_0, window_bounds = array<i64: 1, 8, 32>}, {transform_indices = @transform_1, window_bounds = array<i64: 1, 8, 64>}, {transform_indices = @transform_2, window_bounds = array<i64: 1, 8, 32>}]} {
    %c0 = arith.constant 0 : index
    %c0_0 = arith.constant 0 : index
    %c0_1 = arith.constant 0 : index
    %0 = vector.load %arg1[%c0, %c0_0, %c0_1] : memref<1x8x32xf32, #tpu.memory_space<vmem>>, vector<1x8x32xf32>
    %1 = vector.shape_cast %0 : vector<1x8x32xf32> to vector<8x32xf32>
    %c0_2 = arith.constant 0 : index
    %c0_3 = arith.constant 0 : index
    %c0_4 = arith.constant 0 : index
    %2 = vector.load %arg2[%c0_2, %c0_3, %c0_4] : memref<1x8x64xf32, #tpu.memory_space<vmem>>, vector<1x8x64xf32>
    %3 = vector.shape_cast %2 : vector<1x8x64xf32> to vector<8x64xf32>
    %4 = vector.extract_strided_slice %3 {offsets = [0, 0], sizes = [8, 32], strides = [1, 1]} : vector<8x64xf32> to vector<8x32xf32>
    %5 = vector.extract_strided_slice %3 {offsets = [0, 32], sizes = [8, 32], strides = [1, 1]} : vector<8x64xf32> to vector<8x32xf32>
    %6 = vector.extract_strided_slice %1 {offsets = [0, 0], sizes = [8, 8], strides = [1, 1]} : vector<8x32xf32> to vector<8x8xf32>
    %cst = arith.constant 0.353553385 : f32
    %7 = vector.broadcast %cst : f32 to vector<8x8xf32>
    %8 = arith.mulf %6, %7 : vector<8x8xf32>
    %9 = vector.extract_strided_slice %4 {offsets = [0, 0], sizes = [8, 8], strides = [1, 1]} : vector<8x32xf32> to vector<8x8xf32>
    %10 = vector.extract_strided_slice %5 {offsets = [0, 0], sizes = [8, 8], strides = [1, 1]} : vector<8x32xf32> to vector<8x8xf32>
    %cst_5 = arith.constant dense<0.000000e+00> : vector<8x8xf32>
    %11 = tpu.matmul %8, %9, %cst_5 {dimension_numbers = #tpu.dot_dimension_numbers<[1], [1], [0], [0], [0, 0, 1, 0], [], []>} : vector<8x8xf32>, vector<8x8xf32>, vector<8x8xf32> -> vector<8x8xf32>
    %cst_6 = arith.constant dense<0xFF800000> : vector<8xf32>
    %12 = vector.multi_reduction <maximumf>, %11, %cst_6 [1] : vector<8x8xf32> to vector<8xf32>
    %13 = vector.shape_cast %12 : vector<8xf32> to vector<8x1xf32>
    %14 = vector.broadcast %13 : vector<8x1xf32> to vector<8x8xf32>
    %15 = arith.subf %11, %14 : vector<8x8xf32>
    %16 = math.exp %15 : vector<8x8xf32>
    %cst_7 = arith.constant dense<0.000000e+00> : vector<8xf32>
    %17 = vector.multi_reduction <add>, %16, %cst_7 [1] : vector<8x8xf32> to vector<8xf32>
    %18 = vector.shape_cast %17 : vector<8xf32> to vector<8x1xf32>
    %19 = tpu.reciprocal %18 {approx = true} : vector<8x1xf32> -> vector<8x1xf32>
    %20 = vector.broadcast %19 : vector<8x1xf32> to vector<8x8xf32>
    %21 = arith.mulf %16, %20 : vector<8x8xf32>
    %cst_8 = arith.constant dense<0.000000e+00> : vector<8x8xf32>
    %22 = tpu.matmul %21, %10, %cst_8 {dimension_numbers = #tpu.dot_dimension_numbers<[1], [0], [0], [1], [0, 0, 1, 1], [], []>} : vector<8x8xf32>, vector<8x8xf32>, vector<8x8xf32> -> vector<8x8xf32>
    %23 = vector.extract_strided_slice %1 {offsets = [0, 8], sizes = [8, 8], strides = [1, 1]} : vector<8x32xf32> to vector<8x8xf32>
    %cst_9 = arith.constant 0.353553385 : f32
    %24 = vector.broadcast %cst_9 : f32 to vector<8x8xf32>
    %25 = arith.mulf %23, %24 : vector<8x8xf32>
    %26 = vector.extract_strided_slice %4 {offsets = [0, 8], sizes = [8, 8], strides = [1, 1]} : vector<8x32xf32> to vector<8x8xf32>
    %27 = vector.extract_strided_slice %5 {offsets = [0, 8], sizes = [8, 8], strides = [1, 1]} : vector<8x32xf32> to vector<8x8xf32>
    %cst_10 = arith.constant dense<0.000000e+00> : vector<8x8xf32>
    %28 = tpu.matmul %25, %26, %cst_10 {dimension_numbers = #tpu.dot_dimension_numbers<[1], [1], [0], [0], [0, 0, 1, 0], [], []>} : vector<8x8xf32>, vector<8x8xf32>, vector<8x8xf32> -> vector<8x8xf32>
    %cst_11 = arith.constant dense<0xFF800000> : vector<8xf32>
    %29 = vector.multi_reduction <maximumf>, %28, %cst_11 [1] : vector<8x8xf32> to vector<8xf32>
    %30 = vector.shape_cast %29 : vector<8xf32> to vector<8x1xf32>
    %31 = vector.broadcast %30 : vector<8x1xf32> to vector<8x8xf32>
    %32 = arith.subf %28, %31 : vector<8x8xf32>
    %33 = math.exp %32 : vector<8x8xf32>
    %cst_12 = arith.constant dense<0.000000e+00> : vector<8xf32>
    %34 = vector.multi_reduction <add>, %33, %cst_12 [1] : vector<8x8xf32> to vector<8xf32>
    %35 = vector.shape_cast %34 : vector<8xf32> to vector<8x1xf32>
    %36 = tpu.reciprocal %35 {approx = true} : vector<8x1xf32> -> vector<8x1xf32>
    %37 = vector.broadcast %36 : vector<8x1xf32> to vector<8x8xf32>
    %38 = arith.mulf %33, %37 : vector<8x8xf32>
    %cst_13 = arith.constant dense<0.000000e+00> : vector<8x8xf32>
    %39 = tpu.matmul %38, %27, %cst_13 {dimension_numbers = #tpu.dot_dimension_numbers<[1], [0], [0], [1], [0, 0, 1, 1], [], []>} : vector<8x8xf32>, vector<8x8xf32>, vector<8x8xf32> -> vector<8x8xf32>
    %40 = vector.extract_strided_slice %1 {offsets = [0, 16], sizes = [8, 8], strides = [1, 1]} : vector<8x32xf32> to vector<8x8xf32>
    %cst_14 = arith.constant 0.353553385 : f32
    %41 = vector.broadcast %cst_14 : f32 to vector<8x8xf32>
    %42 = arith.mulf %40, %41 : vector<8x8xf32>
    %43 = vector.extract_strided_slice %4 {offsets = [0, 16], sizes = [8, 8], strides = [1, 1]} : vector<8x32xf32> to vector<8x8xf32>
    %44 = vector.extract_strided_slice %5 {offsets = [0, 16], sizes = [8, 8], strides = [1, 1]} : vector<8x32xf32> to vector<8x8xf32>
    %cst_15 = arith.constant dense<0.000000e+00> : vector<8x8xf32>
    %45 = tpu.matmul %42, %43, %cst_15 {dimension_numbers = #tpu.dot_dimension_numbers<[1], [1], [0], [0], [0, 0, 1, 0], [], []>} : vector<8x8xf32>, vector<8x8xf32>, vector<8x8xf32> -> vector<8x8xf32>
    %cst_16 = arith.constant dense<0xFF800000> : vector<8xf32>
    %46 = vector.multi_reduction <maximumf>, %45, %cst_16 [1] : vector<8x8xf32> to vector<8xf32>
    %47 = vector.shape_cast %46 : vector<8xf32> to vector<8x1xf32>
    %48 = vector.broadcast %47 : vector<8x1xf32> to vector<8x8xf32>
    %49 = arith.subf %45, %48 : vector<8x8xf32>
    %50 = math.exp %49 : vector<8x8xf32>
    %cst_17 = arith.constant dense<0.000000e+00> : vector<8xf32>
    %51 = vector.multi_reduction <add>, %50, %cst_17 [1] : vector<8x8xf32> to vector<8xf32>
    %52 = vector.shape_cast %51 : vector<8xf32> to vector<8x1xf32>
    %53 = tpu.reciprocal %52 {approx = true} : vector<8x1xf32> -> vector<8x1xf32>
    %54 = vector.broadcast %53 : vector<8x1xf32> to vector<8x8xf32>
    %55 = arith.mulf %50, %54 : vector<8x8xf32>
    %cst_18 = arith.constant dense<0.000000e+00> : vector<8x8xf32>
    %56 = tpu.matmul %55, %44, %cst_18 {dimension_numbers = #tpu.dot_dimension_numbers<[1], [0], [0], [1], [0, 0, 1, 1], [], []>} : vector<8x8xf32>, vector<8x8xf32>, vector<8x8xf32> -> vector<8x8xf32>
    %57 = vector.extract_strided_slice %1 {offsets = [0, 24], sizes = [8, 8], strides = [1, 1]} : vector<8x32xf32> to vector<8x8xf32>
    %cst_19 = arith.constant 0.353553385 : f32
    %58 = vector.broadcast %cst_19 : f32 to vector<8x8xf32>
    %59 = arith.mulf %57, %58 : vector<8x8xf32>
    %60 = vector.extract_strided_slice %4 {offsets = [0, 24], sizes = [8, 8], strides = [1, 1]} : vector<8x32xf32> to vector<8x8xf32>
    %61 = vector.extract_strided_slice %5 {offsets = [0, 24], sizes = [8, 8], strides = [1, 1]} : vector<8x32xf32> to vector<8x8xf32>
    %cst_20 = arith.constant dense<0.000000e+00> : vector<8x8xf32>
    %62 = tpu.matmul %59, %60, %cst_20 {dimension_numbers = #tpu.dot_dimension_numbers<[1], [1], [0], [0], [0, 0, 1, 0], [], []>} : vector<8x8xf32>, vector<8x8xf32>, vector<8x8xf32> -> vector<8x8xf32>
    %cst_21 = arith.constant dense<0xFF800000> : vector<8xf32>
    %63 = vector.multi_reduction <maximumf>, %62, %cst_21 [1] : vector<8x8xf32> to vector<8xf32>
    %64 = vector.shape_cast %63 : vector<8xf32> to vector<8x1xf32>
    %65 = vector.broadcast %64 : vector<8x1xf32> to vector<8x8xf32>
    %66 = arith.subf %62, %65 : vector<8x8xf32>
    %67 = math.exp %66 : vector<8x8xf32>
    %cst_22 = arith.constant dense<0.000000e+00> : vector<8xf32>
    %68 = vector.multi_reduction <add>, %67, %cst_22 [1] : vector<8x8xf32> to vector<8xf32>
    %69 = vector.shape_cast %68 : vector<8xf32> to vector<8x1xf32>
    %70 = tpu.reciprocal %69 {approx = true} : vector<8x1xf32> -> vector<8x1xf32>
    %71 = vector.broadcast %70 : vector<8x1xf32> to vector<8x8xf32>
    %72 = arith.mulf %67, %71 : vector<8x8xf32>
    %cst_23 = arith.constant dense<0.000000e+00> : vector<8x8xf32>
    %73 = tpu.matmul %72, %61, %cst_23 {dimension_numbers = #tpu.dot_dimension_numbers<[1], [0], [0], [1], [0, 0, 1, 1], [], []>} : vector<8x8xf32>, vector<8x8xf32>, vector<8x8xf32> -> vector<8x8xf32>
    %74 = tpu.concatenate %22, %39, %56, %73 in 1 : vector<8x8xf32>, vector<8x8xf32>, vector<8x8xf32>, vector<8x8xf32> -> vector<8x32xf32>
    %c0_24 = arith.constant 0 : index
    %c0_25 = arith.constant 0 : index
    %c0_26 = arith.constant 0 : index
    %75 = vector.load %arg3[%c0_24, %c0_25, %c0_26] : memref<1x8x32xf32, #tpu.memory_space<vmem>>, vector<1x8x32xf32>
    %76 = vector.shape_cast %75 : vector<1x8x32xf32> to vector<8x32xf32>
    %77 = vector.shape_cast %74 : vector<8x32xf32> to vector<1x8x32xf32>
    tpu.vector_store %arg3[%c0_24, %c0_25, %c0_26], %77 {strides = array<i32>} : memref<1x8x32xf32, #tpu.memory_space<vmem>>, vector<1x8x32xf32>,
    return
  }
  func.func @transform_0(%arg0: i32) -> (i32, i32, i32) {
    %c0_i32 = arith.constant 0 : i32
    %c0_i32_0 = arith.constant 0 : i32
    %c0_i32_1 = arith.constant 0 : i32
    return %arg0, %c0_i32, %c0_i32_0 : i32, i32, i32
  }
  func.func @transform_1(%arg0: i32) -> (i32, i32, i32) {
    %c0_i32 = arith.constant 0 : i32
    %c0_i32_0 = arith.constant 0 : i32
    %c0_i32_1 = arith.constant 0 : i32
    return %arg0, %c0_i32, %c0_i32_0 : i32, i32, i32
  }
  func.func @transform_2(%arg0: i32) -> (i32, i32, i32) {
    %c0_i32 = arith.constant 0 : i32
    %c0_i32_0 = arith.constant 0 : i32
    %c0_i32_1 = arith.constant 0 : i32
    return %arg0, %c0_i32, %c0_i32_0 : i32, i32, i32
  }
}

module attributes {stable_mosaic.version = 11 : i64} {
  func.func @kernel(%arg0: i32, %arg1: i32, %arg2: i32, %arg3: memref<16x64xf32, #tpu.memory_space<vmem>>, %arg4: memref<64x32xf32, #tpu.memory_space<vmem>>, %arg5: memref<1x32xf32, #tpu.memory_space<vmem>>, %arg6: memref<16x32xf32, #tpu.memory_space<vmem>>, %arg7: memref<16x32xf32, #tpu.memory_space<vmem>>, %arg8: memref<16x32xf32, #tpu.memory_space<vmem>>) attributes {dimension_semantics = [#tpu.dimension_semantics<parallel>, #tpu.dimension_semantics<parallel>, #tpu.dimension_semantics<arbitrary>], iteration_bounds = array<i64: 1, 1, 1>, scalar_prefetch = 0 : i64, scratch_operands = 1 : i64, tpu.core_type = #tpu.core_type<tc>, window_params = [{transform_indices = @transform_0, window_bounds = array<i64: 16, 64>}, {transform_indices = @transform_1, window_bounds = array<i64: 64, 32>}, {transform_indices = @transform_2, window_bounds = array<i64: 1, 32>}, {transform_indices = @transform_3, window_bounds = array<i64: 16, 32>}, {transform_indices = @transform_4, window_bounds = array<i64: 16, 32>}]} {
    %c0_i32 = arith.constant 0 : i32
    %0 = arith.cmpi eq, %arg2, %c0_i32 : i32
    %1 = arith.extui %0 : i1 to i32
    %c0_i32_0 = arith.constant 0 : i32
    %2 = arith.cmpi ne, %1, %c0_i32_0 : i32
    scf.if %2 {
      %cst_10 = arith.constant 0.000000e+00 : f32
      %12 = vector.broadcast %cst_10 : f32 to vector<16x32xf32>
      %c0_11 = arith.constant 0 : index
      %c0_12 = arith.constant 0 : index
      %13 = vector.load %arg8[%c0_11, %c0_12] : memref<16x32xf32, #tpu.memory_space<vmem>>, vector<16x32xf32>
      tpu.vector_store %arg8[%c0_11, %c0_12], %12 {strides = array<i32>} : memref<16x32xf32, #tpu.memory_space<vmem>>, vector<16x32xf32>,
    } else {
    }
    %c0 = arith.constant 0 : index
    %c0_1 = arith.constant 0 : index
    %3 = vector.load %arg8[%c0, %c0_1] : memref<16x32xf32, #tpu.memory_space<vmem>>, vector<16x32xf32>
    %c0_2 = arith.constant 0 : index
    %c0_3 = arith.constant 0 : index
    %4 = vector.load %arg3[%c0_2, %c0_3] : memref<16x64xf32, #tpu.memory_space<vmem>>, vector<16x64xf32>
    %c0_4 = arith.constant 0 : index
    %c0_5 = arith.constant 0 : index
    %5 = vector.load %arg4[%c0_4, %c0_5] : memref<64x32xf32, #tpu.memory_space<vmem>>, vector<64x32xf32>
    %cst = arith.constant dense<0.000000e+00> : vector<16x32xf32>
    %6 = tpu.matmul %4, %5, %cst {dimension_numbers = #tpu.dot_dimension_numbers<[1], [0], [0], [1], [0, 0, 1, 1], [], []>} : vector<16x64xf32>, vector<64x32xf32>, vector<16x32xf32> -> vector<16x32xf32>
    %7 = arith.addf %3, %6 : vector<16x32xf32>
    %c0_6 = arith.constant 0 : index
    %c0_7 = arith.constant 0 : index
    %8 = vector.load %arg8[%c0_6, %c0_7] : memref<16x32xf32, #tpu.memory_space<vmem>>, vector<16x32xf32>
    tpu.vector_store %arg8[%c0_6, %c0_7], %7 {strides = array<i32>} : memref<16x32xf32, #tpu.memory_space<vmem>>, vector<16x32xf32>,
    %c0_i32_8 = arith.constant 0 : i32
    %9 = arith.cmpi eq, %arg2, %c0_i32_8 : i32
    %10 = arith.extui %9 : i1 to i32
    %c0_i32_9 = arith.constant 0 : i32
    %11 = arith.cmpi ne, %10, %c0_i32_9 : i32
    scf.if %11 {
      %c0_10 = arith.constant 0 : index
      %c0_11 = arith.constant 0 : index
      %12 = vector.load %arg8[%c0_10, %c0_11] : memref<16x32xf32, #tpu.memory_space<vmem>>, vector<16x32xf32>
      %c0_12 = arith.constant 0 : index
      %c0_13 = arith.constant 0 : index
      %13 = vector.load %arg5[%c0_12, %c0_13] : memref<1x32xf32, #tpu.memory_space<vmem>>, vector<1x32xf32>
      %14 = vector.broadcast %13 : vector<1x32xf32> to vector<16x32xf32>
      %15 = arith.addf %12, %14 : vector<16x32xf32>
      %c0_14 = arith.constant 0 : index
      %c0_15 = arith.constant 0 : index
      %16 = vector.load %arg6[%c0_14, %c0_15] : memref<16x32xf32, #tpu.memory_space<vmem>>, vector<16x32xf32>
      %17 = arith.addf %15, %16 : vector<16x32xf32>
      %c0_16 = arith.constant 0 : index
      %c0_17 = arith.constant 0 : index
      %18 = vector.load %arg7[%c0_16, %c0_17] : memref<16x32xf32, #tpu.memory_space<vmem>>, vector<16x32xf32>
      tpu.vector_store %arg7[%c0_16, %c0_17], %17 {strides = array<i32>} : memref<16x32xf32, #tpu.memory_space<vmem>>, vector<16x32xf32>,
    } else {
    }
    return
  }
  func.func @transform_0(%arg0: i32, %arg1: i32, %arg2: i32) -> (i32, i32) {
    %c0_i32 = arith.constant 0 : i32
    return %arg0, %arg2 : i32, i32
  }
  func.func @transform_1(%arg0: i32, %arg1: i32, %arg2: i32) -> (i32, i32) {
    %c0_i32 = arith.constant 0 : i32
    return %arg2, %arg1 : i32, i32
  }
  func.func @transform_2(%arg0: i32, %arg1: i32, %arg2: i32) -> (i32, i32) {
    %c0_i32 = arith.constant 0 : i32
    %c0_i32_0 = arith.constant 0 : i32
    return %c0_i32, %arg1 : i32, i32
  }
  func.func @transform_3(%arg0: i32, %arg1: i32, %arg2: i32) -> (i32, i32) {
    %c0_i32 = arith.constant 0 : i32
    return %arg0, %arg1 : i32, i32
  }
  func.func @transform_4(%arg0: i32, %arg1: i32, %arg2: i32) -> (i32, i32) {
    %c0_i32 = arith.constant 0 : i32
    return %arg0, %arg1 : i32, i32
  }
}

module attributes {stable_mosaic.version = 11 : i64} {
  func.func @kernel(%arg0: i32, %arg1: i32, %arg2: i32, %arg3: memref<16x32xf32, #tpu.memory_space<vmem>>, %arg4: memref<32x64xf32, #tpu.memory_space<vmem>>, %arg5: memref<1x64xf32, #tpu.memory_space<vmem>>, %arg6: memref<16x64xf32, #tpu.memory_space<vmem>>, %arg7: memref<16x64xf32, #tpu.memory_space<vmem>>) attributes {dimension_semantics = [#tpu.dimension_semantics<parallel>, #tpu.dimension_semantics<parallel>, #tpu.dimension_semantics<arbitrary>], iteration_bounds = array<i64: 1, 1, 1>, scalar_prefetch = 0 : i64, scratch_operands = 1 : i64, tpu.core_type = #tpu.core_type<tc>, window_params = [{transform_indices = @transform_0, window_bounds = array<i64: 16, 32>}, {transform_indices = @transform_1, window_bounds = array<i64: 32, 64>}, {transform_indices = @transform_2, window_bounds = array<i64: 1, 64>}, {transform_indices = @transform_3, window_bounds = array<i64: 16, 64>}]} {
    %c0_i32 = arith.constant 0 : i32
    %0 = arith.cmpi eq, %arg2, %c0_i32 : i32
    %1 = arith.extui %0 : i1 to i32
    %c0_i32_0 = arith.constant 0 : i32
    %2 = arith.cmpi ne, %1, %c0_i32_0 : i32
    scf.if %2 {
      %cst_10 = arith.constant 0.000000e+00 : f32
      %12 = vector.broadcast %cst_10 : f32 to vector<16x64xf32>
      %c0_11 = arith.constant 0 : index
      %c0_12 = arith.constant 0 : index
      %13 = vector.load %arg7[%c0_11, %c0_12] : memref<16x64xf32, #tpu.memory_space<vmem>>, vector<16x64xf32>
      tpu.vector_store %arg7[%c0_11, %c0_12], %12 {strides = array<i32>} : memref<16x64xf32, #tpu.memory_space<vmem>>, vector<16x64xf32>,
    } else {
    }
    %c0 = arith.constant 0 : index
    %c0_1 = arith.constant 0 : index
    %3 = vector.load %arg7[%c0, %c0_1] : memref<16x64xf32, #tpu.memory_space<vmem>>, vector<16x64xf32>
    %c0_2 = arith.constant 0 : index
    %c0_3 = arith.constant 0 : index
    %4 = vector.load %arg3[%c0_2, %c0_3] : memref<16x32xf32, #tpu.memory_space<vmem>>, vector<16x32xf32>
    %c0_4 = arith.constant 0 : index
    %c0_5 = arith.constant 0 : index
    %5 = vector.load %arg4[%c0_4, %c0_5] : memref<32x64xf32, #tpu.memory_space<vmem>>, vector<32x64xf32>
    %cst = arith.constant dense<0.000000e+00> : vector<16x64xf32>
    %6 = tpu.matmul %4, %5, %cst {dimension_numbers = #tpu.dot_dimension_numbers<[1], [0], [0], [1], [0, 0, 1, 1], [], []>} : vector<16x32xf32>, vector<32x64xf32>, vector<16x64xf32> -> vector<16x64xf32>
    %7 = arith.addf %3, %6 : vector<16x64xf32>
    %c0_6 = arith.constant 0 : index
    %c0_7 = arith.constant 0 : index
    %8 = vector.load %arg7[%c0_6, %c0_7] : memref<16x64xf32, #tpu.memory_space<vmem>>, vector<16x64xf32>
    tpu.vector_store %arg7[%c0_6, %c0_7], %7 {strides = array<i32>} : memref<16x64xf32, #tpu.memory_space<vmem>>, vector<16x64xf32>,
    %c0_i32_8 = arith.constant 0 : i32
    %9 = arith.cmpi eq, %arg2, %c0_i32_8 : i32
    %10 = arith.extui %9 : i1 to i32
    %c0_i32_9 = arith.constant 0 : i32
    %11 = arith.cmpi ne, %10, %c0_i32_9 : i32
    scf.if %11 {
      %c0_10 = arith.constant 0 : index
      %c0_11 = arith.constant 0 : index
      %12 = vector.load %arg7[%c0_10, %c0_11] : memref<16x64xf32, #tpu.memory_space<vmem>>, vector<16x64xf32>
      %c0_12 = arith.constant 0 : index
      %c0_13 = arith.constant 0 : index
      %13 = vector.load %arg5[%c0_12, %c0_13] : memref<1x64xf32, #tpu.memory_space<vmem>>, vector<1x64xf32>
      %14 = vector.broadcast %13 : vector<1x64xf32> to vector<16x64xf32>
      %15 = arith.addf %12, %14 : vector<16x64xf32>
      %16 = arith.mulf %15, %15 : vector<16x64xf32>
      %17 = arith.mulf %15, %16 : vector<16x64xf32>
      %cst_14 = arith.constant 4.471500e-02 : f32
      %18 = vector.broadcast %cst_14 : f32 to vector<16x64xf32>
      %19 = arith.mulf %18, %17 : vector<16x64xf32>
      %20 = arith.addf %15, %19 : vector<16x64xf32>
      %cst_15 = arith.constant 0.797884583 : f32
      %21 = vector.broadcast %cst_15 : f32 to vector<16x64xf32>
      %22 = arith.mulf %21, %20 : vector<16x64xf32>
      %23 = math.tanh %22 : vector<16x64xf32>
      %cst_16 = arith.constant 1.000000e+00 : f32
      %24 = vector.broadcast %cst_16 : f32 to vector<16x64xf32>
      %25 = arith.addf %24, %23 : vector<16x64xf32>
      %cst_17 = arith.constant 5.000000e-01 : f32
      %26 = vector.broadcast %cst_17 : f32 to vector<16x64xf32>
      %27 = arith.mulf %26, %25 : vector<16x64xf32>
      %28 = arith.mulf %15, %27 : vector<16x64xf32>
      %c0_18 = arith.constant 0 : index
      %c0_19 = arith.constant 0 : index
      %29 = vector.load %arg6[%c0_18, %c0_19] : memref<16x64xf32, #tpu.memory_space<vmem>>, vector<16x64xf32>
      tpu.vector_store %arg6[%c0_18, %c0_19], %28 {strides = array<i32>} : memref<16x64xf32, #tpu.memory_space<vmem>>, vector<16x64xf32>,
    } else {
    }
    return
  }
  func.func @transform_0(%arg0: i32, %arg1: i32, %arg2: i32) -> (i32, i32) {
    %c0_i32 = arith.constant 0 : i32
    return %arg0, %arg2 : i32, i32
  }
  func.func @transform_1(%arg0: i32, %arg1: i32, %arg2: i32) -> (i32, i32) {
    %c0_i32 = arith.constant 0 : i32
    return %arg2, %arg1 : i32, i32
  }
  func.func @transform_2(%arg0: i32, %arg1: i32, %arg2: i32) -> (i32, i32) {
    %c0_i32 = arith.constant 0 : i32
    %c0_i32_0 = arith.constant 0 : i32
    return %c0_i32, %arg1 : i32, i32
  }
  func.func @transform_3(%arg0: i32, %arg1: i32, %arg2: i32) -> (i32, i32) {
    %c0_i32 = arith.constant 0 : i32
    return %arg0, %arg1 : i32, i32
  }
}

module attributes {stable_mosaic.version = 11 : i64} {
  func.func @kernel(%arg0: i32, %arg1: i32, %arg2: i32, %arg3: memref<16x64xf32, #tpu.memory_space<vmem>>, %arg4: memref<64x32xf32, #tpu.memory_space<vmem>>, %arg5: memref<1x32xf32, #tpu.memory_space<vmem>>, %arg6: memref<16x32xf32, #tpu.memory_space<vmem>>, %arg7: memref<1x32xf32, #tpu.memory_space<vmem>>, %arg8: memref<1x32xf32, #tpu.memory_space<vmem>>, %arg9: memref<16x32xf32, #tpu.memory_space<vmem>>, %arg10: memref<16x32xf32, #tpu.memory_space<vmem>>) attributes {dimension_semantics = [#tpu.dimension_semantics<parallel>, #tpu.dimension_semantics<parallel>, #tpu.dimension_semantics<arbitrary>], iteration_bounds = array<i64: 1, 1, 1>, scalar_prefetch = 0 : i64, scratch_operands = 1 : i64, tpu.core_type = #tpu.core_type<tc>, window_params = [{transform_indices = @transform_0, window_bounds = array<i64: 16, 64>}, {transform_indices = @transform_1, window_bounds = array<i64: 64, 32>}, {transform_indices = @transform_2, window_bounds = array<i64: 1, 32>}, {transform_indices = @transform_3, window_bounds = array<i64: 16, 32>}, {transform_indices = @transform_4, window_bounds = array<i64: 1, 32>}, {transform_indices = @transform_5, window_bounds = array<i64: 1, 32>}, {transform_indices = @transform_6, window_bounds = array<i64: 16, 32>}]} {
    %c0_i32 = arith.constant 0 : i32
    %0 = arith.cmpi eq, %arg2, %c0_i32 : i32
    %1 = arith.extui %0 : i1 to i32
    %c0_i32_0 = arith.constant 0 : i32
    %2 = arith.cmpi ne, %1, %c0_i32_0 : i32
    scf.if %2 {
      %cst_10 = arith.constant 0.000000e+00 : f32
      %12 = vector.broadcast %cst_10 : f32 to vector<16x32xf32>
      %c0_11 = arith.constant 0 : index
      %c0_12 = arith.constant 0 : index
      %13 = vector.load %arg10[%c0_11, %c0_12] : memref<16x32xf32, #tpu.memory_space<vmem>>, vector<16x32xf32>
      tpu.vector_store %arg10[%c0_11, %c0_12], %12 {strides = array<i32>} : memref<16x32xf32, #tpu.memory_space<vmem>>, vector<16x32xf32>,
    } else {
    }
    %c0 = arith.constant 0 : index
    %c0_1 = arith.constant 0 : index
    %3 = vector.load %arg10[%c0, %c0_1] : memref<16x32xf32, #tpu.memory_space<vmem>>, vector<16x32xf32>
    %c0_2 = arith.constant 0 : index
    %c0_3 = arith.constant 0 : index
    %4 = vector.load %arg3[%c0_2, %c0_3] : memref<16x64xf32, #tpu.memory_space<vmem>>, vector<16x64xf32>
    %c0_4 = arith.constant 0 : index
    %c0_5 = arith.constant 0 : index
    %5 = vector.load %arg4[%c0_4, %c0_5] : memref<64x32xf32, #tpu.memory_space<vmem>>, vector<64x32xf32>
    %cst = arith.constant dense<0.000000e+00> : vector<16x32xf32>
    %6 = tpu.matmul %4, %5, %cst {dimension_numbers = #tpu.dot_dimension_numbers<[1], [0], [0], [1], [0, 0, 1, 1], [], []>} : vector<16x64xf32>, vector<64x32xf32>, vector<16x32xf32> -> vector<16x32xf32>
    %7 = arith.addf %3, %6 : vector<16x32xf32>
    %c0_6 = arith.constant 0 : index
    %c0_7 = arith.constant 0 : index
    %8 = vector.load %arg10[%c0_6, %c0_7] : memref<16x32xf32, #tpu.memory_space<vmem>>, vector<16x32xf32>
    tpu.vector_store %arg10[%c0_6, %c0_7], %7 {strides = array<i32>} : memref<16x32xf32, #tpu.memory_space<vmem>>, vector<16x32xf32>,
    %c0_i32_8 = arith.constant 0 : i32
    %9 = arith.cmpi eq, %arg2, %c0_i32_8 : i32
    %10 = arith.extui %9 : i1 to i32
    %c0_i32_9 = arith.constant 0 : i32
    %11 = arith.cmpi ne, %10, %c0_i32_9 : i32
    scf.if %11 {
      %c0_10 = arith.constant 0 : index
      %c0_11 = arith.constant 0 : index
      %12 = vector.load %arg10[%c0_10, %c0_11] : memref<16x32xf32, #tpu.memory_space<vmem>>, vector<16x32xf32>
      %c0_12 = arith.constant 0 : index
      %c0_13 = arith.constant 0 : index
      %13 = vector.load %arg5[%c0_12, %c0_13] : memref<1x32xf32, #tpu.memory_space<vmem>>, vector<1x32xf32>
      %14 = vector.broadcast %13 : vector<1x32xf32> to vector<16x32xf32>
      %15 = arith.addf %12, %14 : vector<16x32xf32>
      %c0_14 = arith.constant 0 : index
      %c0_15 = arith.constant 0 : index
      %16 = vector.load %arg6[%c0_14, %c0_15] : memref<16x32xf32, #tpu.memory_space<vmem>>, vector<16x32xf32>
      %17 = arith.addf %15, %16 : vector<16x32xf32>
      %cst_16 = arith.constant dense<0.000000e+00> : vector<16xf32>
      %18 = vector.multi_reduction <add>, %17, %cst_16 [1] : vector<16x32xf32> to vector<16xf32>
      %19 = vector.shape_cast %18 : vector<16xf32> to vector<16x1xf32>
      %cst_17 = arith.constant 3.200000e+01 : f32
      %20 = vector.broadcast %cst_17 : f32 to vector<16x1xf32>
      %21 = arith.divf %19, %20 : vector<16x1xf32>
      %22 = vector.broadcast %21 : vector<16x1xf32> to vector<16x32xf32>
      %23 = arith.subf %17, %22 : vector<16x32xf32>
      %24 = arith.mulf %23, %23 : vector<16x32xf32>
      %cst_18 = arith.constant dense<0.000000e+00> : vector<16xf32>
      %25 = vector.multi_reduction <add>, %24, %cst_18 [1] : vector<16x32xf32> to vector<16xf32>
      %26 = vector.shape_cast %25 : vector<16xf32> to vector<16x1xf32>
      %cst_19 = arith.constant 3.200000e+01 : f32
      %27 = vector.broadcast %cst_19 : f32 to vector<16x1xf32>
      %28 = arith.divf %26, %27 : vector<16x1xf32>
      %cst_20 = arith.constant 9.99999974E-6 : f32
      %29 = vector.broadcast %cst_20 : f32 to vector<16x1xf32>
      %30 = arith.addf %28, %29 : vector<16x1xf32>
      %31 = math.rsqrt %30 : vector<16x1xf32>
      %32 = vector.broadcast %31 : vector<16x1xf32> to vector<16x32xf32>
      %33 = arith.mulf %23, %32 : vector<16x32xf32>
      %c0_21 = arith.constant 0 : index
      %c0_22 = arith.constant 0 : index
      %34 = vector.load %arg7[%c0_21, %c0_22] : memref<1x32xf32, #tpu.memory_space<vmem>>, vector<1x32xf32>
      %35 = vector.broadcast %34 : vector<1x32xf32> to vector<16x32xf32>
      %36 = arith.mulf %33, %35 : vector<16x32xf32>
      %c0_23 = arith.constant 0 : index
      %c0_24 = arith.constant 0 : index
      %37 = vector.load %arg8[%c0_23, %c0_24] : memref<1x32xf32, #tpu.memory_space<vmem>>, vector<1x32xf32>
      %38 = vector.broadcast %37 : vector<1x32xf32> to vector<16x32xf32>
      %39 = arith.addf %36, %38 : vector<16x32xf32>
      %c0_25 = arith.constant 0 : index
      %c0_26 = arith.constant 0 : index
      %40 = vector.load %arg9[%c0_25, %c0_26] : memref<16x32xf32, #tpu.memory_space<vmem>>, vector<16x32xf32>
      tpu.vector_store %arg9[%c0_25, %c0_26], %39 {strides = array<i32>} : memref<16x32xf32, #tpu.memory_space<vmem>>, vector<16x32xf32>,
    } else {
    }
    return
  }
  func.func @transform_0(%arg0: i32, %arg1: i32, %arg2: i32) -> (i32, i32) {
    %c0_i32 = arith.constant 0 : i32
    return %arg0, %arg2 : i32, i32
  }
  func.func @transform_1(%arg0: i32, %arg1: i32, %arg2: i32) -> (i32, i32) {
    %c0_i32 = arith.constant 0 : i32
    return %arg2, %arg1 : i32, i32
  }
  func.func @transform_2(%arg0: i32, %arg1: i32, %arg2: i32) -> (i32, i32) {
    %c0_i32 = arith.constant 0 : i32
    %c0_i32_0 = arith.constant 0 : i32
    return %c0_i32, %arg1 : i32, i32
  }
  func.func @transform_3(%arg0: i32, %arg1: i32, %arg2: i32) -> (i32, i32) {
    %c0_i32 = arith.constant 0 : i32
    return %arg0, %arg1 : i32, i32
  }
  func.func @transform_4(%arg0: i32, %arg1: i32, %arg2: i32) -> (i32, i32) {
    %c0_i32 = arith.constant 0 : i32
    %c0_i32_0 = arith.constant 0 : i32
    return %c0_i32, %arg1 : i32, i32
  }
  func.func @transform_5(%arg0: i32, %arg1: i32, %arg2: i32) -> (i32, i32) {
    %c0_i32 = arith.constant 0 : i32
    %c0_i32_0 = arith.constant 0 : i32
    return %c0_i32, %arg1 : i32, i32
  }
  func.func @transform_6(%arg0: i32, %arg1: i32, %arg2: i32) -> (i32, i32) {
    %c0_i32 = arith.constant 0 : i32
    return %arg0, %arg1 : i32, i32
  }
}

</mosaic_0001>

<llo_original>
// kernel: decoder_forward.18
$region0: #{decoder_forward.18}
  #allocation0 [shape = 'u32[]', space=smem, size = 0x4, offset = 0x4, fixed_abs, tag = 'smem constant byte address 0x4 - core index']
  #allocation1 [shape = 'u32[144,128]{1,0:T(1,128)}', space=vmem, size = 0x12000, scoped, tag = 'internal scratch']
  #allocation2 [shape = 'f32[16,96]{1,0:T(8,128)}', space=vmem, size = 0x2000, scoped, tag = 'scratch operand']
  %s0 = inlined_call_operand.vmem [shape: f32[16,32], index: 0, kind: input, shape index: {}]
  %s1 = inlined_call_operand.vmem [shape: f32[32,96], index: 1, kind: input, shape index: {}]
  %s2 = inlined_call_operand.vmem [shape: f32[1,96], index: 2, kind: input, shape index: {}]
  %s3 = inlined_call_operand.vmem [shape: f32[16,96], index: 3, kind: output, shape index: {}]
  %s4 = sld [smem:[#allocation0]]
  $region30: #{decoder_forward.18} parent=0
    _
  %s6 = ssub.s32 1, %s4
  %s7 = scalar_select 0, %s6, %s4
  // Predicated region
  $region2: #{decoder_forward.18} parent=0 // pred_check
    _
  $region3: #{decoder_forward.18} parent=0 // pred_check_branch
    %9 = sbr.rel (0) target = $region5
  $region4: #{decoder_forward.18} parent=0 // pred_region
    _
  $region5: #{decoder_forward.18} parent=0 // pred_fallthru
    _
  // Predicated region
  $region6: #{decoder_forward.18} parent=0 // pred_check
    _
  $region7: #{decoder_forward.18} parent=0 // pred_check_branch
    %11 = sbr.rel (0) target = $region9
  $region8: #{decoder_forward.18} parent=0 // pred_region
    _
  $region9: #{decoder_forward.18} parent=0 // pred_fallthru
    _
  // Predicated region
  $region10: #{decoder_forward.18} parent=0 // pred_check
    _
  $region11: #{decoder_forward.18} parent=0 // pred_check_branch
    %13 = sbr.rel (0) target = $region13
  $region12: #{decoder_forward.18} parent=0 // pred_region
    _
  $region13: #{decoder_forward.18} parent=0 // pred_fallthru
    _
  %p14 = scmp.eq.s32.totalorder 0, 0
  // Predicated region
  $region14: #{decoder_forward.18} parent=0 // pred_check
    %p15 = pneg %p14
  $region15: #{decoder_forward.18} parent=0 // pred_check_branch
    %17 = sbr.rel (%p15) target = $region17
  $region16: #{decoder_forward.18} parent=0 // pred_region
    %vm18 = vcmask 785408
    %19 = vst.msk [vmem:[#allocation2] sm:$0xff] %vm18, 0.0
    %20 = vst.msk [vmem:[#allocation2 + $0x8] sm:$0xff] %vm18, 0.0
  $region17: #{decoder_forward.18} parent=0 // pred_fallthru
    _
  %v21 = vld [vmem:[#allocation2] sm:$0xff]
  %v22 = vld [vmem:[#allocation2 + $0x8] sm:$0xff]
  %v23 = vld [vmem:[%s0] sm:$0xff]
  %v24 = vld [vmem:[%s0 + $0x8] sm:$0xff]
  %v25 = vld [vmem:[%s1] sm:$0xff]
  %v26 = vld [vmem:[%s1 + $0x8] sm:$0xff]
  %v27 = vld [vmem:[%s1 + $0x10] sm:$0xff]
  %v28 = vld [vmem:[%s1 + $0x18] sm:$0xff]
  %vm29 = vcmask 261120
  %v31 = vsel %vm29, %v23, 0
  %v34 = vsel %vm29, %v24, 0
  %36 = vmatprep.subr.mxu0 0.0
  %37 = vmatpush1.msra.mxu0 %v25
  %38 = vmatprep.subr.mxu0 0.0
  %39 = vmatpush1.msra.mxu0 %v26
  %40 = vmatprep.subr.mxu0 0.0
  %41 = vmatpush1.msra.mxu0 %v27
  %42 = vmatprep.subr.mxu0 0.0
  %43 = vmatpush1.msra.mxu0 %v28
  %44 = vmatprep.subr.mxu0 0.0
  %45 = vmatpush1.msra.mxu0 0.0
  %46 = vmatprep.subr.mxu0 0.0
  %47 = vmatpush1.msra.mxu0 0.0
  %48 = vmatprep.subr.mxu0 0.0
  %49 = vmatpush1.msra.mxu0 0.0
  %50 = vmatprep.subr.mxu0 0.0
  %51 = vmatpush1.msra.mxu0 0.0
  %52 = vmatprep.subr.mxu0 0.0
  %53 = vmatpush1.msra.mxu0 0.0
  %54 = vmatprep.subr.mxu0 0.0
  %55 = vmatpush1.msra.mxu0 0.0
  %56 = vmatprep.subr.mxu0 0.0
  %57 = vmatpush1.msra.mxu0 0.0
  %58 = vmatprep.subr.mxu0 0.0
  %59 = vmatpush1.msra.mxu0 0.0
  %60 = vmatprep.subr.mxu0 0.0
  %61 = vmatpush1.msra.mxu0 0.0
  %62 = vmatprep.subr.mxu0 0.0
  %63 = vmatpush1.msra.mxu0 0.0
  %64 = vmatprep.subr.mxu0 0.0
  %65 = vmatpush1.msra.mxu0 0.0
  %66 = vmatprep.subr.mxu0 0.0
  %67 = vmatpush1.msra.mxu0 0.0
  %68 = vmatprep.subr.mxu0 0.0
  %69 = vmatpush1.msra.mxu0 0.0
  %70 = vmatprep.subr.mxu0 0.0
  %71 = vmatpush1.msra.mxu0 0.0
  %72 = vmatprep.subr.mxu0 0.0
  %73 = vmatpush1.msra.mxu0 0.0
  %74 = vmatprep.subr.mxu0 0.0
  %75 = vmatpush1.msra.mxu0 0.0
  %76 = vmatprep.subr.mxu0 0.0
  %77 = vmatpush1.msra.mxu0 0.0
  %78 = vmatprep.subr.mxu0 0.0
  %79 = vmatpush1.msra.mxu0 0.0
  %80 = vmatprep.subr.mxu0 0.0
  %81 = vmatpush1.msra.mxu0 0.0
  %82 = vmatprep.subr.mxu0 0.0
  %83 = vmatpush1.msra.mxu0 0.0
  %84 = vmatprep.subr.mxu0 0.0
  %85 = vmatpush1.msra.mxu0 0.0
  %86 = vmatprep.subr.mxu0 0.0
  %87 = vmatpush1.msra.mxu0 0.0
  %88 = vmatprep.subr.mxu0 0.0
  %89 = vmatpush1.msra.mxu0 0.0
  %90 = vmatprep.subr.mxu0 0.0
  %91 = vmatpush1.msra.mxu0 0.0
  %92 = vmatprep.subr.mxu0 0.0
  %93 = vmatpush1.msra.mxu0 0.0
  %94 = vmatprep.subr.mxu0 0.0
  %95 = vmatpush1.msra.mxu0 0.0
  %96 = vmatprep.subr.mxu0 0.0
  %97 = vmatpush1.msra.mxu0 0.0
  %98 = vmatprep.subr.mxu0 0.0
  %99 = vmatpush1.msra.mxu0 0.0
  %100 = vmatprep.mubr.f32.mxu0 0.0
  %101 = vmatmul.mubr.f32.gmra.mrb[0].mxu0 %v31
  %v102 = vpop.f32.mrb[0].mxu0
  %v103 = vadd.f32 0.0, %v102
  %v104 = vpop.f32.mrb[0].mxu0
  %105 = vmatprep.mubr.f32.mxu0 0.0
  %106 = vmatmul.mubr.f32.gmra.mrb[0].mxu0 %v34
  %v107 = vpop.f32.mrb[0].mxu0
  %v108 = vadd.f32 0.0, %v107
  %v109 = vpop.f32.mrb[0].mxu0
  %110 = vdwg.mxu0
  %v111 = vadd.f32 %v21, %v103
  %v112 = vadd.f32 %v22, %v108
  %vm113 = vcmask 785408
  %114 = vst.msk [vmem:[#allocation2] sm:$0xff] %vm113, %v111
  %115 = vst.msk [vmem:[#allocation2 + $0x8] sm:$0xff] %vm113, %v112
  // Predicated region
  $region18: #{decoder_forward.18} parent=0 // pred_check
    %p116 = pneg %p14
  $region19: #{decoder_forward.18} parent=0 // pred_check_branch
    %118 = sbr.rel (%p116) target = $region21
  $region20: #{decoder_forward.18} parent=0 // pred_region
    %v119 = vld [vmem:[#allocation2] sm:$0xff]
    %v120 = vld [vmem:[#allocation2 + $0x8] sm:$0xff]
    %v121 = vld [vmem:[%s2] sm:$0x1]
    %v123 = vlaneseq
    %v124 = vshrl.u32 %v123, 7
    %v125 = vsub.s32 0, %v124
    %v126 = vrot.slane %v121, %v125
    %v128 = vadd.f32 %v119, %v126
    %v129 = vadd.f32 %v120, %v126
    %130 = vst.msk [vmem:[%s3] sm:$0xff] %vm113, %v128
    %131 = vst.msk [vmem:[%s3 + $0x8] sm:$0xff] %vm113, %v129
  $region21: #{decoder_forward.18} parent=0 // pred_fallthru
    _
  // Predicated region
  $region22: #{decoder_forward.18} parent=0 // pred_check
    _
  $region23: #{decoder_forward.18} parent=0 // pred_check_branch
    %133 = sbr.rel (0) target = $region25
  $region24: #{decoder_forward.18} parent=0 // pred_region
    _
  $region25: #{decoder_forward.18} parent=0 // pred_fallthru
    _
  // Predicated region
  $region26: #{decoder_forward.18} parent=0 // pred_check
    _
  $region27: #{decoder_forward.18} parent=0 // pred_check_branch
    %135 = sbr.rel (0) target = $region29
  $region28: #{decoder_forward.18} parent=0 // pred_region
    _
  $region29: #{decoder_forward.18} parent=0 // pred_fallthru
    _

// kernel: decoder_forward.20
$region0: #{decoder_forward.20}
  #allocation0 [shape = 'u32[]', space=smem, size = 0x4, offset = 0x4, fixed_abs, tag = 'smem constant byte address 0x4 - core index']
  #allocation1 [shape = 'u32[144,128]{1,0:T(1,128)}', space=vmem, size = 0x12000, scoped, tag = 'internal scratch']
  #allocation2 [shape = 'f32[16,32]{1,0:T(8,128)}', space=vmem, size = 0x2000, scoped, tag = 'scratch operand']
  %s0 = inlined_call_operand.vmem [shape: f32[16,32], index: 0, kind: input, shape index: {}]
  %s1 = inlined_call_operand.vmem [shape: f32[32,32], index: 1, kind: input, shape index: {}]
  %s2 = inlined_call_operand.vmem [shape: f32[1,32], index: 2, kind: input, shape index: {}]
  %s3 = inlined_call_operand.vmem [shape: f32[16,32], index: 3, kind: input, shape index: {}]
  %s4 = inlined_call_operand.vmem [shape: f32[16,32], index: 4, kind: output, shape index: {}]
  %s5 = sld [smem:[#allocation0]]
  $region34: #{decoder_forward.20} parent=0
    _
  %s7 = ssub.s32 1, %s5
  %s8 = scalar_select 0, %s7, %s5
  // Predicated region
  $region2: #{decoder_forward.20} parent=0 // pred_check
    _
  $region3: #{decoder_forward.20} parent=0 // pred_check_branch
    %10 = sbr.rel (0) target = $region5
  $region4: #{decoder_forward.20} parent=0 // pred_region
    _
  $region5: #{decoder_forward.20} parent=0 // pred_fallthru
    _
  // Predicated region
  $region6: #{decoder_forward.20} parent=0 // pred_check
    _
  $region7: #{decoder_forward.20} parent=0 // pred_check_branch
    %12 = sbr.rel (0) target = $region9
  $region8: #{decoder_forward.20} parent=0 // pred_region
    _
  $region9: #{decoder_forward.20} parent=0 // pred_fallthru
    _
  // Predicated region
  $region10: #{decoder_forward.20} parent=0 // pred_check
    _
  $region11: #{decoder_forward.20} parent=0 // pred_check_branch
    %14 = sbr.rel (0) target = $region13
  $region12: #{decoder_forward.20} parent=0 // pred_region
    _
  $region13: #{decoder_forward.20} parent=0 // pred_fallthru
    _
  // Predicated region
  $region14: #{decoder_forward.20} parent=0 // pred_check
    _
  $region15: #{decoder_forward.20} parent=0 // pred_check_branch
    %16 = sbr.rel (0) target = $region17
  $region16: #{decoder_forward.20} parent=0 // pred_region
    _
  $region17: #{decoder_forward.20} parent=0 // pred_fallthru
    _
  %p17 = scmp.eq.s32.totalorder 0, 0
  // Predicated region
  $region18: #{decoder_forward.20} parent=0 // pred_check
    %p18 = pneg %p17
  $region19: #{decoder_forward.20} parent=0 // pred_check_branch
    %20 = sbr.rel (%p18) target = $region21
  $region20: #{decoder_forward.20} parent=0 // pred_region
    %vm21 = vcmask 261120
    %22 = vst.msk [vmem:[#allocation2] sm:$0xff] %vm21, 0.0
    %23 = vst.msk [vmem:[#allocation2 + $0x8] sm:$0xff] %vm21, 0.0
  $region21: #{decoder_forward.20} parent=0 // pred_fallthru
    _
  %v24 = vld [vmem:[#allocation2] sm:$0xff]
  %v25 = vld [vmem:[#allocation2 + $0x8] sm:$0xff]
  %v26 = vld [vmem:[%s0] sm:$0xff]
  %v27 = vld [vmem:[%s0 + $0x8] sm:$0xff]
  %v28 = vld [vmem:[%s1] sm:$0xff]
  %v29 = vld [vmem:[%s1 + $0x8] sm:$0xff]
  %v30 = vld [vmem:[%s1 + $0x10] sm:$0xff]
  %v31 = vld [vmem:[%s1 + $0x18] sm:$0xff]
  %vm32 = vcmask 261120
  %v34 = vsel %vm32, %v26, 0
  %v37 = vsel %vm32, %v27, 0
  %39 = vmatprep.subr.mxu0 0.0
  %40 = vmatpush1.msra.mxu0 %v28
  %41 = vmatprep.subr.mxu0 0.0
  %42 = vmatpush1.msra.mxu0 %v29
  %43 = vmatprep.subr.mxu0 0.0
  %44 = vmatpush1.msra.mxu0 %v30
  %45 = vmatprep.subr.mxu0 0.0
  %46 = vmatpush1.msra.mxu0 %v31
  %47 = vmatprep.subr.mxu0 0.0
  %48 = vmatpush1.msra.mxu0 0.0
  %49 = vmatprep.subr.mxu0 0.0
  %50 = vmatpush1.msra.mxu0 0.0
  %51 = vmatprep.subr.mxu0 0.0
  %52 = vmatpush1.msra.mxu0 0.0
  %53 = vmatprep.subr.mxu0 0.0
  %54 = vmatpush1.msra.mxu0 0.0
  %55 = vmatprep.subr.mxu0 0.0
  %56 = vmatpush1.msra.mxu0 0.0
  %57 = vmatprep.subr.mxu0 0.0
  %58 = vmatpush1.msra.mxu0 0.0
  %59 = vmatprep.subr.mxu0 0.0
  %60 = vmatpush1.msra.mxu0 0.0
  %61 = vmatprep.subr.mxu0 0.0
  %62 = vmatpush1.msra.mxu0 0.0
  %63 = vmatprep.subr.mxu0 0.0
  %64 = vmatpush1.msra.mxu0 0.0
  %65 = vmatprep.subr.mxu0 0.0
  %66 = vmatpush1.msra.mxu0 0.0
  %67 = vmatprep.subr.mxu0 0.0
  %68 = vmatpush1.msra.mxu0 0.0
  %69 = vmatprep.subr.mxu0 0.0
  %70 = vmatpush1.msra.mxu0 0.0
  %71 = vmatprep.subr.mxu0 0.0
  %72 = vmatpush1.msra.mxu0 0.0
  %73 = vmatprep.subr.mxu0 0.0
  %74 = vmatpush1.msra.mxu0 0.0
  %75 = vmatprep.subr.mxu0 0.0
  %76 = vmatpush1.msra.mxu0 0.0
  %77 = vmatprep.subr.mxu0 0.0
  %78 = vmatpush1.msra.mxu0 0.0
  %79 = vmatprep.subr.mxu0 0.0
  %80 = vmatpush1.msra.mxu0 0.0
  %81 = vmatprep.subr.mxu0 0.0
  %82 = vmatpush1.msra.mxu0 0.0
  %83 = vmatprep.subr.mxu0 0.0
  %84 = vmatpush1.msra.mxu0 0.0
  %85 = vmatprep.subr.mxu0 0.0
  %86 = vmatpush1.msra.mxu0 0.0
  %87 = vmatprep.subr.mxu0 0.0
  %88 = vmatpush1.msra.mxu0 0.0
  %89 = vmatprep.subr.mxu0 0.0
  %90 = vmatpush1.msra.mxu0 0.0
  %91 = vmatprep.subr.mxu0 0.0
  %92 = vmatpush1.msra.mxu0 0.0
  %93 = vmatprep.subr.mxu0 0.0
  %94 = vmatpush1.msra.mxu0 0.0
  %95 = vmatprep.subr.mxu0 0.0
  %96 = vmatpush1.msra.mxu0 0.0
  %97 = vmatprep.subr.mxu0 0.0
  %98 = vmatpush1.msra.mxu0 0.0
  %99 = vmatprep.subr.mxu0 0.0
  %100 = vmatpush1.msra.mxu0 0.0
  %101 = vmatprep.subr.mxu0 0.0
  %102 = vmatpush1.msra.mxu0 0.0
  %103 = vmatprep.mubr.f32.mxu0 0.0
  %104 = vmatmul.mubr.f32.gmra.mrb[0].mxu0 %v34
  %v105 = vpop.f32.mrb[0].mxu0
  %v106 = vadd.f32 0.0, %v105
  %v107 = vpop.f32.mrb[0].mxu0
  %108 = vmatprep.mubr.f32.mxu0 0.0
  %109 = vmatmul.mubr.f32.gmra.mrb[0].mxu0 %v37
  %v110 = vpop.f32.mrb[0].mxu0
  %v111 = vadd.f32 0.0, %v110
  %v112 = vpop.f32.mrb[0].mxu0
  %113 = vdwg.mxu0
  %v114 = vadd.f32 %v24, %v106
  %v115 = vadd.f32 %v25, %v111
  %116 = vst.msk [vmem:[#allocation2] sm:$0xff] %vm32, %v114
  %117 = vst.msk [vmem:[#allocation2 + $0x8] sm:$0xff] %vm32, %v115
  // Predicated region
  $region22: #{decoder_forward.20} parent=0 // pred_check
    %p118 = pneg %p17
  $region23: #{decoder_forward.20} parent=0 // pred_check_branch
    %120 = sbr.rel (%p118) target = $region25
  $region24: #{decoder_forward.20} parent=0 // pred_region
    %v121 = vld [vmem:[#allocation2] sm:$0xff]
    %v122 = vld [vmem:[#allocation2 + $0x8] sm:$0xff]
    %v123 = vld [vmem:[%s2] sm:$0x1]
    %v125 = vlaneseq
    %v126 = vshrl.u32 %v125, 7
    %v127 = vsub.s32 0, %v126
    %v128 = vrot.slane %v123, %v127
    %v130 = vadd.f32 %v121, %v128
    %v131 = vadd.f32 %v122, %v128
    %v132 = vld [vmem:[%s3] sm:$0xff]
    %v133 = vld [vmem:[%s3 + $0x8] sm:$0xff]
    %v134 = vadd.f32 %v130, %v132
    %v135 = vadd.f32 %v131, %v133
    %136 = vst.msk [vmem:[%s4] sm:$0xff] %vm32, %v134
    %137 = vst.msk [vmem:[%s4 + $0x8] sm:$0xff] %vm32, %v135
  $region25: #{decoder_forward.20} parent=0 // pred_fallthru
    _
  // Predicated region
  $region26: #{decoder_forward.20} parent=0 // pred_check
    _
  $region27: #{decoder_forward.20} parent=0 // pred_check_branch
    %139 = sbr.rel (0) target = $region29
  $region28: #{decoder_forward.20} parent=0 // pred_region
    _
  $region29: #{decoder_forward.20} parent=0 // pred_fallthru
    _
  // Predicated region
  $region30: #{decoder_forward.20} parent=0 // pred_check
    _
  $region31: #{decoder_forward.20} parent=0 // pred_check_branch
    %141 = sbr.rel (0) target = $region33
  $region32: #{decoder_forward.20} parent=0 // pred_region
    _
  $region33: #{decoder_forward.20} parent=0 // pred_fallthru
    _

// kernel: decoder_forward.21
$region0: #{decoder_forward.21}
  #allocation0 [shape = 'u32[]', space=smem, size = 0x4, offset = 0x4, fixed_abs, tag = 'smem constant byte address 0x4 - core index']
  #allocation1 [shape = 'u32[144,128]{1,0:T(1,128)}', space=vmem, size = 0x12000, scoped, tag = 'internal scratch']
  #allocation2 [shape = 'f32[16,32]{1,0:T(8,128)}', space=vmem, size = 0x2000, scoped, tag = 'scratch operand']
  %s0 = inlined_call_operand.vmem [shape: f32[16,32], index: 0, kind: input, shape index: {}]
  %s1 = inlined_call_operand.vmem [shape: f32[32,32], index: 1, kind: input, shape index: {}]
  %s2 = inlined_call_operand.vmem [shape: f32[1,32], index: 2, kind: input, shape index: {}]
  %s3 = inlined_call_operand.vmem [shape: f32[16,32], index: 3, kind: output, shape index: {}]
  %s4 = sld [smem:[#allocation0]]
  $region30: #{decoder_forward.21} parent=0
    _
  %s6 = ssub.s32 1, %s4
  %s7 = scalar_select 0, %s6, %s4
  // Predicated region
  $region2: #{decoder_forward.21} parent=0 // pred_check
    _
  $region3: #{decoder_forward.21} parent=0 // pred_check_branch
    %9 = sbr.rel (0) target = $region5
  $region4: #{decoder_forward.21} parent=0 // pred_region
    _
  $region5: #{decoder_forward.21} parent=0 // pred_fallthru
    _
  // Predicated region
  $region6: #{decoder_forward.21} parent=0 // pred_check
    _
  $region7: #{decoder_forward.21} parent=0 // pred_check_branch
    %11 = sbr.rel (0) target = $region9
  $region8: #{decoder_forward.21} parent=0 // pred_region
    _
  $region9: #{decoder_forward.21} parent=0 // pred_fallthru
    _
  // Predicated region
  $region10: #{decoder_forward.21} parent=0 // pred_check
    _
  $region11: #{decoder_forward.21} parent=0 // pred_check_branch
    %13 = sbr.rel (0) target = $region13
  $region12: #{decoder_forward.21} parent=0 // pred_region
    _
  $region13: #{decoder_forward.21} parent=0 // pred_fallthru
    _
  %p14 = scmp.eq.s32.totalorder 0, 0
  // Predicated region
  $region14: #{decoder_forward.21} parent=0 // pred_check
    %p15 = pneg %p14
  $region15: #{decoder_forward.21} parent=0 // pred_check_branch
    %17 = sbr.rel (%p15) target = $region17
  $region16: #{decoder_forward.21} parent=0 // pred_region
    %vm18 = vcmask 261120
    %19 = vst.msk [vmem:[#allocation2] sm:$0xff] %vm18, 0.0
    %20 = vst.msk [vmem:[#allocation2 + $0x8] sm:$0xff] %vm18, 0.0
  $region17: #{decoder_forward.21} parent=0 // pred_fallthru
    _
  %v21 = vld [vmem:[#allocation2] sm:$0xff]
  %v22 = vld [vmem:[#allocation2 + $0x8] sm:$0xff]
  %v23 = vld [vmem:[%s0] sm:$0xff]
  %v24 = vld [vmem:[%s0 + $0x8] sm:$0xff]
  %v25 = vld [vmem:[%s1] sm:$0xff]
  %v26 = vld [vmem:[%s1 + $0x8] sm:$0xff]
  %v27 = vld [vmem:[%s1 + $0x10] sm:$0xff]
  %v28 = vld [vmem:[%s1 + $0x18] sm:$0xff]
  %vm29 = vcmask 261120
  %v31 = vsel %vm29, %v23, 0
  %v34 = vsel %vm29, %v24, 0
  %36 = vmatprep.subr.mxu0 0.0
  %37 = vmatpush1.msra.mxu0 %v25
  %38 = vmatprep.subr.mxu0 0.0
  %39 = vmatpush1.msra.mxu0 %v26
  %40 = vmatprep.subr.mxu0 0.0
  %41 = vmatpush1.msra.mxu0 %v27
  %42 = vmatprep.subr.mxu0 0.0
  %43 = vmatpush1.msra.mxu0 %v28
  %44 = vmatprep.subr.mxu0 0.0
  %45 = vmatpush1.msra.mxu0 0.0
  %46 = vmatprep.subr.mxu0 0.0
  %47 = vmatpush1.msra.mxu0 0.0
  %48 = vmatprep.subr.mxu0 0.0
  %49 = vmatpush1.msra.mxu0 0.0
  %50 = vmatprep.subr.mxu0 0.0
  %51 = vmatpush1.msra.mxu0 0.0
  %52 = vmatprep.subr.mxu0 0.0
  %53 = vmatpush1.msra.mxu0 0.0
  %54 = vmatprep.subr.mxu0 0.0
  %55 = vmatpush1.msra.mxu0 0.0
  %56 = vmatprep.subr.mxu0 0.0
  %57 = vmatpush1.msra.mxu0 0.0
  %58 = vmatprep.subr.mxu0 0.0
  %59 = vmatpush1.msra.mxu0 0.0
  %60 = vmatprep.subr.mxu0 0.0
  %61 = vmatpush1.msra.mxu0 0.0
  %62 = vmatprep.subr.mxu0 0.0
  %63 = vmatpush1.msra.mxu0 0.0
  %64 = vmatprep.subr.mxu0 0.0
  %65 = vmatpush1.msra.mxu0 0.0
  %66 = vmatprep.subr.mxu0 0.0
  %67 = vmatpush1.msra.mxu0 0.0
  %68 = vmatprep.subr.mxu0 0.0
  %69 = vmatpush1.msra.mxu0 0.0
  %70 = vmatprep.subr.mxu0 0.0
  %71 = vmatpush1.msra.mxu0 0.0
  %72 = vmatprep.subr.mxu0 0.0
  %73 = vmatpush1.msra.mxu0 0.0
  %74 = vmatprep.subr.mxu0 0.0
  %75 = vmatpush1.msra.mxu0 0.0
  %76 = vmatprep.subr.mxu0 0.0
  %77 = vmatpush1.msra.mxu0 0.0
  %78 = vmatprep.subr.mxu0 0.0
  %79 = vmatpush1.msra.mxu0 0.0
  %80 = vmatprep.subr.mxu0 0.0
  %81 = vmatpush1.msra.mxu0 0.0
  %82 = vmatprep.subr.mxu0 0.0
  %83 = vmatpush1.msra.mxu0 0.0
  %84 = vmatprep.subr.mxu0 0.0
  %85 = vmatpush1.msra.mxu0 0.0
  %86 = vmatprep.subr.mxu0 0.0
  %87 = vmatpush1.msra.mxu0 0.0
  %88 = vmatprep.subr.mxu0 0.0
  %89 = vmatpush1.msra.mxu0 0.0
  %90 = vmatprep.subr.mxu0 0.0
  %91 = vmatpush1.msra.mxu0 0.0
  %92 = vmatprep.subr.mxu0 0.0
  %93 = vmatpush1.msra.mxu0 0.0
  %94 = vmatprep.subr.mxu0 0.0
  %95 = vmatpush1.msra.mxu0 0.0
  %96 = vmatprep.subr.mxu0 0.0
  %97 = vmatpush1.msra.mxu0 0.0
  %98 = vmatprep.subr.mxu0 0.0
  %99 = vmatpush1.msra.mxu0 0.0
  %100 = vmatprep.mubr.f32.mxu0 0.0
  %101 = vmatmul.mubr.f32.gmra.mrb[0].mxu0 %v31
  %v102 = vpop.f32.mrb[0].mxu0
  %v103 = vadd.f32 0.0, %v102
  %v104 = vpop.f32.mrb[0].mxu0
  %105 = vmatprep.mubr.f32.mxu0 0.0
  %106 = vmatmul.mubr.f32.gmra.mrb[0].mxu0 %v34
  %v107 = vpop.f32.mrb[0].mxu0
  %v108 = vadd.f32 0.0, %v107
  %v109 = vpop.f32.mrb[0].mxu0
  %110 = vdwg.mxu0
  %v111 = vadd.f32 %v21, %v103
  %v112 = vadd.f32 %v22, %v108
  %113 = vst.msk [vmem:[#allocation2] sm:$0xff] %vm29, %v111
  %114 = vst.msk [vmem:[#allocation2 + $0x8] sm:$0xff] %vm29, %v112
  // Predicated region
  $region18: #{decoder_forward.21} parent=0 // pred_check
    %p115 = pneg %p14
  $region19: #{decoder_forward.21} parent=0 // pred_check_branch
    %117 = sbr.rel (%p115) target = $region21
  $region20: #{decoder_forward.21} parent=0 // pred_region
    %v118 = vld [vmem:[#allocation2] sm:$0xff]
    %v119 = vld [vmem:[#allocation2 + $0x8] sm:$0xff]
    %v120 = vld [vmem:[%s2] sm:$0x1]
    %v122 = vlaneseq
    %v123 = vshrl.u32 %v122, 7
    %v124 = vsub.s32 0, %v123
    %v125 = vrot.slane %v120, %v124
    %v127 = vadd.f32 %v118, %v125
    %v128 = vadd.f32 %v119, %v125
    %129 = vst.msk [vmem:[%s3] sm:$0xff] %vm29, %v127
    %130 = vst.msk [vmem:[%s3 + $0x8] sm:$0xff] %vm29, %v128
  $region21: #{decoder_forward.21} parent=0 // pred_fallthru
    _
  // Predicated region
  $region22: #{decoder_forward.21} parent=0 // pred_check
    _
  $region23: #{decoder_forward.21} parent=0 // pred_check_branch
    %132 = sbr.rel (0) target = $region25
  $region24: #{decoder_forward.21} parent=0 // pred_region
    _
  $region25: #{decoder_forward.21} parent=0 // pred_fallthru
    _
  // Predicated region
  $region26: #{decoder_forward.21} parent=0 // pred_check
    _
  $region27: #{decoder_forward.21} parent=0 // pred_check_branch
    %134 = sbr.rel (0) target = $region29
  $region28: #{decoder_forward.21} parent=0 // pred_region
    _
  $region29: #{decoder_forward.21} parent=0 // pred_fallthru
    _

// kernel: decoder_forward.19
$region0: #{decoder_forward.19}
  #allocation0 [shape = 'u32[]', space=smem, size = 0x4, offset = 0x4, fixed_abs, tag = 'smem constant byte address 0x4 - core index']
  #allocation1 [shape = 'u32[144,128]{1,0:T(1,128)}', space=vmem, size = 0x12000, scoped, tag = 'internal scratch']
  %s0 = inlined_call_operand.vmem [shape: f32[2,8,96], index: 0, kind: input, shape index: {}]
  %s1 = inlined_call_operand.vmem [shape: f32[2,8,32], index: 1, kind: output, shape index: {}]
  %s2 = sld [smem:[#allocation0]]
  $region37: #{decoder_forward.19} parent=0
    _
  %s4 = ssub.s32 1, %s2
  %s5 = scalar_select 0, %s4, %s2
  loop: start=0, step=1, limit=4
  $region2: #{decoder_forward.19} parent=0 // loop_pre_header
    _
  $region3: #{decoder_forward.19} parent=0 // loop_header
    %s7 = sphi 0, %s11
    %p8 = scmp.ge.s32.totalorder %s7, 4
    %s17 = sphi 0, %s19
    %s20 = sphi 0, %s17
    %s21 = sphi 0, %s20
    %s37 = sphi 0, %s21
    %s43 = sphi 0, %s45
    %s46 = sphi 0, %s43
    %s47 = sphi 0, %s46
    %s63 = sphi 0, %s47
  $region4: #{decoder_forward.19} parent=0 // loop_header_branch
    %10 = sbr.rel (%p8) target = $region8
  $region5: #{decoder_forward.19} parent=0 // loop_body
    %s12 = ssub.s32 %s7, 1
    %s13 = ssub.s32 %s7, 2
    %s14 = sadd.s32 %s7, 1
    %s15 = ssub.s32 %s7, %s14
    %p16 = scmp.eq.s32.totalorder %s15, 0
    %s18 = sadd.s32 %s17, 1
    %s19 = scalar_select %p16, %s17, %s18
    %p22 = pneg %p16
    %p23 = scmp.eq.s32.totalorder %s7, 1
    %p24 = por %p22, %p23
    %p25 = scmp.ne.s32.totalorder %s17, %s20
    %p26 = scmp.eq.s32.totalorder %s7, 0
    %p27 = por %p25, %p26
    %p28 = scmp.ne.s32.totalorder %s17, %s20
    %p29 = scmp.eq.s32.totalorder %s12, 1
    %p30 = por %p28, %p29
    %p31 = scmp.ne.s32.totalorder %s20, %s21
    %p32 = scmp.eq.s32.totalorder %s12, 0
    %p33 = por %p31, %p32
    %p34 = scmp.ne.s32.totalorder %s20, %s21
    %p35 = scmp.eq.s32.totalorder %s13, 1
    %p36 = por %p34, %p35
    %p38 = scmp.ne.s32.totalorder %s21, %s37
    %p39 = scmp.eq.s32.totalorder %s13, 0
    %p40 = por %p38, %p39
    %s41 = ssub.s32 %s7, %s14
    %p42 = scmp.eq.s32.totalorder %s41, 0
    %s44 = sadd.s32 %s43, 1
    %s45 = scalar_select %p42, %s43, %s44
    %p48 = pneg %p42
    %p49 = scmp.eq.s32.totalorder %s7, 1
    %p50 = por %p48, %p49
    %p51 = scmp.ne.s32.totalorder %s43, %s46
    %p52 = scmp.eq.s32.totalorder %s7, 0
    %p53 = por %p51, %p52
    %p54 = scmp.ne.s32.totalorder %s43, %s46
    %p55 = scmp.eq.s32.totalorder %s12, 1
    %p56 = por %p54, %p55
    %p57 = scmp.ne.s32.totalorder %s46, %s47
    %p58 = scmp.eq.s32.totalorder %s12, 0
    %p59 = por %p57, %p58
    %p60 = scmp.ne.s32.totalorder %s46, %s47
    %p61 = scmp.eq.s32.totalorder %s13, 1
    %p62 = por %p60, %p61
    %p64 = scmp.ne.s32.totalorder %s47, %s63
    %p65 = scmp.eq.s32.totalorder %s13, 0
    %p66 = por %p64, %p65
    %p67 = scmp.le.s32.totalorder 1, %s7
    %p68 = scmp.lt.s32.totalorder %s7, 3
    %p69 = pnand %p67, %p68
    %p70 = pneg %p69
    // Predicated region
    $region9: #{decoder_forward.19} parent=5 // pred_check
      _
    $region10: #{decoder_forward.19} parent=5 // pred_check_branch
      %72 = sbr.rel (%p69) target = $region12
    $region11: #{decoder_forward.19} parent=5 // pred_region
      %s73 = ssub.s32 %s7, 1
    $region12: #{decoder_forward.19} parent=5 // pred_fallthru
      _
    %p74 = scmp.lt.s32.totalorder %s7, 2
    // Predicated region
    $region13: #{decoder_forward.19} parent=5 // pred_check
      %p75 = pneg %p74
    $region14: #{decoder_forward.19} parent=5 // pred_check_branch
      %77 = sbr.rel (%p75) target = $region16
    $region15: #{decoder_forward.19} parent=5 // pred_region
      // Predicated region
      $region17: #{decoder_forward.19} parent=15 // pred_check
        %p78 = pneg %p27
      $region18: #{decoder_forward.19} parent=15 // pred_check_branch
        %80 = sbr.rel (%p78) target = $region20
      $region19: #{decoder_forward.19} parent=15 // pred_region
        %p81 = scmp.lt.s32.totalorder %s7, 1
        %s82 = scalar_select %p81, %s7, 1
        %s83 = smul.addr %s82, 8
        %s84 = scalar_lea.vmem %s0, %s83
      $region20: #{decoder_forward.19} parent=15 // pred_fallthru
        _
    $region16: #{decoder_forward.19} parent=5 // pred_fallthru
      _
    %p85 = scmp.le.s32.totalorder 1, %s7
    %p86 = scmp.lt.s32.totalorder %s7, 3
    %p87 = pnand %p85, %p86
    %p88 = pneg %p87
    // Predicated region
    $region21: #{decoder_forward.19} parent=5 // pred_check
      _
    $region22: #{decoder_forward.19} parent=5 // pred_check_branch
      %90 = sbr.rel (%p87) target = $region24
    $region23: #{decoder_forward.19} parent=5 // pred_region
      %s91 = ssub.s32 %s7, 1
      %p92 = scmp.lt.s32.totalorder %s12, 1
      %s93 = scalar_select %p92, %s12, 1
      %s94 = smul.addr %s93, 8
      %s95 = scalar_lea.vmem %s0, %s94
      %p96 = pneg %p33
      %p97 = pneg %p30
      %p98 = pneg %p59
      %p99 = pneg %p56
      %p100 = scmp.lt.s32.totalorder %s12, 1
      %s101 = scalar_select %p100, %s12, 1
      %s102 = smul.addr %s101, 8
      %s103 = scalar_lea.vmem %s1, %s102
      %p104 = scmp.lt.s32.totalorder %s12, 1
      %s105 = scalar_select %p104, %s12, 1
      %s106 = smul.addr %s105, 8
      %s107 = scalar_lea.vmem %s0, %s106
      %p108 = scmp.lt.s32.totalorder %s12, 1
      %s109 = scalar_select %p108, %s12, 1
      %s110 = smul.addr %s109, 8
      %s111 = scalar_lea.vmem %s1, %s110
      %v112 = vld [vmem:[%s107] sm:$0xff]
      %v113 = vmul.f32 %v112, 0.35355338
      %115 = vrot.lane.b32.xlu0 %v112, 96
      %v116 = vpop.permute.xlu0 %115
      %vm117 = vcmask 64512
      %v119 = vsel %vm117, %v113, 0
      %v121 = vsel %vm117, %v116, 0
      %123 = vmatprep.subr.mxu0 0.0
      %124 = vmatpush1.xpose.msra.mxu0 %v121
      %125 = vmatprep.subr.mxu0 0.0
      %126 = vmatpush1.xpose.msra.mxu0 0.0
      %127 = vmatprep.subr.mxu0 0.0
      %128 = vmatpush1.xpose.msra.mxu0 0.0
      %129 = vmatprep.subr.mxu0 0.0
      %130 = vmatpush1.xpose.msra.mxu0 0.0
      %131 = vmatprep.subr.mxu0 0.0
      %132 = vmatpush1.xpose.msra.mxu0 0.0
      %133 = vmatprep.subr.mxu0 0.0
      %134 = vmatpush1.xpose.msra.mxu0 0.0
      %135 = vmatprep.subr.mxu0 0.0
      %136 = vmatpush1.xpose.msra.mxu0 0.0
      %137 = vmatprep.subr.mxu0 0.0
      %138 = vmatpush1.xpose.msra.mxu0 0.0
      %139 = vmatprep.subr.mxu0 0.0
      %140 = vmatpush1.xpose.msra.mxu0 0.0
      %141 = vmatprep.subr.mxu0 0.0
      %142 = vmatpush1.xpose.msra.mxu0 0.0
      %143 = vmatprep.subr.mxu0 0.0
      %144 = vmatpush1.xpose.msra.mxu0 0.0
      %145 = vmatprep.subr.mxu0 0.0
      %146 = vmatpush1.xpose.msra.mxu0 0.0
      %147 = vmatprep.subr.mxu0 0.0
      %148 = vmatpush1.xpose.msra.mxu0 0.0
      %149 = vmatprep.subr.mxu0 0.0
      %150 = vmatpush1.xpose.msra.mxu0 0.0
      %151 = vmatprep.subr.mxu0 0.0
      %152 = vmatpush1.xpose.msra.mxu0 0.0
      %153 = vmatprep.subr.mxu0 0.0
      %154 = vmatpush1.xpose.msra.mxu0 0.0
      %155 = vmatprep.subr.mxu0 0.0
      %156 = vmatpush1.xpose.msra.mxu0 0.0
      %157 = vmatprep.subr.mxu0 0.0
      %158 = vmatpush1.xpose.msra.mxu0 0.0
      %159 = vmatprep.subr.mxu0 0.0
      %160 = vmatpush1.xpose.msra.mxu0 0.0
      %161 = vmatprep.subr.mxu0 0.0
      %162 = vmatpush1.xpose.msra.mxu0 0.0
      %163 = vmatprep.subr.mxu0 0.0
      %164 = vmatpush1.xpose.msra.mxu0 0.0
      %165 = vmatprep.subr.mxu0 0.0
      %166 = vmatpush1.xpose.msra.mxu0 0.0
      %167 = vmatprep.subr.mxu0 0.0
      %168 = vmatpush1.xpose.msra.mxu0 0.0
      %169 = vmatprep.subr.mxu0 0.0
      %170 = vmatpush1.xpose.msra.mxu0 0.0
      %171 = vmatprep.subr.mxu0 0.0
      %172 = vmatpush1.xpose.msra.mxu0 0.0
      %173 = vmatprep.subr.mxu0 0.0
      %174 = vmatpush1.xpose.msra.mxu0 0.0
      %175 = vmatprep.subr.mxu0 0.0
      %176 = vmatpush1.xpose.msra.mxu0 0.0
      %177 = vmatprep.subr.mxu0 0.0
      %178 = vmatpush1.xpose.msra.mxu0 0.0
      %179 = vmatprep.subr.mxu0 0.0
      %180 = vmatpush1.xpose.msra.mxu0 0.0
      %181 = vmatprep.subr.mxu0 0.0
      %182 = vmatpush1.xpose.msra.mxu0 0.0
      %183 = vmatprep.subr.mxu0 0.0
      %184 = vmatpush1.xpose.msra.mxu0 0.0
      %185 = vmatprep.subr.mxu0 0.0
      %186 = vmatpush1.xpose.msra.mxu0 0.0
      %187 = vmatprep.mubr.f32.mxu0 0.0
      %188 = vmatmul.mubr.f32.gmra.mrb[0].mxu0 %v119
      %v189 = vpop.f32.mrb[0].mxu0
      %v190 = vadd.f32 0.0, %v189
      %v191 = vpop.f32.mrb[0].mxu0
      %192 = vdwg.mxu0
      %v193 = vsel %vm117, %v190, -inf
      %194 = vmax.xlane.f32.xlu0 %v193
      %v195 = vpop.xlane.xlu0 %194
      %v196 = vsub.f32 %v190, %v195
      %v197 = vmul.f32 %v196, 1.442695
      %v198 = vpow.pop %v197
      %v199 = vsel %vm117, %v198, 0.0
      %200 = vadd.xlane.f32.xlu0 %v199
      %v201 = vpop.xlane.xlu0 %200
      %v202 = vrcp.pop %v201
      %v203 = vmul.f32 %v198, %v202
      %204 = vrot.lane.b32.xlu0 %v112, 64
      %v205 = vpop.permute.xlu0 %204
      %v208 = vsel %vm117, %v203, 0
      %210 = vmatprep.subr.mxu0 0.0
      %211 = vmatpush1.msra.mxu0 %v205
      %212 = vmatprep.subr.mxu0 0.0
      %213 = vmatpush1.msra.mxu0 0.0
      %214 = vmatprep.subr.mxu0 0.0
      %215 = vmatpush1.msra.mxu0 0.0
      %216 = vmatprep.subr.mxu0 0.0
      %217 = vmatpush1.msra.mxu0 0.0
      %218 = vmatprep.subr.mxu0 0.0
      %219 = vmatpush1.msra.mxu0 0.0
      %220 = vmatprep.subr.mxu0 0.0
      %221 = vmatpush1.msra.mxu0 0.0
      %222 = vmatprep.subr.mxu0 0.0
      %223 = vmatpush1.msra.mxu0 0.0
      %224 = vmatprep.subr.mxu0 0.0
      %225 = vmatpush1.msra.mxu0 0.0
      %226 = vmatprep.subr.mxu0 0.0
      %227 = vmatpush1.msra.mxu0 0.0
      %228 = vmatprep.subr.mxu0 0.0
      %229 = vmatpush1.msra.mxu0 0.0
      %230 = vmatprep.subr.mxu0 0.0
      %231 = vmatpush1.msra.mxu0 0.0
      %232 = vmatprep.subr.mxu0 0.0
      %233 = vmatpush1.msra.mxu0 0.0
      %234 = vmatprep.subr.mxu0 0.0
      %235 = vmatpush1.msra.mxu0 0.0
      %236 = vmatprep.subr.mxu0 0.0
      %237 = vmatpush1.msra.mxu0 0.0
      %238 = vmatprep.subr.mxu0 0.0
      %239 = vmatpush1.msra.mxu0 0.0
      %240 = vmatprep.subr.mxu0 0.0
      %241 = vmatpush1.msra.mxu0 0.0
      %242 = vmatprep.subr.mxu0 0.0
      %243 = vmatpush1.msra.mxu0 0.0
      %244 = vmatprep.subr.mxu0 0.0
      %245 = vmatpush1.msra.mxu0 0.0
      %246 = vmatprep.subr.mxu0 0.0
      %247 = vmatpush1.msra.mxu0 0.0
      %248 = vmatprep.subr.mxu0 0.0
      %249 = vmatpush1.msra.mxu0 0.0
      %250 = vmatprep.subr.mxu0 0.0
      %251 = vmatpush1.msra.mxu0 0.0
      %252 = vmatprep.subr.mxu0 0.0
      %253 = vmatpush1.msra.mxu0 0.0
      %254 = vmatprep.subr.mxu0 0.0
      %255 = vmatpush1.msra.mxu0 0.0
      %256 = vmatprep.subr.mxu0 0.0
      %257 = vmatpush1.msra.mxu0 0.0
      %258 = vmatprep.subr.mxu0 0.0
      %259 = vmatpush1.msra.mxu0 0.0
      %260 = vmatprep.subr.mxu0 0.0
      %261 = vmatpush1.msra.mxu0 0.0
      %262 = vmatprep.subr.mxu0 0.0
      %263 = vmatpush1.msra.mxu0 0.0
      %264 = vmatprep.subr.mxu0 0.0
      %265 = vmatpush1.msra.mxu0 0.0
      %266 = vmatprep.subr.mxu0 0.0
      %267 = vmatpush1.msra.mxu0 0.0
      %268 = vmatprep.subr.mxu0 0.0
      %269 = vmatpush1.msra.mxu0 0.0
      %270 = vmatprep.subr.mxu0 0.0
      %271 = vmatpush1.msra.mxu0 0.0
      %272 = vmatprep.subr.mxu0 0.0
      %273 = vmatpush1.msra.mxu0 0.0
      %274 = vmatprep.mubr.f32.mxu0 0.0
      %275 = vmatmul.mubr.f32.gmra.mrb[0].mxu0 %v208
      %v276 = vpop.f32.mrb[0].mxu0
      %v277 = vadd.f32 0.0, %v276
      %v278 = vpop.f32.mrb[0].mxu0
      %279 = vdwg.mxu0
      %280 = vrot.lane.b32.xlu0 %v113, 120
      %v281 = vpop.permute.xlu0 %280
      %282 = vrot.lane.b32.xlu0 %v112, 88
      %v283 = vpop.permute.xlu0 %282
      %v284 = vsel %vm117, %v281, 0
      %v286 = vsel %vm117, %v283, 0
      %288 = vmatprep.subr.mxu0 0.0
      %289 = vmatpush1.xpose.msra.mxu0 %v286
      %290 = vmatprep.subr.mxu0 0.0
      %291 = vmatpush1.xpose.msra.mxu0 0.0
      %292 = vmatprep.subr.mxu0 0.0
      %293 = vmatpush1.xpose.msra.mxu0 0.0
      %294 = vmatprep.subr.mxu0 0.0
      %295 = vmatpush1.xpose.msra.mxu0 0.0
      %296 = vmatprep.subr.mxu0 0.0
      %297 = vmatpush1.xpose.msra.mxu0 0.0
      %298 = vmatprep.subr.mxu0 0.0
      %299 = vmatpush1.xpose.msra.mxu0 0.0
      %300 = vmatprep.subr.mxu0 0.0
      %301 = vmatpush1.xpose.msra.mxu0 0.0
      %302 = vmatprep.subr.mxu0 0.0
      %303 = vmatpush1.xpose.msra.mxu0 0.0
      %304 = vmatprep.subr.mxu0 0.0
      %305 = vmatpush1.xpose.msra.mxu0 0.0
      %306 = vmatprep.subr.mxu0 0.0
      %307 = vmatpush1.xpose.msra.mxu0 0.0
      %308 = vmatprep.subr.mxu0 0.0
      %309 = vmatpush1.xpose.msra.mxu0 0.0
      %310 = vmatprep.subr.mxu0 0.0
      %311 = vmatpush1.xpose.msra.mxu0 0.0
      %312 = vmatprep.subr.mxu0 0.0
      %313 = vmatpush1.xpose.msra.mxu0 0.0
      %314 = vmatprep.subr.mxu0 0.0
      %315 = vmatpush1.xpose.msra.mxu0 0.0
      %316 = vmatprep.subr.mxu0 0.0
      %317 = vmatpush1.xpose.msra.mxu0 0.0
      %318 = vmatprep.subr.mxu0 0.0
      %319 = vmatpush1.xpose.msra.mxu0 0.0
      %320 = vmatprep.subr.mxu0 0.0
      %321 = vmatpush1.xpose.msra.mxu0 0.0
      %322 = vmatprep.subr.mxu0 0.0
      %323 = vmatpush1.xpose.msra.mxu0 0.0
      %324 = vmatprep.subr.mxu0 0.0
      %325 = vmatpush1.xpose.msra.mxu0 0.0
      %326 = vmatprep.subr.mxu0 0.0
      %327 = vmatpush1.xpose.msra.mxu0 0.0
      %328 = vmatprep.subr.mxu0 0.0
      %329 = vmatpush1.xpose.msra.mxu0 0.0
      %330 = vmatprep.subr.mxu0 0.0
      %331 = vmatpush1.xpose.msra.mxu0 0.0
      %332 = vmatprep.subr.mxu0 0.0
      %333 = vmatpush1.xpose.msra.mxu0 0.0
      %334 = vmatprep.subr.mxu0 0.0
      %335 = vmatpush1.xpose.msra.mxu0 0.0
      %336 = vmatprep.subr.mxu0 0.0
      %337 = vmatpush1.xpose.msra.mxu0 0.0
      %338 = vmatprep.subr.mxu0 0.0
      %339 = vmatpush1.xpose.msra.mxu0 0.0
      %340 = vmatprep.subr.mxu0 0.0
      %341 = vmatpush1.xpose.msra.mxu0 0.0
      %342 = vmatprep.subr.mxu0 0.0
      %343 = vmatpush1.xpose.msra.mxu0 0.0
      %344 = vmatprep.subr.mxu0 0.0
      %345 = vmatpush1.xpose.msra.mxu0 0.0
      %346 = vmatprep.subr.mxu0 0.0
      %347 = vmatpush1.xpose.msra.mxu0 0.0
      %348 = vmatprep.subr.mxu0 0.0
      %349 = vmatpush1.xpose.msra.mxu0 0.0
      %350 = vmatprep.subr.mxu0 0.0
      %351 = vmatpush1.xpose.msra.mxu0 0.0
      %352 = vmatprep.mubr.f32.mxu0 0.0
      %353 = vmatmul.mubr.f32.gmra.mrb[0].mxu0 %v284
      %v354 = vpop.f32.mrb[0].mxu0
      %v355 = vadd.f32 0.0, %v354
      %v356 = vpop.f32.mrb[0].mxu0
      %357 = vdwg.mxu0
      %v358 = vsel %vm117, %v355, -inf
      %359 = vmax.xlane.f32.xlu0 %v358
      %v360 = vpop.xlane.xlu0 %359
      %v361 = vsub.f32 %v355, %v360
      %v362 = vmul.f32 %v361, 1.442695
      %v363 = vpow.pop %v362
      %v364 = vsel %vm117, %v363, 0.0
      %365 = vadd.xlane.f32.xlu0 %v364
      %v366 = vpop.xlane.xlu0 %365
      %v367 = vrcp.pop %v366
      %v368 = vmul.f32 %v363, %v367
      %369 = vrot.lane.b32.xlu0 %v112, 56
      %v370 = vpop.permute.xlu0 %369
      %v373 = vsel %vm117, %v368, 0
      %375 = vmatprep.subr.mxu0 0.0
      %376 = vmatpush1.msra.mxu0 %v370
      %377 = vmatprep.subr.mxu0 0.0
      %378 = vmatpush1.msra.mxu0 0.0
      %379 = vmatprep.subr.mxu0 0.0
      %380 = vmatpush1.msra.mxu0 0.0
      %381 = vmatprep.subr.mxu0 0.0
      %382 = vmatpush1.msra.mxu0 0.0
      %383 = vmatprep.subr.mxu0 0.0
      %384 = vmatpush1.msra.mxu0 0.0
      %385 = vmatprep.subr.mxu0 0.0
      %386 = vmatpush1.msra.mxu0 0.0
      %387 = vmatprep.subr.mxu0 0.0
      %388 = vmatpush1.msra.mxu0 0.0
      %389 = vmatprep.subr.mxu0 0.0
      %390 = vmatpush1.msra.mxu0 0.0
      %391 = vmatprep.subr.mxu0 0.0
      %392 = vmatpush1.msra.mxu0 0.0
      %393 = vmatprep.subr.mxu0 0.0
      %394 = vmatpush1.msra.mxu0 0.0
      %395 = vmatprep.subr.mxu0 0.0
      %396 = vmatpush1.msra.mxu0 0.0
      %397 = vmatprep.subr.mxu0 0.0
      %398 = vmatpush1.msra.mxu0 0.0
      %399 = vmatprep.subr.mxu0 0.0
      %400 = vmatpush1.msra.mxu0 0.0
      %401 = vmatprep.subr.mxu0 0.0
      %402 = vmatpush1.msra.mxu0 0.0
      %403 = vmatprep.subr.mxu0 0.0
      %404 = vmatpush1.msra.mxu0 0.0
      %405 = vmatprep.subr.mxu0 0.0
      %406 = vmatpush1.msra.mxu0 0.0
      %407 = vmatprep.subr.mxu0 0.0
      %408 = vmatpush1.msra.mxu0 0.0
      %409 = vmatprep.subr.mxu0 0.0
      %410 = vmatpush1.msra.mxu0 0.0
      %411 = vmatprep.subr.mxu0 0.0
      %412 = vmatpush1.msra.mxu0 0.0
      %413 = vmatprep.subr.mxu0 0.0
      %414 = vmatpush1.msra.mxu0 0.0
      %415 = vmatprep.subr.mxu0 0.0
      %416 = vmatpush1.msra.mxu0 0.0
      %417 = vmatprep.subr.mxu0 0.0
      %418 = vmatpush1.msra.mxu0 0.0
      %419 = vmatprep.subr.mxu0 0.0
      %420 = vmatpush1.msra.mxu0 0.0
      %421 = vmatprep.subr.mxu0 0.0
      %422 = vmatpush1.msra.mxu0 0.0
      %423 = vmatprep.subr.mxu0 0.0
      %424 = vmatpush1.msra.mxu0 0.0
      %425 = vmatprep.subr.mxu0 0.0
      %426 = vmatpush1.msra.mxu0 0.0
      %427 = vmatprep.subr.mxu0 0.0
      %428 = vmatpush1.msra.mxu0 0.0
      %429 = vmatprep.subr.mxu0 0.0
      %430 = vmatpush1.msra.mxu0 0.0
      %431 = vmatprep.subr.mxu0 0.0
      %432 = vmatpush1.msra.mxu0 0.0
      %433 = vmatprep.subr.mxu0 0.0
      %434 = vmatpush1.msra.mxu0 0.0
      %435 = vmatprep.subr.mxu0 0.0
      %436 = vmatpush1.msra.mxu0 0.0
      %437 = vmatprep.subr.mxu0 0.0
      %438 = vmatpush1.msra.mxu0 0.0
      %439 = vmatprep.mubr.f32.mxu0 0.0
      %440 = vmatmul.mubr.f32.gmra.mrb[0].mxu0 %v373
      %v441 = vpop.f32.mrb[0].mxu0
      %v442 = vadd.f32 0.0, %v441
      %v443 = vpop.f32.mrb[0].mxu0
      %444 = vdwg.mxu0
      %445 = vrot.lane.b32.xlu0 %v113, 112
      %v446 = vpop.permute.xlu0 %445
      %447 = vrot.lane.b32.xlu0 %v112, 80
      %v448 = vpop.permute.xlu0 %447
      %v449 = vsel %vm117, %v446, 0
      %v451 = vsel %vm117, %v448, 0
      %453 = vmatprep.subr.mxu0 0.0
      %454 = vmatpush1.xpose.msra.mxu0 %v451
      %455 = vmatprep.subr.mxu0 0.0
      %456 = vmatpush1.xpose.msra.mxu0 0.0
      %457 = vmatprep.subr.mxu0 0.0
      %458 = vmatpush1.xpose.msra.mxu0 0.0
      %459 = vmatprep.subr.mxu0 0.0
      %460 = vmatpush1.xpose.msra.mxu0 0.0
      %461 = vmatprep.subr.mxu0 0.0
      %462 = vmatpush1.xpose.msra.mxu0 0.0
      %463 = vmatprep.subr.mxu0 0.0
      %464 = vmatpush1.xpose.msra.mxu0 0.0
      %465 = vmatprep.subr.mxu0 0.0
      %466 = vmatpush1.xpose.msra.mxu0 0.0
      %467 = vmatprep.subr.mxu0 0.0
      %468 = vmatpush1.xpose.msra.mxu0 0.0
      %469 = vmatprep.subr.mxu0 0.0
      %470 = vmatpush1.xpose.msra.mxu0 0.0
      %471 = vmatprep.subr.mxu0 0.0
      %472 = vmatpush1.xpose.msra.mxu0 0.0
      %473 = vmatprep.subr.mxu0 0.0
      %474 = vmatpush1.xpose.msra.mxu0 0.0
      %475 = vmatprep.subr.mxu0 0.0
      %476 = vmatpush1.xpose.msra.mxu0 0.0
      %477 = vmatprep.subr.mxu0 0.0
      %478 = vmatpush1.xpose.msra.mxu0 0.0
      %479 = vmatprep.subr.mxu0 0.0
      %480 = vmatpush1.xpose.msra.mxu0 0.0
      %481 = vmatprep.subr.mxu0 0.0
      %482 = vmatpush1.xpose.msra.mxu0 0.0
      %483 = vmatprep.subr.mxu0 0.0
      %484 = vmatpush1.xpose.msra.mxu0 0.0
      %485 = vmatprep.subr.mxu0 0.0
      %486 = vmatpush1.xpose.msra.mxu0 0.0
      %487 = vmatprep.subr.mxu0 0.0
      %488 = vmatpush1.xpose.msra.mxu0 0.0
      %489 = vmatprep.subr.mxu0 0.0
      %490 = vmatpush1.xpose.msra.mxu0 0.0
      %491 = vmatprep.subr.mxu0 0.0
      %492 = vmatpush1.xpose.msra.mxu0 0.0
      %493 = vmatprep.subr.mxu0 0.0
      %494 = vmatpush1.xpose.msra.mxu0 0.0
      %495 = vmatprep.subr.mxu0 0.0
      %496 = vmatpush1.xpose.msra.mxu0 0.0
      %497 = vmatprep.subr.mxu0 0.0
      %498 = vmatpush1.xpose.msra.mxu0 0.0
      %499 = vmatprep.subr.mxu0 0.0
      %500 = vmatpush1.xpose.msra.mxu0 0.0
      %501 = vmatprep.subr.mxu0 0.0
      %502 = vmatpush1.xpose.msra.mxu0 0.0
      %503 = vmatprep.subr.mxu0 0.0
      %504 = vmatpush1.xpose.msra.mxu0 0.0
      %505 = vmatprep.subr.mxu0 0.0
      %506 = vmatpush1.xpose.msra.mxu0 0.0
      %507 = vmatprep.subr.mxu0 0.0
      %508 = vmatpush1.xpose.msra.mxu0 0.0
      %509 = vmatprep.subr.mxu0 0.0
      %510 = vmatpush1.xpose.msra.mxu0 0.0
      %511 = vmatprep.subr.mxu0 0.0
      %512 = vmatpush1.xpose.msra.mxu0 0.0
      %513 = vmatprep.subr.mxu0 0.0
      %514 = vmatpush1.xpose.msra.mxu0 0.0
      %515 = vmatprep.subr.mxu0 0.0
      %516 = vmatpush1.xpose.msra.mxu0 0.0
      %517 = vmatprep.mubr.f32.mxu0 0.0
      %518 = vmatmul.mubr.f32.gmra.mrb[0].mxu0 %v449
      %v519 = vpop.f32.mrb[0].mxu0
      %v520 = vadd.f32 0.0, %v519
      %v521 = vpop.f32.mrb[0].mxu0
      %522 = vdwg.mxu0
      %v523 = vsel %vm117, %v520, -inf
      %524 = vmax.xlane.f32.xlu0 %v523
      %v525 = vpop.xlane.xlu0 %524
      %v526 = vsub.f32 %v520, %v525
      %v527 = vmul.f32 %v526, 1.442695
      %v528 = vpow.pop %v527
      %v529 = vsel %vm117, %v528, 0.0
      %530 = vadd.xlane.f32.xlu0 %v529
      %v531 = vpop.xlane.xlu0 %530
      %v532 = vrcp.pop %v531
      %v533 = vmul.f32 %v528, %v532
      %534 = vrot.lane.b32.xlu0 %v112, 48
      %v535 = vpop.permute.xlu0 %534
      %v538 = vsel %vm117, %v533, 0
      %540 = vmatprep.subr.mxu0 0.0
      %541 = vmatpush1.msra.mxu0 %v535
      %542 = vmatprep.subr.mxu0 0.0
      %543 = vmatpush1.msra.mxu0 0.0
      %544 = vmatprep.subr.mxu0 0.0
      %545 = vmatpush1.msra.mxu0 0.0
      %546 = vmatprep.subr.mxu0 0.0
      %547 = vmatpush1.msra.mxu0 0.0
      %548 = vmatprep.subr.mxu0 0.0
      %549 = vmatpush1.msra.mxu0 0.0
      %550 = vmatprep.subr.mxu0 0.0
      %551 = vmatpush1.msra.mxu0 0.0
      %552 = vmatprep.subr.mxu0 0.0
      %553 = vmatpush1.msra.mxu0 0.0
      %554 = vmatprep.subr.mxu0 0.0
      %555 = vmatpush1.msra.mxu0 0.0
      %556 = vmatprep.subr.mxu0 0.0
      %557 = vmatpush1.msra.mxu0 0.0
      %558 = vmatprep.subr.mxu0 0.0
      %559 = vmatpush1.msra.mxu0 0.0
      %560 = vmatprep.subr.mxu0 0.0
      %561 = vmatpush1.msra.mxu0 0.0
      %562 = vmatprep.subr.mxu0 0.0
      %563 = vmatpush1.msra.mxu0 0.0
      %564 = vmatprep.subr.mxu0 0.0
      %565 = vmatpush1.msra.mxu0 0.0
      %566 = vmatprep.subr.mxu0 0.0
      %567 = vmatpush1.msra.mxu0 0.0
      %568 = vmatprep.subr.mxu0 0.0
      %569 = vmatpush1.msra.mxu0 0.0
      %570 = vmatprep.subr.mxu0 0.0
      %571 = vmatpush1.msra.mxu0 0.0
      %572 = vmatprep.subr.mxu0 0.0
      %573 = vmatpush1.msra.mxu0 0.0
      %574 = vmatprep.subr.mxu0 0.0
      %575 = vmatpush1.msra.mxu0 0.0
      %576 = vmatprep.subr.mxu0 0.0
      %577 = vmatpush1.msra.mxu0 0.0
      %578 = vmatprep.subr.mxu0 0.0
      %579 = vmatpush1.msra.mxu0 0.0
      %580 = vmatprep.subr.mxu0 0.0
      %581 = vmatpush1.msra.mxu0 0.0
      %582 = vmatprep.subr.mxu0 0.0
      %583 = vmatpush1.msra.mxu0 0.0
      %584 = vmatprep.subr.mxu0 0.0
      %585 = vmatpush1.msra.mxu0 0.0
      %586 = vmatprep.subr.mxu0 0.0
      %587 = vmatpush1.msra.mxu0 0.0
      %588 = vmatprep.subr.mxu0 0.0
      %589 = vmatpush1.msra.mxu0 0.0
      %590 = vmatprep.subr.mxu0 0.0
      %591 = vmatpush1.msra.mxu0 0.0
      %592 = vmatprep.subr.mxu0 0.0
      %593 = vmatpush1.msra.mxu0 0.0
      %594 = vmatprep.subr.mxu0 0.0
      %595 = vmatpush1.msra.mxu0 0.0
      %596 = vmatprep.subr.mxu0 0.0
      %597 = vmatpush1.msra.mxu0 0.0
      %598 = vmatprep.subr.mxu0 0.0
      %599 = vmatpush1.msra.mxu0 0.0
      %600 = vmatprep.subr.mxu0 0.0
      %601 = vmatpush1.msra.mxu0 0.0
      %602 = vmatprep.subr.mxu0 0.0
      %603 = vmatpush1.msra.mxu0 0.0
      %604 = vmatprep.mubr.f32.mxu0 0.0
      %605 = vmatmul.mubr.f32.gmra.mrb[0].mxu0 %v538
      %v606 = vpop.f32.mrb[0].mxu0
      %v607 = vadd.f32 0.0, %v606
      %v608 = vpop.f32.mrb[0].mxu0
      %609 = vdwg.mxu0
      %610 = vrot.lane.b32.xlu0 %v113, 104
      %v611 = vpop.permute.xlu0 %610
      %612 = vrot.lane.b32.xlu0 %v112, 72
      %v613 = vpop.permute.xlu0 %612
      %v614 = vsel %vm117, %v611, 0
      %v616 = vsel %vm117, %v613, 0
      %618 = vmatprep.subr.mxu0 0.0
      %619 = vmatpush1.xpose.msra.mxu0 %v616
      %620 = vmatprep.subr.mxu0 0.0
      %621 = vmatpush1.xpose.msra.mxu0 0.0
      %622 = vmatprep.subr.mxu0 0.0
      %623 = vmatpush1.xpose.msra.mxu0 0.0
      %624 = vmatprep.subr.mxu0 0.0
      %625 = vmatpush1.xpose.msra.mxu0 0.0
      %626 = vmatprep.subr.mxu0 0.0
      %627 = vmatpush1.xpose.msra.mxu0 0.0
      %628 = vmatprep.subr.mxu0 0.0
      %629 = vmatpush1.xpose.msra.mxu0 0.0
      %630 = vmatprep.subr.mxu0 0.0
      %631 = vmatpush1.xpose.msra.mxu0 0.0
      %632 = vmatprep.subr.mxu0 0.0
      %633 = vmatpush1.xpose.msra.mxu0 0.0
      %634 = vmatprep.subr.mxu0 0.0
      %635 = vmatpush1.xpose.msra.mxu0 0.0
      %636 = vmatprep.subr.mxu0 0.0
      %637 = vmatpush1.xpose.msra.mxu0 0.0
      %638 = vmatprep.subr.mxu0 0.0
      %639 = vmatpush1.xpose.msra.mxu0 0.0
      %640 = vmatprep.subr.mxu0 0.0
      %641 = vmatpush1.xpose.msra.mxu0 0.0
      %642 = vmatprep.subr.mxu0 0.0
      %643 = vmatpush1.xpose.msra.mxu0 0.0
      %644 = vmatprep.subr.mxu0 0.0
      %645 = vmatpush1.xpose.msra.mxu0 0.0
      %646 = vmatprep.subr.mxu0 0.0
      %647 = vmatpush1.xpose.msra.mxu0 0.0
      %648 = vmatprep.subr.mxu0 0.0
      %649 = vmatpush1.xpose.msra.mxu0 0.0
      %650 = vmatprep.subr.mxu0 0.0
      %651 = vmatpush1.xpose.msra.mxu0 0.0
      %652 = vmatprep.subr.mxu0 0.0
      %653 = vmatpush1.xpose.msra.mxu0 0.0
      %654 = vmatprep.subr.mxu0 0.0
      %655 = vmatpush1.xpose.msra.mxu0 0.0
      %656 = vmatprep.subr.mxu0 0.0
      %657 = vmatpush1.xpose.msra.mxu0 0.0
      %658 = vmatprep.subr.mxu0 0.0
      %659 = vmatpush1.xpose.msra.mxu0 0.0
      %660 = vmatprep.subr.mxu0 0.0
      %661 = vmatpush1.xpose.msra.mxu0 0.0
      %662 = vmatprep.subr.mxu0 0.0
      %663 = vmatpush1.xpose.msra.mxu0 0.0
      %664 = vmatprep.subr.mxu0 0.0
      %665 = vmatpush1.xpose.msra.mxu0 0.0
      %666 = vmatprep.subr.mxu0 0.0
      %667 = vmatpush1.xpose.msra.mxu0 0.0
      %668 = vmatprep.subr.mxu0 0.0
      %669 = vmatpush1.xpose.msra.mxu0 0.0
      %670 = vmatprep.subr.mxu0 0.0
      %671 = vmatpush1.xpose.msra.mxu0 0.0
      %672 = vmatprep.subr.mxu0 0.0
      %673 = vmatpush1.xpose.msra.mxu0 0.0
      %674 = vmatprep.subr.mxu0 0.0
      %675 = vmatpush1.xpose.msra.mxu0 0.0
      %676 = vmatprep.subr.mxu0 0.0
      %677 = vmatpush1.xpose.msra.mxu0 0.0
      %678 = vmatprep.subr.mxu0 0.0
      %679 = vmatpush1.xpose.msra.mxu0 0.0
      %680 = vmatprep.subr.mxu0 0.0
      %681 = vmatpush1.xpose.msra.mxu0 0.0
      %682 = vmatprep.mubr.f32.mxu0 0.0
      %683 = vmatmul.mubr.f32.gmra.mrb[0].mxu0 %v614
      %v684 = vpop.f32.mrb[0].mxu0
      %v685 = vadd.f32 0.0, %v684
      %v686 = vpop.f32.mrb[0].mxu0
      %687 = vdwg.mxu0
      %v688 = vsel %vm117, %v685, -inf
      %689 = vmax.xlane.f32.xlu0 %v688
      %v690 = vpop.xlane.xlu0 %689
      %v691 = vsub.f32 %v685, %v690
      %v692 = vmul.f32 %v691, 1.442695
      %v693 = vpow.pop %v692
      %v694 = vsel %vm117, %v693, 0.0
      %695 = vadd.xlane.f32.xlu0 %v694
      %v696 = vpop.xlane.xlu0 %695
      %v697 = vrcp.pop %v696
      %v698 = vmul.f32 %v693, %v697
      %699 = vrot.lane.b32.xlu0 %v112, 40
      %v700 = vpop.permute.xlu0 %699
      %v703 = vsel %vm117, %v698, 0
      %705 = vmatprep.subr.mxu0 0.0
      %706 = vmatpush1.msra.mxu0 %v700
      %707 = vmatprep.subr.mxu0 0.0
      %708 = vmatpush1.msra.mxu0 0.0
      %709 = vmatprep.subr.mxu0 0.0
      %710 = vmatpush1.msra.mxu0 0.0
      %711 = vmatprep.subr.mxu0 0.0
      %712 = vmatpush1.msra.mxu0 0.0
      %713 = vmatprep.subr.mxu0 0.0
      %714 = vmatpush1.msra.mxu0 0.0
      %715 = vmatprep.subr.mxu0 0.0
      %716 = vmatpush1.msra.mxu0 0.0
      %717 = vmatprep.subr.mxu0 0.0
      %718 = vmatpush1.msra.mxu0 0.0
      %719 = vmatprep.subr.mxu0 0.0
      %720 = vmatpush1.msra.mxu0 0.0
      %721 = vmatprep.subr.mxu0 0.0
      %722 = vmatpush1.msra.mxu0 0.0
      %723 = vmatprep.subr.mxu0 0.0
      %724 = vmatpush1.msra.mxu0 0.0
      %725 = vmatprep.subr.mxu0 0.0
      %726 = vmatpush1.msra.mxu0 0.0
      %727 = vmatprep.subr.mxu0 0.0
      %728 = vmatpush1.msra.mxu0 0.0
      %729 = vmatprep.subr.mxu0 0.0
      %730 = vmatpush1.msra.mxu0 0.0
      %731 = vmatprep.subr.mxu0 0.0
      %732 = vmatpush1.msra.mxu0 0.0
      %733 = vmatprep.subr.mxu0 0.0
      %734 = vmatpush1.msra.mxu0 0.0
      %735 = vmatprep.subr.mxu0 0.0
      %736 = vmatpush1.msra.mxu0 0.0
      %737 = vmatprep.subr.mxu0 0.0
      %738 = vmatpush1.msra.mxu0 0.0
      %739 = vmatprep.subr.mxu0 0.0
      %740 = vmatpush1.msra.mxu0 0.0
      %741 = vmatprep.subr.mxu0 0.0
      %742 = vmatpush1.msra.mxu0 0.0
      %743 = vmatprep.subr.mxu0 0.0
      %744 = vmatpush1.msra.mxu0 0.0
      %745 = vmatprep.subr.mxu0 0.0
      %746 = vmatpush1.msra.mxu0 0.0
      %747 = vmatprep.subr.mxu0 0.0
      %748 = vmatpush1.msra.mxu0 0.0
      %749 = vmatprep.subr.mxu0 0.0
      %750 = vmatpush1.msra.mxu0 0.0
      %751 = vmatprep.subr.mxu0 0.0
      %752 = vmatpush1.msra.mxu0 0.0
      %753 = vmatprep.subr.mxu0 0.0
      %754 = vmatpush1.msra.mxu0 0.0
      %755 = vmatprep.subr.mxu0 0.0
      %756 = vmatpush1.msra.mxu0 0.0
      %757 = vmatprep.subr.mxu0 0.0
      %758 = vmatpush1.msra.mxu0 0.0
      %759 = vmatprep.subr.mxu0 0.0
      %760 = vmatpush1.msra.mxu0 0.0
      %761 = vmatprep.subr.mxu0 0.0
      %762 = vmatpush1.msra.mxu0 0.0
      %763 = vmatprep.subr.mxu0 0.0
      %764 = vmatpush1.msra.mxu0 0.0
      %765 = vmatprep.subr.mxu0 0.0
      %766 = vmatpush1.msra.mxu0 0.0
      %767 = vmatprep.subr.mxu0 0.0
      %768 = vmatpush1.msra.mxu0 0.0
      %769 = vmatprep.mubr.f32.mxu0 0.0
      %770 = vmatmul.mubr.f32.gmra.mrb[0].mxu0 %v703
      %v771 = vpop.f32.mrb[0].mxu0
      %v772 = vadd.f32 0.0, %v771
      %v773 = vpop.f32.mrb[0].mxu0
      %774 = vdwg.mxu0
      %776 = vrot.lane.b32.xlu0 %v442, 8
      %v777 = vpop.permute.xlu0 %776
      %780 = vrot.lane.b32.xlu0 %v607, 16
      %v781 = vpop.permute.xlu0 %780
      %784 = vrot.lane.b32.xlu0 %v772, 24
      %v785 = vpop.permute.xlu0 %784
      %v787 = vsel %vm117, %v277, %v777
      %vm788 = vcmask 130048
      %v789 = vsel %vm788, %v787, %v781
      %vm790 = vcmask 195584
      %v791 = vsel %vm790, %v789, %v785
      %vm792 = vcmask 261120
      %793 = vst.msk [vmem:[%s111] sm:$0xff] %vm792, %v791
      %p794 = scmp.lt.s32.totalorder %s12, 1
      %s795 = scalar_select %p794, %s12, 1
      %s796 = smul.addr %s795, 8
      %s797 = scalar_lea.vmem %s1, %s796
      // Predicated region
      $region25: #{decoder_forward.19} parent=23 // pred_check
        %p798 = pneg %p56
      $region26: #{decoder_forward.19} parent=23 // pred_check_branch
        %800 = sbr.rel (%p798) target = $region28
      $region27: #{decoder_forward.19} parent=23 // pred_region
        _
      $region28: #{decoder_forward.19} parent=23 // pred_fallthru
        _
    $region24: #{decoder_forward.19} parent=5 // pred_fallthru
      _
    %p801 = scmp.le.s32.totalorder 2, %s7
    // Predicated region
    $region29: #{decoder_forward.19} parent=5 // pred_check
      %p802 = pneg %p801
    $region30: #{decoder_forward.19} parent=5 // pred_check_branch
      %804 = sbr.rel (%p802) target = $region32
    $region31: #{decoder_forward.19} parent=5 // pred_region
      %s805 = ssub.s32 %s7, 2
      // Predicated region
      $region33: #{decoder_forward.19} parent=31 // pred_check
        %p806 = pneg %p62
      $region34: #{decoder_forward.19} parent=31 // pred_check_branch
        %808 = sbr.rel (%p806) target = $region36
      $region35: #{decoder_forward.19} parent=31 // pred_region
        %p809 = scmp.lt.s32.totalorder %s13, 1
        %s810 = scalar_select %p809, %s13, 1
        %s811 = smul.addr %s810, 8
        %s812 = scalar_lea.vmem %s1, %s811
      $region36: #{decoder_forward.19} parent=31 // pred_fallthru
        _
    $region32: #{decoder_forward.19} parent=5 // pred_fallthru
      _
  $region6: #{decoder_forward.19} parent=0 // loop_footer
    %s11 = sadd.s32 1, %s7
  $region7: #{decoder_forward.19} parent=0 // loop_footer_branch
    %6 = sbr.rel target = $region3
  $region8: #{decoder_forward.19} parent=0 // loop_exit
    _

// kernel: decoder_forward.22
$region0: #{decoder_forward.22}
  #allocation0 [shape = 'u32[]', space=smem, size = 0x4, offset = 0x4, fixed_abs, tag = 'smem constant byte address 0x4 - core index']
  #allocation1 [shape = 'u32[144,128]{1,0:T(1,128)}', space=vmem, size = 0x12000, scoped, tag = 'internal scratch']
  #allocation2 [shape = 'f32[16,64]{1,0:T(8,128)}', space=vmem, size = 0x2000, scoped, tag = 'scratch operand']
  %s0 = inlined_call_operand.vmem [shape: f32[16,32], index: 0, kind: input, shape index: {}]
  %s1 = inlined_call_operand.vmem [shape: f32[32,64], index: 1, kind: input, shape index: {}]
  %s2 = inlined_call_operand.vmem [shape: f32[1,64], index: 2, kind: input, shape index: {}]
  %s3 = inlined_call_operand.vmem [shape: f32[16,64], index: 3, kind: output, shape index: {}]
  %s4 = sld [smem:[#allocation0]]
  $region30: #{decoder_forward.22} parent=0
    _
  %s6 = ssub.s32 1, %s4
  %s7 = scalar_select 0, %s6, %s4
  // Predicated region
  $region2: #{decoder_forward.22} parent=0 // pred_check
    _
  $region3: #{decoder_forward.22} parent=0 // pred_check_branch
    %9 = sbr.rel (0) target = $region5
  $region4: #{decoder_forward.22} parent=0 // pred_region
    _
  $region5: #{decoder_forward.22} parent=0 // pred_fallthru
    _
  // Predicated region
  $region6: #{decoder_forward.22} parent=0 // pred_check
    _
  $region7: #{decoder_forward.22} parent=0 // pred_check_branch
    %11 = sbr.rel (0) target = $region9
  $region8: #{decoder_forward.22} parent=0 // pred_region
    _
  $region9: #{decoder_forward.22} parent=0 // pred_fallthru
    _
  // Predicated region
  $region10: #{decoder_forward.22} parent=0 // pred_check
    _
  $region11: #{decoder_forward.22} parent=0 // pred_check_branch
    %13 = sbr.rel (0) target = $region13
  $region12: #{decoder_forward.22} parent=0 // pred_region
    _
  $region13: #{decoder_forward.22} parent=0 // pred_fallthru
    _
  %p14 = scmp.eq.s32.totalorder 0, 0
  // Predicated region
  $region14: #{decoder_forward.22} parent=0 // pred_check
    %p15 = pneg %p14
  $region15: #{decoder_forward.22} parent=0 // pred_check_branch
    %17 = sbr.rel (%p15) target = $region17
  $region16: #{decoder_forward.22} parent=0 // pred_region
    %vm18 = vcmask 523264
    %19 = vst.msk [vmem:[#allocation2] sm:$0xff] %vm18, 0.0
    %20 = vst.msk [vmem:[#allocation2 + $0x8] sm:$0xff] %vm18, 0.0
  $region17: #{decoder_forward.22} parent=0 // pred_fallthru
    _
  %v21 = vld [vmem:[#allocation2] sm:$0xff]
  %v22 = vld [vmem:[#allocation2 + $0x8] sm:$0xff]
  %v23 = vld [vmem:[%s0] sm:$0xff]
  %v24 = vld [vmem:[%s0 + $0x8] sm:$0xff]
  %v25 = vld [vmem:[%s1] sm:$0xff]
  %v26 = vld [vmem:[%s1 + $0x8] sm:$0xff]
  %v27 = vld [vmem:[%s1 + $0x10] sm:$0xff]
  %v28 = vld [vmem:[%s1 + $0x18] sm:$0xff]
  %vm29 = vcmask 261120
  %v31 = vsel %vm29, %v23, 0
  %v34 = vsel %vm29, %v24, 0
  %36 = vmatprep.subr.mxu0 0.0
  %37 = vmatpush1.msra.mxu0 %v25
  %38 = vmatprep.subr.mxu0 0.0
  %39 = vmatpush1.msra.mxu0 %v26
  %40 = vmatprep.subr.mxu0 0.0
  %41 = vmatpush1.msra.mxu0 %v27
  %42 = vmatprep.subr.mxu0 0.0
  %43 = vmatpush1.msra.mxu0 %v28
  %44 = vmatprep.subr.mxu0 0.0
  %45 = vmatpush1.msra.mxu0 0.0
  %46 = vmatprep.subr.mxu0 0.0
  %47 = vmatpush1.msra.mxu0 0.0
  %48 = vmatprep.subr.mxu0 0.0
  %49 = vmatpush1.msra.mxu0 0.0
  %50 = vmatprep.subr.mxu0 0.0
  %51 = vmatpush1.msra.mxu0 0.0
  %52 = vmatprep.subr.mxu0 0.0
  %53 = vmatpush1.msra.mxu0 0.0
  %54 = vmatprep.subr.mxu0 0.0
  %55 = vmatpush1.msra.mxu0 0.0
  %56 = vmatprep.subr.mxu0 0.0
  %57 = vmatpush1.msra.mxu0 0.0
  %58 = vmatprep.subr.mxu0 0.0
  %59 = vmatpush1.msra.mxu0 0.0
  %60 = vmatprep.subr.mxu0 0.0
  %61 = vmatpush1.msra.mxu0 0.0
  %62 = vmatprep.subr.mxu0 0.0
  %63 = vmatpush1.msra.mxu0 0.0
  %64 = vmatprep.subr.mxu0 0.0
  %65 = vmatpush1.msra.mxu0 0.0
  %66 = vmatprep.subr.mxu0 0.0
  %67 = vmatpush1.msra.mxu0 0.0
  %68 = vmatprep.subr.mxu0 0.0
  %69 = vmatpush1.msra.mxu0 0.0
  %70 = vmatprep.subr.mxu0 0.0
  %71 = vmatpush1.msra.mxu0 0.0
  %72 = vmatprep.subr.mxu0 0.0
  %73 = vmatpush1.msra.mxu0 0.0
  %74 = vmatprep.subr.mxu0 0.0
  %75 = vmatpush1.msra.mxu0 0.0
  %76 = vmatprep.subr.mxu0 0.0
  %77 = vmatpush1.msra.mxu0 0.0
  %78 = vmatprep.subr.mxu0 0.0
  %79 = vmatpush1.msra.mxu0 0.0
  %80 = vmatprep.subr.mxu0 0.0
  %81 = vmatpush1.msra.mxu0 0.0
  %82 = vmatprep.subr.mxu0 0.0
  %83 = vmatpush1.msra.mxu0 0.0
  %84 = vmatprep.subr.mxu0 0.0
  %85 = vmatpush1.msra.mxu0 0.0
  %86 = vmatprep.subr.mxu0 0.0
  %87 = vmatpush1.msra.mxu0 0.0
  %88 = vmatprep.subr.mxu0 0.0
  %89 = vmatpush1.msra.mxu0 0.0
  %90 = vmatprep.subr.mxu0 0.0
  %91 = vmatpush1.msra.mxu0 0.0
  %92 = vmatprep.subr.mxu0 0.0
  %93 = vmatpush1.msra.mxu0 0.0
  %94 = vmatprep.subr.mxu0 0.0
  %95 = vmatpush1.msra.mxu0 0.0
  %96 = vmatprep.subr.mxu0 0.0
  %97 = vmatpush1.msra.mxu0 0.0
  %98 = vmatprep.subr.mxu0 0.0
  %99 = vmatpush1.msra.mxu0 0.0
  %100 = vmatprep.mubr.f32.mxu0 0.0
  %101 = vmatmul.mubr.f32.gmra.mrb[0].mxu0 %v31
  %v102 = vpop.f32.mrb[0].mxu0
  %v103 = vadd.f32 0.0, %v102
  %v104 = vpop.f32.mrb[0].mxu0
  %105 = vmatprep.mubr.f32.mxu0 0.0
  %106 = vmatmul.mubr.f32.gmra.mrb[0].mxu0 %v34
  %v107 = vpop.f32.mrb[0].mxu0
  %v108 = vadd.f32 0.0, %v107
  %v109 = vpop.f32.mrb[0].mxu0
  %110 = vdwg.mxu0
  %v111 = vadd.f32 %v21, %v103
  %v112 = vadd.f32 %v22, %v108
  %vm113 = vcmask 523264
  %114 = vst.msk [vmem:[#allocation2] sm:$0xff] %vm113, %v111
  %115 = vst.msk [vmem:[#allocation2 + $0x8] sm:$0xff] %vm113, %v112
  // Predicated region
  $region18: #{decoder_forward.22} parent=0 // pred_check
    %p116 = pneg %p14
  $region19: #{decoder_forward.22} parent=0 // pred_check_branch
    %118 = sbr.rel (%p116) target = $region21
  $region20: #{decoder_forward.22} parent=0 // pred_region
    %v119 = vld [vmem:[#allocation2] sm:$0xff]
    %v120 = vld [vmem:[#allocation2 + $0x8] sm:$0xff]
    %v121 = vld [vmem:[%s2] sm:$0x1]
    %v123 = vlaneseq
    %v124 = vshrl.u32 %v123, 7
    %v125 = vsub.s32 0, %v124
    %v126 = vrot.slane %v121, %v125
    %v128 = vadd.f32 %v119, %v126
    %v129 = vadd.f32 %v120, %v126
    %130 = vst.msk [vmem:[%s3] sm:$0xff] %vm113, %v128
    %131 = vst.msk [vmem:[%s3 + $0x8] sm:$0xff] %vm113, %v129
  $region21: #{decoder_forward.22} parent=0 // pred_fallthru
    _
  // Predicated region
  $region22: #{decoder_forward.22} parent=0 // pred_check
    _
  $region23: #{decoder_forward.22} parent=0 // pred_check_branch
    %133 = sbr.rel (0) target = $region25
  $region24: #{decoder_forward.22} parent=0 // pred_region
    _
  $region25: #{decoder_forward.22} parent=0 // pred_fallthru
    _
  // Predicated region
  $region26: #{decoder_forward.22} parent=0 // pred_check
    _
  $region27: #{decoder_forward.22} parent=0 // pred_check_branch
    %135 = sbr.rel (0) target = $region29
  $region28: #{decoder_forward.22} parent=0 // pred_region
    _
  $region29: #{decoder_forward.22} parent=0 // pred_fallthru
    _

// kernel: decoder_forward.26
$region0: #{decoder_forward.26}
  #allocation0 [shape = 'u32[]', space=smem, size = 0x4, offset = 0x4, fixed_abs, tag = 'smem constant byte address 0x4 - core index']
  #allocation1 [shape = 'u32[144,128]{1,0:T(1,128)}', space=vmem, size = 0x12000, scoped, tag = 'internal scratch']
  #allocation2 [shape = 'f32[16,32]{1,0:T(8,128)}', space=vmem, size = 0x2000, scoped, tag = 'scratch operand']
  %s0 = inlined_call_operand.vmem [shape: f32[16,64], index: 0, kind: input, shape index: {}]
  %s1 = inlined_call_operand.vmem [shape: f32[64,32], index: 1, kind: input, shape index: {}]
  %s2 = inlined_call_operand.vmem [shape: f32[1,32], index: 2, kind: input, shape index: {}]
  %s3 = inlined_call_operand.vmem [shape: f32[16,32], index: 3, kind: input, shape index: {}]
  %s4 = inlined_call_operand.vmem [shape: f32[16,32], index: 4, kind: output, shape index: {}]
  %s5 = sld [smem:[#allocation0]]
  $region34: #{decoder_forward.26} parent=0
    _
  %s7 = ssub.s32 1, %s5
  %s8 = scalar_select 0, %s7, %s5
  // Predicated region
  $region2: #{decoder_forward.26} parent=0 // pred_check
    _
  $region3: #{decoder_forward.26} parent=0 // pred_check_branch
    %10 = sbr.rel (0) target = $region5
  $region4: #{decoder_forward.26} parent=0 // pred_region
    _
  $region5: #{decoder_forward.26} parent=0 // pred_fallthru
    _
  // Predicated region
  $region6: #{decoder_forward.26} parent=0 // pred_check
    _
  $region7: #{decoder_forward.26} parent=0 // pred_check_branch
    %12 = sbr.rel (0) target = $region9
  $region8: #{decoder_forward.26} parent=0 // pred_region
    _
  $region9: #{decoder_forward.26} parent=0 // pred_fallthru
    _
  // Predicated region
  $region10: #{decoder_forward.26} parent=0 // pred_check
    _
  $region11: #{decoder_forward.26} parent=0 // pred_check_branch
    %14 = sbr.rel (0) target = $region13
  $region12: #{decoder_forward.26} parent=0 // pred_region
    _
  $region13: #{decoder_forward.26} parent=0 // pred_fallthru
    _
  // Predicated region
  $region14: #{decoder_forward.26} parent=0 // pred_check
    _
  $region15: #{decoder_forward.26} parent=0 // pred_check_branch
    %16 = sbr.rel (0) target = $region17
  $region16: #{decoder_forward.26} parent=0 // pred_region
    _
  $region17: #{decoder_forward.26} parent=0 // pred_fallthru
    _
  %p17 = scmp.eq.s32.totalorder 0, 0
  // Predicated region
  $region18: #{decoder_forward.26} parent=0 // pred_check
    %p18 = pneg %p17
  $region19: #{decoder_forward.26} parent=0 // pred_check_branch
    %20 = sbr.rel (%p18) target = $region21
  $region20: #{decoder_forward.26} parent=0 // pred_region
    %vm21 = vcmask 261120
    %22 = vst.msk [vmem:[#allocation2] sm:$0xff] %vm21, 0.0
    %23 = vst.msk [vmem:[#allocation2 + $0x8] sm:$0xff] %vm21, 0.0
  $region21: #{decoder_forward.26} parent=0 // pred_fallthru
    _
  %v24 = vld [vmem:[#allocation2] sm:$0xff]
  %v25 = vld [vmem:[#allocation2 + $0x8] sm:$0xff]
  %v26 = vld [vmem:[%s0] sm:$0xff]
  %v27 = vld [vmem:[%s0 + $0x8] sm:$0xff]
  %v28 = vld [vmem:[%s1] sm:$0xff]
  %v29 = vld [vmem:[%s1 + $0x8] sm:$0xff]
  %v30 = vld [vmem:[%s1 + $0x10] sm:$0xff]
  %v31 = vld [vmem:[%s1 + $0x18] sm:$0xff]
  %v32 = vld [vmem:[%s1 + $0x20] sm:$0xff]
  %v33 = vld [vmem:[%s1 + $0x28] sm:$0xff]
  %v34 = vld [vmem:[%s1 + $0x30] sm:$0xff]
  %v35 = vld [vmem:[%s1 + $0x38] sm:$0xff]
  %vm36 = vcmask 523264
  %v38 = vsel %vm36, %v26, 0
  %v41 = vsel %vm36, %v27, 0
  %43 = vmatprep.subr.mxu0 0.0
  %44 = vmatpush1.msra.mxu0 %v28
  %45 = vmatprep.subr.mxu0 0.0
  %46 = vmatpush1.msra.mxu0 %v29
  %47 = vmatprep.subr.mxu0 0.0
  %48 = vmatpush1.msra.mxu0 %v30
  %49 = vmatprep.subr.mxu0 0.0
  %50 = vmatpush1.msra.mxu0 %v31
  %51 = vmatprep.subr.mxu0 0.0
  %52 = vmatpush1.msra.mxu0 %v32
  %53 = vmatprep.subr.mxu0 0.0
  %54 = vmatpush1.msra.mxu0 %v33
  %55 = vmatprep.subr.mxu0 0.0
  %56 = vmatpush1.msra.mxu0 %v34
  %57 = vmatprep.subr.mxu0 0.0
  %58 = vmatpush1.msra.mxu0 %v35
  %59 = vmatprep.subr.mxu0 0.0
  %60 = vmatpush1.msra.mxu0 0.0
  %61 = vmatprep.subr.mxu0 0.0
  %62 = vmatpush1.msra.mxu0 0.0
  %63 = vmatprep.subr.mxu0 0.0
  %64 = vmatpush1.msra.mxu0 0.0
  %65 = vmatprep.subr.mxu0 0.0
  %66 = vmatpush1.msra.mxu0 0.0
  %67 = vmatprep.subr.mxu0 0.0
  %68 = vmatpush1.msra.mxu0 0.0
  %69 = vmatprep.subr.mxu0 0.0
  %70 = vmatpush1.msra.mxu0 0.0
  %71 = vmatprep.subr.mxu0 0.0
  %72 = vmatpush1.msra.mxu0 0.0
  %73 = vmatprep.subr.mxu0 0.0
  %74 = vmatpush1.msra.mxu0 0.0
  %75 = vmatprep.subr.mxu0 0.0
  %76 = vmatpush1.msra.mxu0 0.0
  %77 = vmatprep.subr.mxu0 0.0
  %78 = vmatpush1.msra.mxu0 0.0
  %79 = vmatprep.subr.mxu0 0.0
  %80 = vmatpush1.msra.mxu0 0.0
  %81 = vmatprep.subr.mxu0 0.0
  %82 = vmatpush1.msra.mxu0 0.0
  %83 = vmatprep.subr.mxu0 0.0
  %84 = vmatpush1.msra.mxu0 0.0
  %85 = vmatprep.subr.mxu0 0.0
  %86 = vmatpush1.msra.mxu0 0.0
  %87 = vmatprep.subr.mxu0 0.0
  %88 = vmatpush1.msra.mxu0 0.0
  %89 = vmatprep.subr.mxu0 0.0
  %90 = vmatpush1.msra.mxu0 0.0
  %91 = vmatprep.subr.mxu0 0.0
  %92 = vmatpush1.msra.mxu0 0.0
  %93 = vmatprep.subr.mxu0 0.0
  %94 = vmatpush1.msra.mxu0 0.0
  %95 = vmatprep.subr.mxu0 0.0
  %96 = vmatpush1.msra.mxu0 0.0
  %97 = vmatprep.subr.mxu0 0.0
  %98 = vmatpush1.msra.mxu0 0.0
  %99 = vmatprep.subr.mxu0 0.0
  %100 = vmatpush1.msra.mxu0 0.0
  %101 = vmatprep.subr.mxu0 0.0
  %102 = vmatpush1.msra.mxu0 0.0
  %103 = vmatprep.subr.mxu0 0.0
  %104 = vmatpush1.msra.mxu0 0.0
  %105 = vmatprep.subr.mxu0 0.0
  %106 = vmatpush1.msra.mxu0 0.0
  %107 = vmatprep.mubr.f32.mxu0 0.0
  %108 = vmatmul.mubr.f32.gmra.mrb[0].mxu0 %v38
  %v109 = vpop.f32.mrb[0].mxu0
  %v110 = vadd.f32 0.0, %v109
  %v111 = vpop.f32.mrb[0].mxu0
  %112 = vmatprep.mubr.f32.mxu0 0.0
  %113 = vmatmul.mubr.f32.gmra.mrb[0].mxu0 %v41
  %v114 = vpop.f32.mrb[0].mxu0
  %v115 = vadd.f32 0.0, %v114
  %v116 = vpop.f32.mrb[0].mxu0
  %117 = vdwg.mxu0
  %v118 = vadd.f32 %v24, %v110
  %v119 = vadd.f32 %v25, %v115
  %vm120 = vcmask 261120
  %121 = vst.msk [vmem:[#allocation2] sm:$0xff] %vm120, %v118
  %122 = vst.msk [vmem:[#allocation2 + $0x8] sm:$0xff] %vm120, %v119
  // Predicated region
  $region22: #{decoder_forward.26} parent=0 // pred_check
    %p123 = pneg %p17
  $region23: #{decoder_forward.26} parent=0 // pred_check_branch
    %125 = sbr.rel (%p123) target = $region25
  $region24: #{decoder_forward.26} parent=0 // pred_region
    %v126 = vld [vmem:[#allocation2] sm:$0xff]
    %v127 = vld [vmem:[#allocation2 + $0x8] sm:$0xff]
    %v128 = vld [vmem:[%s2] sm:$0x1]
    %v130 = vlaneseq
    %v131 = vshrl.u32 %v130, 7
    %v132 = vsub.s32 0, %v131
    %v133 = vrot.slane %v128, %v132
    %v135 = vadd.f32 %v126, %v133
    %v136 = vadd.f32 %v127, %v133
    %v137 = vld [vmem:[%s3] sm:$0xff]
    %v138 = vld [vmem:[%s3 + $0x8] sm:$0xff]
    %v139 = vadd.f32 %v135, %v137
    %v140 = vadd.f32 %v136, %v138
    %141 = vst.msk [vmem:[%s4] sm:$0xff] %vm120, %v139
    %142 = vst.msk [vmem:[%s4 + $0x8] sm:$0xff] %vm120, %v140
  $region25: #{decoder_forward.26} parent=0 // pred_fallthru
    _
  // Predicated region
  $region26: #{decoder_forward.26} parent=0 // pred_check
    _
  $region27: #{decoder_forward.26} parent=0 // pred_check_branch
    %144 = sbr.rel (0) target = $region29
  $region28: #{decoder_forward.26} parent=0 // pred_region
    _
  $region29: #{decoder_forward.26} parent=0 // pred_fallthru
    _
  // Predicated region
  $region30: #{decoder_forward.26} parent=0 // pred_check
    _
  $region31: #{decoder_forward.26} parent=0 // pred_check_branch
    %146 = sbr.rel (0) target = $region33
  $region32: #{decoder_forward.26} parent=0 // pred_region
    _
  $region33: #{decoder_forward.26} parent=0 // pred_fallthru
    _

// kernel: decoder_forward.25
$region0: #{decoder_forward.25}
  #allocation0 [shape = 'u32[]', space=smem, size = 0x4, offset = 0x4, fixed_abs, tag = 'smem constant byte address 0x4 - core index']
  #allocation1 [shape = 'u32[144,128]{1,0:T(1,128)}', space=vmem, size = 0x12000, scoped, tag = 'internal scratch']
  #allocation2 [shape = 'f32[16,64]{1,0:T(8,128)}', space=vmem, size = 0x2000, scoped, tag = 'scratch operand']
  %s0 = inlined_call_operand.vmem [shape: f32[16,32], index: 0, kind: input, shape index: {}]
  %s1 = inlined_call_operand.vmem [shape: f32[32,64], index: 1, kind: input, shape index: {}]
  %s2 = inlined_call_operand.vmem [shape: f32[1,64], index: 2, kind: input, shape index: {}]
  %s3 = inlined_call_operand.vmem [shape: f32[16,64], index: 3, kind: output, shape index: {}]
  %s4 = sld [smem:[#allocation0]]
  $region30: #{decoder_forward.25} parent=0
    _
  %s6 = ssub.s32 1, %s4
  %s7 = scalar_select 0, %s6, %s4
  // Predicated region
  $region2: #{decoder_forward.25} parent=0 // pred_check
    _
  $region3: #{decoder_forward.25} parent=0 // pred_check_branch
    %9 = sbr.rel (0) target = $region5
  $region4: #{decoder_forward.25} parent=0 // pred_region
    _
  $region5: #{decoder_forward.25} parent=0 // pred_fallthru
    _
  // Predicated region
  $region6: #{decoder_forward.25} parent=0 // pred_check
    _
  $region7: #{decoder_forward.25} parent=0 // pred_check_branch
    %11 = sbr.rel (0) target = $region9
  $region8: #{decoder_forward.25} parent=0 // pred_region
    _
  $region9: #{decoder_forward.25} parent=0 // pred_fallthru
    _
  // Predicated region
  $region10: #{decoder_forward.25} parent=0 // pred_check
    _
  $region11: #{decoder_forward.25} parent=0 // pred_check_branch
    %13 = sbr.rel (0) target = $region13
  $region12: #{decoder_forward.25} parent=0 // pred_region
    _
  $region13: #{decoder_forward.25} parent=0 // pred_fallthru
    _
  %p14 = scmp.eq.s32.totalorder 0, 0
  // Predicated region
  $region14: #{decoder_forward.25} parent=0 // pred_check
    %p15 = pneg %p14
  $region15: #{decoder_forward.25} parent=0 // pred_check_branch
    %17 = sbr.rel (%p15) target = $region17
  $region16: #{decoder_forward.25} parent=0 // pred_region
    %vm18 = vcmask 523264
    %19 = vst.msk [vmem:[#allocation2] sm:$0xff] %vm18, 0.0
    %20 = vst.msk [vmem:[#allocation2 + $0x8] sm:$0xff] %vm18, 0.0
  $region17: #{decoder_forward.25} parent=0 // pred_fallthru
    _
  %v21 = vld [vmem:[#allocation2] sm:$0xff]
  %v22 = vld [vmem:[#allocation2 + $0x8] sm:$0xff]
  %v23 = vld [vmem:[%s0] sm:$0xff]
  %v24 = vld [vmem:[%s0 + $0x8] sm:$0xff]
  %v25 = vld [vmem:[%s1] sm:$0xff]
  %v26 = vld [vmem:[%s1 + $0x8] sm:$0xff]
  %v27 = vld [vmem:[%s1 + $0x10] sm:$0xff]
  %v28 = vld [vmem:[%s1 + $0x18] sm:$0xff]
  %vm29 = vcmask 261120
  %v31 = vsel %vm29, %v23, 0
  %v34 = vsel %vm29, %v24, 0
  %36 = vmatprep.subr.mxu0 0.0
  %37 = vmatpush1.msra.mxu0 %v25
  %38 = vmatprep.subr.mxu0 0.0
  %39 = vmatpush1.msra.mxu0 %v26
  %40 = vmatprep.subr.mxu0 0.0
  %41 = vmatpush1.msra.mxu0 %v27
  %42 = vmatprep.subr.mxu0 0.0
  %43 = vmatpush1.msra.mxu0 %v28
  %44 = vmatprep.subr.mxu0 0.0
  %45 = vmatpush1.msra.mxu0 0.0
  %46 = vmatprep.subr.mxu0 0.0
  %47 = vmatpush1.msra.mxu0 0.0
  %48 = vmatprep.subr.mxu0 0.0
  %49 = vmatpush1.msra.mxu0 0.0
  %50 = vmatprep.subr.mxu0 0.0
  %51 = vmatpush1.msra.mxu0 0.0
  %52 = vmatprep.subr.mxu0 0.0
  %53 = vmatpush1.msra.mxu0 0.0
  %54 = vmatprep.subr.mxu0 0.0
  %55 = vmatpush1.msra.mxu0 0.0
  %56 = vmatprep.subr.mxu0 0.0
  %57 = vmatpush1.msra.mxu0 0.0
  %58 = vmatprep.subr.mxu0 0.0
  %59 = vmatpush1.msra.mxu0 0.0
  %60 = vmatprep.subr.mxu0 0.0
  %61 = vmatpush1.msra.mxu0 0.0
  %62 = vmatprep.subr.mxu0 0.0
  %63 = vmatpush1.msra.mxu0 0.0
  %64 = vmatprep.subr.mxu0 0.0
  %65 = vmatpush1.msra.mxu0 0.0
  %66 = vmatprep.subr.mxu0 0.0
  %67 = vmatpush1.msra.mxu0 0.0
  %68 = vmatprep.subr.mxu0 0.0
  %69 = vmatpush1.msra.mxu0 0.0
  %70 = vmatprep.subr.mxu0 0.0
  %71 = vmatpush1.msra.mxu0 0.0
  %72 = vmatprep.subr.mxu0 0.0
  %73 = vmatpush1.msra.mxu0 0.0
  %74 = vmatprep.subr.mxu0 0.0
  %75 = vmatpush1.msra.mxu0 0.0
  %76 = vmatprep.subr.mxu0 0.0
  %77 = vmatpush1.msra.mxu0 0.0
  %78 = vmatprep.subr.mxu0 0.0
  %79 = vmatpush1.msra.mxu0 0.0
  %80 = vmatprep.subr.mxu0 0.0
  %81 = vmatpush1.msra.mxu0 0.0
  %82 = vmatprep.subr.mxu0 0.0
  %83 = vmatpush1.msra.mxu0 0.0
  %84 = vmatprep.subr.mxu0 0.0
  %85 = vmatpush1.msra.mxu0 0.0
  %86 = vmatprep.subr.mxu0 0.0
  %87 = vmatpush1.msra.mxu0 0.0
  %88 = vmatprep.subr.mxu0 0.0
  %89 = vmatpush1.msra.mxu0 0.0
  %90 = vmatprep.subr.mxu0 0.0
  %91 = vmatpush1.msra.mxu0 0.0
  %92 = vmatprep.subr.mxu0 0.0
  %93 = vmatpush1.msra.mxu0 0.0
  %94 = vmatprep.subr.mxu0 0.0
  %95 = vmatpush1.msra.mxu0 0.0
  %96 = vmatprep.subr.mxu0 0.0
  %97 = vmatpush1.msra.mxu0 0.0
  %98 = vmatprep.subr.mxu0 0.0
  %99 = vmatpush1.msra.mxu0 0.0
  %100 = vmatprep.mubr.f32.mxu0 0.0
  %101 = vmatmul.mubr.f32.gmra.mrb[0].mxu0 %v31
  %v102 = vpop.f32.mrb[0].mxu0
  %v103 = vadd.f32 0.0, %v102
  %v104 = vpop.f32.mrb[0].mxu0
  %105 = vmatprep.mubr.f32.mxu0 0.0
  %106 = vmatmul.mubr.f32.gmra.mrb[0].mxu0 %v34
  %v107 = vpop.f32.mrb[0].mxu0
  %v108 = vadd.f32 0.0, %v107
  %v109 = vpop.f32.mrb[0].mxu0
  %110 = vdwg.mxu0
  %v111 = vadd.f32 %v21, %v103
  %v112 = vadd.f32 %v22, %v108
  %vm113 = vcmask 523264
  %114 = vst.msk [vmem:[#allocation2] sm:$0xff] %vm113, %v111
  %115 = vst.msk [vmem:[#allocation2 + $0x8] sm:$0xff] %vm113, %v112
  // Predicated region
  $region18: #{decoder_forward.25} parent=0 // pred_check
    %p116 = pneg %p14
  $region19: #{decoder_forward.25} parent=0 // pred_check_branch
    %118 = sbr.rel (%p116) target = $region21
  $region20: #{decoder_forward.25} parent=0 // pred_region
    %v119 = vld [vmem:[#allocation2] sm:$0xff]
    %v120 = vld [vmem:[#allocation2 + $0x8] sm:$0xff]
    %v121 = vld [vmem:[%s2] sm:$0x1]
    %v123 = vlaneseq
    %v124 = vshrl.u32 %v123, 7
    %v125 = vsub.s32 0, %v124
    %v126 = vrot.slane %v121, %v125
    %v128 = vadd.f32 %v119, %v126
    %v129 = vadd.f32 %v120, %v126
    %v130 = vmul.f32 %v128, %v128
    %v131 = vmul.f32 %v129, %v129
    %v132 = vmul.f32 %v128, %v130
    %v133 = vmul.f32 %v129, %v131
    %v134 = vmul.f32 %v132, 0.044715
    %v135 = vmul.f32 %v133, 0.044715
    %v136 = vadd.f32 %v128, %v134
    %v137 = vadd.f32 %v129, %v135
    %v138 = vmul.f32 %v136, 0.7978846
    %v139 = vmul.f32 %v137, 0.7978846
    %v140 = vtanh.pop %v138
    %v141 = vtanh.pop %v139
    %v142 = vadd.f32 %v140, 1.0
    %v143 = vadd.f32 %v141, 1.0
    %v144 = vmul.f32 %v142, 0.5
    %v145 = vmul.f32 %v143, 0.5
    %v146 = vmul.f32 %v128, %v144
    %v147 = vmul.f32 %v129, %v145
    %148 = vst.msk [vmem:[%s3] sm:$0xff] %vm113, %v146
    %149 = vst.msk [vmem:[%s3 + $0x8] sm:$0xff] %vm113, %v147
  $region21: #{decoder_forward.25} parent=0 // pred_fallthru
    _
  // Predicated region
  $region22: #{decoder_forward.25} parent=0 // pred_check
    _
  $region23: #{decoder_forward.25} parent=0 // pred_check_branch
    %151 = sbr.rel (0) target = $region25
  $region24: #{decoder_forward.25} parent=0 // pred_region
    _
  $region25: #{decoder_forward.25} parent=0 // pred_fallthru
    _
  // Predicated region
  $region26: #{decoder_forward.25} parent=0 // pred_check
    _
  $region27: #{decoder_forward.25} parent=0 // pred_check_branch
    %153 = sbr.rel (0) target = $region29
  $region28: #{decoder_forward.25} parent=0 // pred_region
    _
  $region29: #{decoder_forward.25} parent=0 // pred_fallthru
    _

// kernel: decoder_forward.23
$region0: #{decoder_forward.23}
  #allocation0 [shape = 'u32[]', space=smem, size = 0x4, offset = 0x4, fixed_abs, tag = 'smem constant byte address 0x4 - core index']
  #allocation1 [shape = 'u32[144,128]{1,0:T(1,128)}', space=vmem, size = 0x12000, scoped, tag = 'internal scratch']
  %s0 = inlined_call_operand.vmem [shape: f32[2,8,32], index: 0, kind: input, shape index: {}]
  %s1 = inlined_call_operand.vmem [shape: f32[2,8,64], index: 1, kind: input, shape index: {}]
  %s2 = inlined_call_operand.vmem [shape: f32[2,8,32], index: 2, kind: output, shape index: {}]
  %s3 = sld [smem:[#allocation0]]
  $region41: #{decoder_forward.23} parent=0
    _
  %s5 = ssub.s32 1, %s3
  %s6 = scalar_select 0, %s5, %s3
  loop: start=0, step=1, limit=4
  $region2: #{decoder_forward.23} parent=0 // loop_pre_header
    _
  $region3: #{decoder_forward.23} parent=0 // loop_header
    %s8 = sphi 0, %s12
    %p9 = scmp.ge.s32.totalorder %s8, 4
    %s18 = sphi 0, %s20
    %s21 = sphi 0, %s18
    %s22 = sphi 0, %s21
    %s38 = sphi 0, %s22
    %s44 = sphi 0, %s46
    %s47 = sphi 0, %s44
    %s48 = sphi 0, %s47
    %s64 = sphi 0, %s48
    %s70 = sphi 0, %s72
    %s73 = sphi 0, %s70
    %s74 = sphi 0, %s73
    %s90 = sphi 0, %s74
  $region4: #{decoder_forward.23} parent=0 // loop_header_branch
    %11 = sbr.rel (%p9) target = $region8
  $region5: #{decoder_forward.23} parent=0 // loop_body
    %s13 = ssub.s32 %s8, 1
    %s14 = ssub.s32 %s8, 2
    %s15 = sadd.s32 %s8, 1
    %s16 = ssub.s32 %s8, %s15
    %p17 = scmp.eq.s32.totalorder %s16, 0
    %s19 = sadd.s32 %s18, 1
    %s20 = scalar_select %p17, %s18, %s19
    %p23 = pneg %p17
    %p24 = scmp.eq.s32.totalorder %s8, 1
    %p25 = por %p23, %p24
    %p26 = scmp.ne.s32.totalorder %s18, %s21
    %p27 = scmp.eq.s32.totalorder %s8, 0
    %p28 = por %p26, %p27
    %p29 = scmp.ne.s32.totalorder %s18, %s21
    %p30 = scmp.eq.s32.totalorder %s13, 1
    %p31 = por %p29, %p30
    %p32 = scmp.ne.s32.totalorder %s21, %s22
    %p33 = scmp.eq.s32.totalorder %s13, 0
    %p34 = por %p32, %p33
    %p35 = scmp.ne.s32.totalorder %s21, %s22
    %p36 = scmp.eq.s32.totalorder %s14, 1
    %p37 = por %p35, %p36
    %p39 = scmp.ne.s32.totalorder %s22, %s38
    %p40 = scmp.eq.s32.totalorder %s14, 0
    %p41 = por %p39, %p40
    %s42 = ssub.s32 %s8, %s15
    %p43 = scmp.eq.s32.totalorder %s42, 0
    %s45 = sadd.s32 %s44, 1
    %s46 = scalar_select %p43, %s44, %s45
    %p49 = pneg %p43
    %p50 = scmp.eq.s32.totalorder %s8, 1
    %p51 = por %p49, %p50
    %p52 = scmp.ne.s32.totalorder %s44, %s47
    %p53 = scmp.eq.s32.totalorder %s8, 0
    %p54 = por %p52, %p53
    %p55 = scmp.ne.s32.totalorder %s44, %s47
    %p56 = scmp.eq.s32.totalorder %s13, 1
    %p57 = por %p55, %p56
    %p58 = scmp.ne.s32.totalorder %s47, %s48
    %p59 = scmp.eq.s32.totalorder %s13, 0
    %p60 = por %p58, %p59
    %p61 = scmp.ne.s32.totalorder %s47, %s48
    %p62 = scmp.eq.s32.totalorder %s14, 1
    %p63 = por %p61, %p62
    %p65 = scmp.ne.s32.totalorder %s48, %s64
    %p66 = scmp.eq.s32.totalorder %s14, 0
    %p67 = por %p65, %p66
    %s68 = ssub.s32 %s8, %s15
    %p69 = scmp.eq.s32.totalorder %s68, 0
    %s71 = sadd.s32 %s70, 1
    %s72 = scalar_select %p69, %s70, %s71
    %p75 = pneg %p69
    %p76 = scmp.eq.s32.totalorder %s8, 1
    %p77 = por %p75, %p76
    %p78 = scmp.ne.s32.totalorder %s70, %s73
    %p79 = scmp.eq.s32.totalorder %s8, 0
    %p80 = por %p78, %p79
    %p81 = scmp.ne.s32.totalorder %s70, %s73
    %p82 = scmp.eq.s32.totalorder %s13, 1
    %p83 = por %p81, %p82
    %p84 = scmp.ne.s32.totalorder %s73, %s74
    %p85 = scmp.eq.s32.totalorder %s13, 0
    %p86 = por %p84, %p85
    %p87 = scmp.ne.s32.totalorder %s73, %s74
    %p88 = scmp.eq.s32.totalorder %s14, 1
    %p89 = por %p87, %p88
    %p91 = scmp.ne.s32.totalorder %s74, %s90
    %p92 = scmp.eq.s32.totalorder %s14, 0
    %p93 = por %p91, %p92
    %p94 = scmp.le.s32.totalorder 1, %s8
    %p95 = scmp.lt.s32.totalorder %s8, 3
    %p96 = pnand %p94, %p95
    %p97 = pneg %p96
    // Predicated region
    $region9: #{decoder_forward.23} parent=5 // pred_check
      _
    $region10: #{decoder_forward.23} parent=5 // pred_check_branch
      %99 = sbr.rel (%p96) target = $region12
    $region11: #{decoder_forward.23} parent=5 // pred_region
      %s100 = ssub.s32 %s8, 1
    $region12: #{decoder_forward.23} parent=5 // pred_fallthru
      _
    %p101 = scmp.lt.s32.totalorder %s8, 2
    // Predicated region
    $region13: #{decoder_forward.23} parent=5 // pred_check
      %p102 = pneg %p101
    $region14: #{decoder_forward.23} parent=5 // pred_check_branch
      %104 = sbr.rel (%p102) target = $region16
    $region15: #{decoder_forward.23} parent=5 // pred_region
      // Predicated region
      $region17: #{decoder_forward.23} parent=15 // pred_check
        %p105 = pneg %p28
      $region18: #{decoder_forward.23} parent=15 // pred_check_branch
        %107 = sbr.rel (%p105) target = $region20
      $region19: #{decoder_forward.23} parent=15 // pred_region
        %p108 = scmp.lt.s32.totalorder %s8, 1
        %s109 = scalar_select %p108, %s8, 1
        %s110 = smul.addr %s109, 8
        %s111 = scalar_lea.vmem %s0, %s110
      $region20: #{decoder_forward.23} parent=15 // pred_fallthru
        _
      // Predicated region
      $region21: #{decoder_forward.23} parent=15 // pred_check
        %p112 = pneg %p54
      $region22: #{decoder_forward.23} parent=15 // pred_check_branch
        %114 = sbr.rel (%p112) target = $region24
      $region23: #{decoder_forward.23} parent=15 // pred_region
        %p115 = scmp.lt.s32.totalorder %s8, 1
        %s116 = scalar_select %p115, %s8, 1
        %s117 = smul.addr %s116, 8
        %s118 = scalar_lea.vmem %s1, %s117
      $region24: #{decoder_forward.23} parent=15 // pred_fallthru
        _
    $region16: #{decoder_forward.23} parent=5 // pred_fallthru
      _
    %p119 = scmp.le.s32.totalorder 1, %s8
    %p120 = scmp.lt.s32.totalorder %s8, 3
    %p121 = pnand %p119, %p120
    %p122 = pneg %p121
    // Predicated region
    $region25: #{decoder_forward.23} parent=5 // pred_check
      _
    $region26: #{decoder_forward.23} parent=5 // pred_check_branch
      %124 = sbr.rel (%p121) target = $region28
    $region27: #{decoder_forward.23} parent=5 // pred_region
      %s125 = ssub.s32 %s8, 1
      %p126 = scmp.lt.s32.totalorder %s13, 1
      %s127 = scalar_select %p126, %s13, 1
      %s128 = smul.addr %s127, 8
      %s129 = scalar_lea.vmem %s0, %s128
      %p130 = pneg %p34
      %p131 = pneg %p31
      %p132 = scmp.lt.s32.totalorder %s13, 1
      %s133 = scalar_select %p132, %s13, 1
      %s134 = smul.addr %s133, 8
      %s135 = scalar_lea.vmem %s1, %s134
      %p136 = pneg %p60
      %p137 = pneg %p57
      %p138 = pneg %p86
      %p139 = pneg %p83
      %p140 = scmp.lt.s32.totalorder %s13, 1
      %s141 = scalar_select %p140, %s13, 1
      %s142 = smul.addr %s141, 8
      %s143 = scalar_lea.vmem %s2, %s142
      %p144 = scmp.lt.s32.totalorder %s13, 1
      %s145 = scalar_select %p144, %s13, 1
      %s146 = smul.addr %s145, 8
      %s147 = scalar_lea.vmem %s0, %s146
      %p148 = scmp.lt.s32.totalorder %s13, 1
      %s149 = scalar_select %p148, %s13, 1
      %s150 = smul.addr %s149, 8
      %s151 = scalar_lea.vmem %s1, %s150
      %p152 = scmp.lt.s32.totalorder %s13, 1
      %s153 = scalar_select %p152, %s13, 1
      %s154 = smul.addr %s153, 8
      %s155 = scalar_lea.vmem %s2, %s154
      %v156 = vld [vmem:[%s147] sm:$0xff]
      %v157 = vld [vmem:[%s151] sm:$0xff]
      %v158 = vmul.f32 %v156, 0.35355338
      %vm159 = vcmask 64512
      %v161 = vsel %vm159, %v158, 0
      %v164 = vsel %vm159, %v157, 0
      %166 = vmatprep.subr.mxu0 0.0
      %167 = vmatpush1.xpose.msra.mxu0 %v164
      %168 = vmatprep.subr.mxu0 0.0
      %169 = vmatpush1.xpose.msra.mxu0 0.0
      %170 = vmatprep.subr.mxu0 0.0
      %171 = vmatpush1.xpose.msra.mxu0 0.0
      %172 = vmatprep.subr.mxu0 0.0
      %173 = vmatpush1.xpose.msra.mxu0 0.0
      %174 = vmatprep.subr.mxu0 0.0
      %175 = vmatpush1.xpose.msra.mxu0 0.0
      %176 = vmatprep.subr.mxu0 0.0
      %177 = vmatpush1.xpose.msra.mxu0 0.0
      %178 = vmatprep.subr.mxu0 0.0
      %179 = vmatpush1.xpose.msra.mxu0 0.0
      %180 = vmatprep.subr.mxu0 0.0
      %181 = vmatpush1.xpose.msra.mxu0 0.0
      %182 = vmatprep.subr.mxu0 0.0
      %183 = vmatpush1.xpose.msra.mxu0 0.0
      %184 = vmatprep.subr.mxu0 0.0
      %185 = vmatpush1.xpose.msra.mxu0 0.0
      %186 = vmatprep.subr.mxu0 0.0
      %187 = vmatpush1.xpose.msra.mxu0 0.0
      %188 = vmatprep.subr.mxu0 0.0
      %189 = vmatpush1.xpose.msra.mxu0 0.0
      %190 = vmatprep.subr.mxu0 0.0
      %191 = vmatpush1.xpose.msra.mxu0 0.0
      %192 = vmatprep.subr.mxu0 0.0
      %193 = vmatpush1.xpose.msra.mxu0 0.0
      %194 = vmatprep.subr.mxu0 0.0
      %195 = vmatpush1.xpose.msra.mxu0 0.0
      %196 = vmatprep.subr.mxu0 0.0
      %197 = vmatpush1.xpose.msra.mxu0 0.0
      %198 = vmatprep.subr.mxu0 0.0
      %199 = vmatpush1.xpose.msra.mxu0 0.0
      %200 = vmatprep.subr.mxu0 0.0
      %201 = vmatpush1.xpose.msra.mxu0 0.0
      %202 = vmatprep.subr.mxu0 0.0
      %203 = vmatpush1.xpose.msra.mxu0 0.0
      %204 = vmatprep.subr.mxu0 0.0
      %205 = vmatpush1.xpose.msra.mxu0 0.0
      %206 = vmatprep.subr.mxu0 0.0
      %207 = vmatpush1.xpose.msra.mxu0 0.0
      %208 = vmatprep.subr.mxu0 0.0
      %209 = vmatpush1.xpose.msra.mxu0 0.0
      %210 = vmatprep.subr.mxu0 0.0
      %211 = vmatpush1.xpose.msra.mxu0 0.0
      %212 = vmatprep.subr.mxu0 0.0
      %213 = vmatpush1.xpose.msra.mxu0 0.0
      %214 = vmatprep.subr.mxu0 0.0
      %215 = vmatpush1.xpose.msra.mxu0 0.0
      %216 = vmatprep.subr.mxu0 0.0
      %217 = vmatpush1.xpose.msra.mxu0 0.0
      %218 = vmatprep.subr.mxu0 0.0
      %219 = vmatpush1.xpose.msra.mxu0 0.0
      %220 = vmatprep.subr.mxu0 0.0
      %221 = vmatpush1.xpose.msra.mxu0 0.0
      %222 = vmatprep.subr.mxu0 0.0
      %223 = vmatpush1.xpose.msra.mxu0 0.0
      %224 = vmatprep.subr.mxu0 0.0
      %225 = vmatpush1.xpose.msra.mxu0 0.0
      %226 = vmatprep.subr.mxu0 0.0
      %227 = vmatpush1.xpose.msra.mxu0 0.0
      %228 = vmatprep.subr.mxu0 0.0
      %229 = vmatpush1.xpose.msra.mxu0 0.0
      %230 = vmatprep.mubr.f32.mxu0 0.0
      %231 = vmatmul.mubr.f32.gmra.mrb[0].mxu0 %v161
      %v232 = vpop.f32.mrb[0].mxu0
      %v233 = vadd.f32 0.0, %v232
      %v234 = vpop.f32.mrb[0].mxu0
      %235 = vdwg.mxu0
      %v236 = vsel %vm159, %v233, -inf
      %237 = vmax.xlane.f32.xlu0 %v236
      %v238 = vpop.xlane.xlu0 %237
      %v239 = vsub.f32 %v233, %v238
      %v240 = vmul.f32 %v239, 1.442695
      %v241 = vpow.pop %v240
      %v242 = vsel %vm159, %v241, 0.0
      %243 = vadd.xlane.f32.xlu0 %v242
      %v244 = vpop.xlane.xlu0 %243
      %v245 = vrcp.pop %v244
      %v246 = vmul.f32 %v241, %v245
      %247 = vrot.lane.b32.xlu0 %v157, 96
      %v248 = vpop.permute.xlu0 %247
      %v251 = vsel %vm159, %v246, 0
      %253 = vmatprep.subr.mxu0 0.0
      %254 = vmatpush1.msra.mxu0 %v248
      %255 = vmatprep.subr.mxu0 0.0
      %256 = vmatpush1.msra.mxu0 0.0
      %257 = vmatprep.subr.mxu0 0.0
      %258 = vmatpush1.msra.mxu0 0.0
      %259 = vmatprep.subr.mxu0 0.0
      %260 = vmatpush1.msra.mxu0 0.0
      %261 = vmatprep.subr.mxu0 0.0
      %262 = vmatpush1.msra.mxu0 0.0
      %263 = vmatprep.subr.mxu0 0.0
      %264 = vmatpush1.msra.mxu0 0.0
      %265 = vmatprep.subr.mxu0 0.0
      %266 = vmatpush1.msra.mxu0 0.0
      %267 = vmatprep.subr.mxu0 0.0
      %268 = vmatpush1.msra.mxu0 0.0
      %269 = vmatprep.subr.mxu0 0.0
      %270 = vmatpush1.msra.mxu0 0.0
      %271 = vmatprep.subr.mxu0 0.0
      %272 = vmatpush1.msra.mxu0 0.0
      %273 = vmatprep.subr.mxu0 0.0
      %274 = vmatpush1.msra.mxu0 0.0
      %275 = vmatprep.subr.mxu0 0.0
      %276 = vmatpush1.msra.mxu0 0.0
      %277 = vmatprep.subr.mxu0 0.0
      %278 = vmatpush1.msra.mxu0 0.0
      %279 = vmatprep.subr.mxu0 0.0
      %280 = vmatpush1.msra.mxu0 0.0
      %281 = vmatprep.subr.mxu0 0.0
      %282 = vmatpush1.msra.mxu0 0.0
      %283 = vmatprep.subr.mxu0 0.0
      %284 = vmatpush1.msra.mxu0 0.0
      %285 = vmatprep.subr.mxu0 0.0
      %286 = vmatpush1.msra.mxu0 0.0
      %287 = vmatprep.subr.mxu0 0.0
      %288 = vmatpush1.msra.mxu0 0.0
      %289 = vmatprep.subr.mxu0 0.0
      %290 = vmatpush1.msra.mxu0 0.0
      %291 = vmatprep.subr.mxu0 0.0
      %292 = vmatpush1.msra.mxu0 0.0
      %293 = vmatprep.subr.mxu0 0.0
      %294 = vmatpush1.msra.mxu0 0.0
      %295 = vmatprep.subr.mxu0 0.0
      %296 = vmatpush1.msra.mxu0 0.0
      %297 = vmatprep.subr.mxu0 0.0
      %298 = vmatpush1.msra.mxu0 0.0
      %299 = vmatprep.subr.mxu0 0.0
      %300 = vmatpush1.msra.mxu0 0.0
      %301 = vmatprep.subr.mxu0 0.0
      %302 = vmatpush1.msra.mxu0 0.0
      %303 = vmatprep.subr.mxu0 0.0
      %304 = vmatpush1.msra.mxu0 0.0
      %305 = vmatprep.subr.mxu0 0.0
      %306 = vmatpush1.msra.mxu0 0.0
      %307 = vmatprep.subr.mxu0 0.0
      %308 = vmatpush1.msra.mxu0 0.0
      %309 = vmatprep.subr.mxu0 0.0
      %310 = vmatpush1.msra.mxu0 0.0
      %311 = vmatprep.subr.mxu0 0.0
      %312 = vmatpush1.msra.mxu0 0.0
      %313 = vmatprep.subr.mxu0 0.0
      %314 = vmatpush1.msra.mxu0 0.0
      %315 = vmatprep.subr.mxu0 0.0
      %316 = vmatpush1.msra.mxu0 0.0
      %317 = vmatprep.mubr.f32.mxu0 0.0
      %318 = vmatmul.mubr.f32.gmra.mrb[0].mxu0 %v251
      %v319 = vpop.f32.mrb[0].mxu0
      %v320 = vadd.f32 0.0, %v319
      %v321 = vpop.f32.mrb[0].mxu0
      %322 = vdwg.mxu0
      %323 = vrot.lane.b32.xlu0 %v158, 120
      %v324 = vpop.permute.xlu0 %323
      %325 = vrot.lane.b32.xlu0 %v157, 120
      %v326 = vpop.permute.xlu0 %325
      %v327 = vsel %vm159, %v324, 0
      %v329 = vsel %vm159, %v326, 0
      %331 = vmatprep.subr.mxu0 0.0
      %332 = vmatpush1.xpose.msra.mxu0 %v329
      %333 = vmatprep.subr.mxu0 0.0
      %334 = vmatpush1.xpose.msra.mxu0 0.0
      %335 = vmatprep.subr.mxu0 0.0
      %336 = vmatpush1.xpose.msra.mxu0 0.0
      %337 = vmatprep.subr.mxu0 0.0
      %338 = vmatpush1.xpose.msra.mxu0 0.0
      %339 = vmatprep.subr.mxu0 0.0
      %340 = vmatpush1.xpose.msra.mxu0 0.0
      %341 = vmatprep.subr.mxu0 0.0
      %342 = vmatpush1.xpose.msra.mxu0 0.0
      %343 = vmatprep.subr.mxu0 0.0
      %344 = vmatpush1.xpose.msra.mxu0 0.0
      %345 = vmatprep.subr.mxu0 0.0
      %346 = vmatpush1.xpose.msra.mxu0 0.0
      %347 = vmatprep.subr.mxu0 0.0
      %348 = vmatpush1.xpose.msra.mxu0 0.0
      %349 = vmatprep.subr.mxu0 0.0
      %350 = vmatpush1.xpose.msra.mxu0 0.0
      %351 = vmatprep.subr.mxu0 0.0
      %352 = vmatpush1.xpose.msra.mxu0 0.0
      %353 = vmatprep.subr.mxu0 0.0
      %354 = vmatpush1.xpose.msra.mxu0 0.0
      %355 = vmatprep.subr.mxu0 0.0
      %356 = vmatpush1.xpose.msra.mxu0 0.0
      %357 = vmatprep.subr.mxu0 0.0
      %358 = vmatpush1.xpose.msra.mxu0 0.0
      %359 = vmatprep.subr.mxu0 0.0
      %360 = vmatpush1.xpose.msra.mxu0 0.0
      %361 = vmatprep.subr.mxu0 0.0
      %362 = vmatpush1.xpose.msra.mxu0 0.0
      %363 = vmatprep.subr.mxu0 0.0
      %364 = vmatpush1.xpose.msra.mxu0 0.0
      %365 = vmatprep.subr.mxu0 0.0
      %366 = vmatpush1.xpose.msra.mxu0 0.0
      %367 = vmatprep.subr.mxu0 0.0
      %368 = vmatpush1.xpose.msra.mxu0 0.0
      %369 = vmatprep.subr.mxu0 0.0
      %370 = vmatpush1.xpose.msra.mxu0 0.0
      %371 = vmatprep.subr.mxu0 0.0
      %372 = vmatpush1.xpose.msra.mxu0 0.0
      %373 = vmatprep.subr.mxu0 0.0
      %374 = vmatpush1.xpose.msra.mxu0 0.0
      %375 = vmatprep.subr.mxu0 0.0
      %376 = vmatpush1.xpose.msra.mxu0 0.0
      %377 = vmatprep.subr.mxu0 0.0
      %378 = vmatpush1.xpose.msra.mxu0 0.0
      %379 = vmatprep.subr.mxu0 0.0
      %380 = vmatpush1.xpose.msra.mxu0 0.0
      %381 = vmatprep.subr.mxu0 0.0
      %382 = vmatpush1.xpose.msra.mxu0 0.0
      %383 = vmatprep.subr.mxu0 0.0
      %384 = vmatpush1.xpose.msra.mxu0 0.0
      %385 = vmatprep.subr.mxu0 0.0
      %386 = vmatpush1.xpose.msra.mxu0 0.0
      %387 = vmatprep.subr.mxu0 0.0
      %388 = vmatpush1.xpose.msra.mxu0 0.0
      %389 = vmatprep.subr.mxu0 0.0
      %390 = vmatpush1.xpose.msra.mxu0 0.0
      %391 = vmatprep.subr.mxu0 0.0
      %392 = vmatpush1.xpose.msra.mxu0 0.0
      %393 = vmatprep.subr.mxu0 0.0
      %394 = vmatpush1.xpose.msra.mxu0 0.0
      %395 = vmatprep.mubr.f32.mxu0 0.0
      %396 = vmatmul.mubr.f32.gmra.mrb[0].mxu0 %v327
      %v397 = vpop.f32.mrb[0].mxu0
      %v398 = vadd.f32 0.0, %v397
      %v399 = vpop.f32.mrb[0].mxu0
      %400 = vdwg.mxu0
      %v401 = vsel %vm159, %v398, -inf
      %402 = vmax.xlane.f32.xlu0 %v401
      %v403 = vpop.xlane.xlu0 %402
      %v404 = vsub.f32 %v398, %v403
      %v405 = vmul.f32 %v404, 1.442695
      %v406 = vpow.pop %v405
      %v407 = vsel %vm159, %v406, 0.0
      %408 = vadd.xlane.f32.xlu0 %v407
      %v409 = vpop.xlane.xlu0 %408
      %v410 = vrcp.pop %v409
      %v411 = vmul.f32 %v406, %v410
      %412 = vrot.lane.b32.xlu0 %v157, 88
      %v413 = vpop.permute.xlu0 %412
      %v416 = vsel %vm159, %v411, 0
      %418 = vmatprep.subr.mxu0 0.0
      %419 = vmatpush1.msra.mxu0 %v413
      %420 = vmatprep.subr.mxu0 0.0
      %421 = vmatpush1.msra.mxu0 0.0
      %422 = vmatprep.subr.mxu0 0.0
      %423 = vmatpush1.msra.mxu0 0.0
      %424 = vmatprep.subr.mxu0 0.0
      %425 = vmatpush1.msra.mxu0 0.0
      %426 = vmatprep.subr.mxu0 0.0
      %427 = vmatpush1.msra.mxu0 0.0
      %428 = vmatprep.subr.mxu0 0.0
      %429 = vmatpush1.msra.mxu0 0.0
      %430 = vmatprep.subr.mxu0 0.0
      %431 = vmatpush1.msra.mxu0 0.0
      %432 = vmatprep.subr.mxu0 0.0
      %433 = vmatpush1.msra.mxu0 0.0
      %434 = vmatprep.subr.mxu0 0.0
      %435 = vmatpush1.msra.mxu0 0.0
      %436 = vmatprep.subr.mxu0 0.0
      %437 = vmatpush1.msra.mxu0 0.0
      %438 = vmatprep.subr.mxu0 0.0
      %439 = vmatpush1.msra.mxu0 0.0
      %440 = vmatprep.subr.mxu0 0.0
      %441 = vmatpush1.msra.mxu0 0.0
      %442 = vmatprep.subr.mxu0 0.0
      %443 = vmatpush1.msra.mxu0 0.0
      %444 = vmatprep.subr.mxu0 0.0
      %445 = vmatpush1.msra.mxu0 0.0
      %446 = vmatprep.subr.mxu0 0.0
      %447 = vmatpush1.msra.mxu0 0.0
      %448 = vmatprep.subr.mxu0 0.0
      %449 = vmatpush1.msra.mxu0 0.0
      %450 = vmatprep.subr.mxu0 0.0
      %451 = vmatpush1.msra.mxu0 0.0
      %452 = vmatprep.subr.mxu0 0.0
      %453 = vmatpush1.msra.mxu0 0.0
      %454 = vmatprep.subr.mxu0 0.0
      %455 = vmatpush1.msra.mxu0 0.0
      %456 = vmatprep.subr.mxu0 0.0
      %457 = vmatpush1.msra.mxu0 0.0
      %458 = vmatprep.subr.mxu0 0.0
      %459 = vmatpush1.msra.mxu0 0.0
      %460 = vmatprep.subr.mxu0 0.0
      %461 = vmatpush1.msra.mxu0 0.0
      %462 = vmatprep.subr.mxu0 0.0
      %463 = vmatpush1.msra.mxu0 0.0
      %464 = vmatprep.subr.mxu0 0.0
      %465 = vmatpush1.msra.mxu0 0.0
      %466 = vmatprep.subr.mxu0 0.0
      %467 = vmatpush1.msra.mxu0 0.0
      %468 = vmatprep.subr.mxu0 0.0
      %469 = vmatpush1.msra.mxu0 0.0
      %470 = vmatprep.subr.mxu0 0.0
      %471 = vmatpush1.msra.mxu0 0.0
      %472 = vmatprep.subr.mxu0 0.0
      %473 = vmatpush1.msra.mxu0 0.0
      %474 = vmatprep.subr.mxu0 0.0
      %475 = vmatpush1.msra.mxu0 0.0
      %476 = vmatprep.subr.mxu0 0.0
      %477 = vmatpush1.msra.mxu0 0.0
      %478 = vmatprep.subr.mxu0 0.0
      %479 = vmatpush1.msra.mxu0 0.0
      %480 = vmatprep.subr.mxu0 0.0
      %481 = vmatpush1.msra.mxu0 0.0
      %482 = vmatprep.mubr.f32.mxu0 0.0
      %483 = vmatmul.mubr.f32.gmra.mrb[0].mxu0 %v416
      %v484 = vpop.f32.mrb[0].mxu0
      %v485 = vadd.f32 0.0, %v484
      %v486 = vpop.f32.mrb[0].mxu0
      %487 = vdwg.mxu0
      %488 = vrot.lane.b32.xlu0 %v158, 112
      %v489 = vpop.permute.xlu0 %488
      %490 = vrot.lane.b32.xlu0 %v157, 112
      %v491 = vpop.permute.xlu0 %490
      %v492 = vsel %vm159, %v489, 0
      %v494 = vsel %vm159, %v491, 0
      %496 = vmatprep.subr.mxu0 0.0
      %497 = vmatpush1.xpose.msra.mxu0 %v494
      %498 = vmatprep.subr.mxu0 0.0
      %499 = vmatpush1.xpose.msra.mxu0 0.0
      %500 = vmatprep.subr.mxu0 0.0
      %501 = vmatpush1.xpose.msra.mxu0 0.0
      %502 = vmatprep.subr.mxu0 0.0
      %503 = vmatpush1.xpose.msra.mxu0 0.0
      %504 = vmatprep.subr.mxu0 0.0
      %505 = vmatpush1.xpose.msra.mxu0 0.0
      %506 = vmatprep.subr.mxu0 0.0
      %507 = vmatpush1.xpose.msra.mxu0 0.0
      %508 = vmatprep.subr.mxu0 0.0
      %509 = vmatpush1.xpose.msra.mxu0 0.0
      %510 = vmatprep.subr.mxu0 0.0
      %511 = vmatpush1.xpose.msra.mxu0 0.0
      %512 = vmatprep.subr.mxu0 0.0
      %513 = vmatpush1.xpose.msra.mxu0 0.0
      %514 = vmatprep.subr.mxu0 0.0
      %515 = vmatpush1.xpose.msra.mxu0 0.0
      %516 = vmatprep.subr.mxu0 0.0
      %517 = vmatpush1.xpose.msra.mxu0 0.0
      %518 = vmatprep.subr.mxu0 0.0
      %519 = vmatpush1.xpose.msra.mxu0 0.0
      %520 = vmatprep.subr.mxu0 0.0
      %521 = vmatpush1.xpose.msra.mxu0 0.0
      %522 = vmatprep.subr.mxu0 0.0
      %523 = vmatpush1.xpose.msra.mxu0 0.0
      %524 = vmatprep.subr.mxu0 0.0
      %525 = vmatpush1.xpose.msra.mxu0 0.0
      %526 = vmatprep.subr.mxu0 0.0
      %527 = vmatpush1.xpose.msra.mxu0 0.0
      %528 = vmatprep.subr.mxu0 0.0
      %529 = vmatpush1.xpose.msra.mxu0 0.0
      %530 = vmatprep.subr.mxu0 0.0
      %531 = vmatpush1.xpose.msra.mxu0 0.0
      %532 = vmatprep.subr.mxu0 0.0
      %533 = vmatpush1.xpose.msra.mxu0 0.0
      %534 = vmatprep.subr.mxu0 0.0
      %535 = vmatpush1.xpose.msra.mxu0 0.0
      %536 = vmatprep.subr.mxu0 0.0
      %537 = vmatpush1.xpose.msra.mxu0 0.0
      %538 = vmatprep.subr.mxu0 0.0
      %539 = vmatpush1.xpose.msra.mxu0 0.0
      %540 = vmatprep.subr.mxu0 0.0
      %541 = vmatpush1.xpose.msra.mxu0 0.0
      %542 = vmatprep.subr.mxu0 0.0
      %543 = vmatpush1.xpose.msra.mxu0 0.0
      %544 = vmatprep.subr.mxu0 0.0
      %545 = vmatpush1.xpose.msra.mxu0 0.0
      %546 = vmatprep.subr.mxu0 0.0
      %547 = vmatpush1.xpose.msra.mxu0 0.0
      %548 = vmatprep.subr.mxu0 0.0
      %549 = vmatpush1.xpose.msra.mxu0 0.0
      %550 = vmatprep.subr.mxu0 0.0
      %551 = vmatpush1.xpose.msra.mxu0 0.0
      %552 = vmatprep.subr.mxu0 0.0
      %553 = vmatpush1.xpose.msra.mxu0 0.0
      %554 = vmatprep.subr.mxu0 0.0
      %555 = vmatpush1.xpose.msra.mxu0 0.0
      %556 = vmatprep.subr.mxu0 0.0
      %557 = vmatpush1.xpose.msra.mxu0 0.0
      %558 = vmatprep.subr.mxu0 0.0
      %559 = vmatpush1.xpose.msra.mxu0 0.0
      %560 = vmatprep.mubr.f32.mxu0 0.0
      %561 = vmatmul.mubr.f32.gmra.mrb[0].mxu0 %v492
      %v562 = vpop.f32.mrb[0].mxu0
      %v563 = vadd.f32 0.0, %v562
      %v564 = vpop.f32.mrb[0].mxu0
      %565 = vdwg.mxu0
      %v566 = vsel %vm159, %v563, -inf
      %567 = vmax.xlane.f32.xlu0 %v566
      %v568 = vpop.xlane.xlu0 %567
      %v569 = vsub.f32 %v563, %v568
      %v570 = vmul.f32 %v569, 1.442695
      %v571 = vpow.pop %v570
      %v572 = vsel %vm159, %v571, 0.0
      %573 = vadd.xlane.f32.xlu0 %v572
      %v574 = vpop.xlane.xlu0 %573
      %v575 = vrcp.pop %v574
      %v576 = vmul.f32 %v571, %v575
      %577 = vrot.lane.b32.xlu0 %v157, 80
      %v578 = vpop.permute.xlu0 %577
      %v581 = vsel %vm159, %v576, 0
      %583 = vmatprep.subr.mxu0 0.0
      %584 = vmatpush1.msra.mxu0 %v578
      %585 = vmatprep.subr.mxu0 0.0
      %586 = vmatpush1.msra.mxu0 0.0
      %587 = vmatprep.subr.mxu0 0.0
      %588 = vmatpush1.msra.mxu0 0.0
      %589 = vmatprep.subr.mxu0 0.0
      %590 = vmatpush1.msra.mxu0 0.0
      %591 = vmatprep.subr.mxu0 0.0
      %592 = vmatpush1.msra.mxu0 0.0
      %593 = vmatprep.subr.mxu0 0.0
      %594 = vmatpush1.msra.mxu0 0.0
      %595 = vmatprep.subr.mxu0 0.0
      %596 = vmatpush1.msra.mxu0 0.0
      %597 = vmatprep.subr.mxu0 0.0
      %598 = vmatpush1.msra.mxu0 0.0
      %599 = vmatprep.subr.mxu0 0.0
      %600 = vmatpush1.msra.mxu0 0.0
      %601 = vmatprep.subr.mxu0 0.0
      %602 = vmatpush1.msra.mxu0 0.0
      %603 = vmatprep.subr.mxu0 0.0
      %604 = vmatpush1.msra.mxu0 0.0
      %605 = vmatprep.subr.mxu0 0.0
      %606 = vmatpush1.msra.mxu0 0.0
      %607 = vmatprep.subr.mxu0 0.0
      %608 = vmatpush1.msra.mxu0 0.0
      %609 = vmatprep.subr.mxu0 0.0
      %610 = vmatpush1.msra.mxu0 0.0
      %611 = vmatprep.subr.mxu0 0.0
      %612 = vmatpush1.msra.mxu0 0.0
      %613 = vmatprep.subr.mxu0 0.0
      %614 = vmatpush1.msra.mxu0 0.0
      %615 = vmatprep.subr.mxu0 0.0
      %616 = vmatpush1.msra.mxu0 0.0
      %617 = vmatprep.subr.mxu0 0.0
      %618 = vmatpush1.msra.mxu0 0.0
      %619 = vmatprep.subr.mxu0 0.0
      %620 = vmatpush1.msra.mxu0 0.0
      %621 = vmatprep.subr.mxu0 0.0
      %622 = vmatpush1.msra.mxu0 0.0
      %623 = vmatprep.subr.mxu0 0.0
      %624 = vmatpush1.msra.mxu0 0.0
      %625 = vmatprep.subr.mxu0 0.0
      %626 = vmatpush1.msra.mxu0 0.0
      %627 = vmatprep.subr.mxu0 0.0
      %628 = vmatpush1.msra.mxu0 0.0
      %629 = vmatprep.subr.mxu0 0.0
      %630 = vmatpush1.msra.mxu0 0.0
      %631 = vmatprep.subr.mxu0 0.0
      %632 = vmatpush1.msra.mxu0 0.0
      %633 = vmatprep.subr.mxu0 0.0
      %634 = vmatpush1.msra.mxu0 0.0
      %635 = vmatprep.subr.mxu0 0.0
      %636 = vmatpush1.msra.mxu0 0.0
      %637 = vmatprep.subr.mxu0 0.0
      %638 = vmatpush1.msra.mxu0 0.0
      %639 = vmatprep.subr.mxu0 0.0
      %640 = vmatpush1.msra.mxu0 0.0
      %641 = vmatprep.subr.mxu0 0.0
      %642 = vmatpush1.msra.mxu0 0.0
      %643 = vmatprep.subr.mxu0 0.0
      %644 = vmatpush1.msra.mxu0 0.0
      %645 = vmatprep.subr.mxu0 0.0
      %646 = vmatpush1.msra.mxu0 0.0
      %647 = vmatprep.mubr.f32.mxu0 0.0
      %648 = vmatmul.mubr.f32.gmra.mrb[0].mxu0 %v581
      %v649 = vpop.f32.mrb[0].mxu0
      %v650 = vadd.f32 0.0, %v649
      %v651 = vpop.f32.mrb[0].mxu0
      %652 = vdwg.mxu0
      %653 = vrot.lane.b32.xlu0 %v158, 104
      %v654 = vpop.permute.xlu0 %653
      %655 = vrot.lane.b32.xlu0 %v157, 104
      %v656 = vpop.permute.xlu0 %655
      %v657 = vsel %vm159, %v654, 0
      %v659 = vsel %vm159, %v656, 0
      %661 = vmatprep.subr.mxu0 0.0
      %662 = vmatpush1.xpose.msra.mxu0 %v659
      %663 = vmatprep.subr.mxu0 0.0
      %664 = vmatpush1.xpose.msra.mxu0 0.0
      %665 = vmatprep.subr.mxu0 0.0
      %666 = vmatpush1.xpose.msra.mxu0 0.0
      %667 = vmatprep.subr.mxu0 0.0
      %668 = vmatpush1.xpose.msra.mxu0 0.0
      %669 = vmatprep.subr.mxu0 0.0
      %670 = vmatpush1.xpose.msra.mxu0 0.0
      %671 = vmatprep.subr.mxu0 0.0
      %672 = vmatpush1.xpose.msra.mxu0 0.0
      %673 = vmatprep.subr.mxu0 0.0
      %674 = vmatpush1.xpose.msra.mxu0 0.0
      %675 = vmatprep.subr.mxu0 0.0
      %676 = vmatpush1.xpose.msra.mxu0 0.0
      %677 = vmatprep.subr.mxu0 0.0
      %678 = vmatpush1.xpose.msra.mxu0 0.0
      %679 = vmatprep.subr.mxu0 0.0
      %680 = vmatpush1.xpose.msra.mxu0 0.0
      %681 = vmatprep.subr.mxu0 0.0
      %682 = vmatpush1.xpose.msra.mxu0 0.0
      %683 = vmatprep.subr.mxu0 0.0
      %684 = vmatpush1.xpose.msra.mxu0 0.0
      %685 = vmatprep.subr.mxu0 0.0
      %686 = vmatpush1.xpose.msra.mxu0 0.0
      %687 = vmatprep.subr.mxu0 0.0
      %688 = vmatpush1.xpose.msra.mxu0 0.0
      %689 = vmatprep.subr.mxu0 0.0
      %690 = vmatpush1.xpose.msra.mxu0 0.0
      %691 = vmatprep.subr.mxu0 0.0
      %692 = vmatpush1.xpose.msra.mxu0 0.0
      %693 = vmatprep.subr.mxu0 0.0
      %694 = vmatpush1.xpose.msra.mxu0 0.0
      %695 = vmatprep.subr.mxu0 0.0
      %696 = vmatpush1.xpose.msra.mxu0 0.0
      %697 = vmatprep.subr.mxu0 0.0
      %698 = vmatpush1.xpose.msra.mxu0 0.0
      %699 = vmatprep.subr.mxu0 0.0
      %700 = vmatpush1.xpose.msra.mxu0 0.0
      %701 = vmatprep.subr.mxu0 0.0
      %702 = vmatpush1.xpose.msra.mxu0 0.0
      %703 = vmatprep.subr.mxu0 0.0
      %704 = vmatpush1.xpose.msra.mxu0 0.0
      %705 = vmatprep.subr.mxu0 0.0
      %706 = vmatpush1.xpose.msra.mxu0 0.0
      %707 = vmatprep.subr.mxu0 0.0
      %708 = vmatpush1.xpose.msra.mxu0 0.0
      %709 = vmatprep.subr.mxu0 0.0
      %710 = vmatpush1.xpose.msra.mxu0 0.0
      %711 = vmatprep.subr.mxu0 0.0
      %712 = vmatpush1.xpose.msra.mxu0 0.0
      %713 = vmatprep.subr.mxu0 0.0
      %714 = vmatpush1.xpose.msra.mxu0 0.0
      %715 = vmatprep.subr.mxu0 0.0
      %716 = vmatpush1.xpose.msra.mxu0 0.0
      %717 = vmatprep.subr.mxu0 0.0
      %718 = vmatpush1.xpose.msra.mxu0 0.0
      %719 = vmatprep.subr.mxu0 0.0
      %720 = vmatpush1.xpose.msra.mxu0 0.0
      %721 = vmatprep.subr.mxu0 0.0
      %722 = vmatpush1.xpose.msra.mxu0 0.0
      %723 = vmatprep.subr.mxu0 0.0
      %724 = vmatpush1.xpose.msra.mxu0 0.0
      %725 = vmatprep.mubr.f32.mxu0 0.0
      %726 = vmatmul.mubr.f32.gmra.mrb[0].mxu0 %v657
      %v727 = vpop.f32.mrb[0].mxu0
      %v728 = vadd.f32 0.0, %v727
      %v729 = vpop.f32.mrb[0].mxu0
      %730 = vdwg.mxu0
      %v731 = vsel %vm159, %v728, -inf
      %732 = vmax.xlane.f32.xlu0 %v731
      %v733 = vpop.xlane.xlu0 %732
      %v734 = vsub.f32 %v728, %v733
      %v735 = vmul.f32 %v734, 1.442695
      %v736 = vpow.pop %v735
      %v737 = vsel %vm159, %v736, 0.0
      %738 = vadd.xlane.f32.xlu0 %v737
      %v739 = vpop.xlane.xlu0 %738
      %v740 = vrcp.pop %v739
      %v741 = vmul.f32 %v736, %v740
      %742 = vrot.lane.b32.xlu0 %v157, 72
      %v743 = vpop.permute.xlu0 %742
      %v746 = vsel %vm159, %v741, 0
      %748 = vmatprep.subr.mxu0 0.0
      %749 = vmatpush1.msra.mxu0 %v743
      %750 = vmatprep.subr.mxu0 0.0
      %751 = vmatpush1.msra.mxu0 0.0
      %752 = vmatprep.subr.mxu0 0.0
      %753 = vmatpush1.msra.mxu0 0.0
      %754 = vmatprep.subr.mxu0 0.0
      %755 = vmatpush1.msra.mxu0 0.0
      %756 = vmatprep.subr.mxu0 0.0
      %757 = vmatpush1.msra.mxu0 0.0
      %758 = vmatprep.subr.mxu0 0.0
      %759 = vmatpush1.msra.mxu0 0.0
      %760 = vmatprep.subr.mxu0 0.0
      %761 = vmatpush1.msra.mxu0 0.0
      %762 = vmatprep.subr.mxu0 0.0
      %763 = vmatpush1.msra.mxu0 0.0
      %764 = vmatprep.subr.mxu0 0.0
      %765 = vmatpush1.msra.mxu0 0.0
      %766 = vmatprep.subr.mxu0 0.0
      %767 = vmatpush1.msra.mxu0 0.0
      %768 = vmatprep.subr.mxu0 0.0
      %769 = vmatpush1.msra.mxu0 0.0
      %770 = vmatprep.subr.mxu0 0.0
      %771 = vmatpush1.msra.mxu0 0.0
      %772 = vmatprep.subr.mxu0 0.0
      %773 = vmatpush1.msra.mxu0 0.0
      %774 = vmatprep.subr.mxu0 0.0
      %775 = vmatpush1.msra.mxu0 0.0
      %776 = vmatprep.subr.mxu0 0.0
      %777 = vmatpush1.msra.mxu0 0.0
      %778 = vmatprep.subr.mxu0 0.0
      %779 = vmatpush1.msra.mxu0 0.0
      %780 = vmatprep.subr.mxu0 0.0
      %781 = vmatpush1.msra.mxu0 0.0
      %782 = vmatprep.subr.mxu0 0.0
      %783 = vmatpush1.msra.mxu0 0.0
      %784 = vmatprep.subr.mxu0 0.0
      %785 = vmatpush1.msra.mxu0 0.0
      %786 = vmatprep.subr.mxu0 0.0
      %787 = vmatpush1.msra.mxu0 0.0
      %788 = vmatprep.subr.mxu0 0.0
      %789 = vmatpush1.msra.mxu0 0.0
      %790 = vmatprep.subr.mxu0 0.0
      %791 = vmatpush1.msra.mxu0 0.0
      %792 = vmatprep.subr.mxu0 0.0
      %793 = vmatpush1.msra.mxu0 0.0
      %794 = vmatprep.subr.mxu0 0.0
      %795 = vmatpush1.msra.mxu0 0.0
      %796 = vmatprep.subr.mxu0 0.0
      %797 = vmatpush1.msra.mxu0 0.0
      %798 = vmatprep.subr.mxu0 0.0
      %799 = vmatpush1.msra.mxu0 0.0
      %800 = vmatprep.subr.mxu0 0.0
      %801 = vmatpush1.msra.mxu0 0.0
      %802 = vmatprep.subr.mxu0 0.0
      %803 = vmatpush1.msra.mxu0 0.0
      %804 = vmatprep.subr.mxu0 0.0
      %805 = vmatpush1.msra.mxu0 0.0
      %806 = vmatprep.subr.mxu0 0.0
      %807 = vmatpush1.msra.mxu0 0.0
      %808 = vmatprep.subr.mxu0 0.0
      %809 = vmatpush1.msra.mxu0 0.0
      %810 = vmatprep.subr.mxu0 0.0
      %811 = vmatpush1.msra.mxu0 0.0
      %812 = vmatprep.mubr.f32.mxu0 0.0
      %813 = vmatmul.mubr.f32.gmra.mrb[0].mxu0 %v746
      %v814 = vpop.f32.mrb[0].mxu0
      %v815 = vadd.f32 0.0, %v814
      %v816 = vpop.f32.mrb[0].mxu0
      %817 = vdwg.mxu0
      %819 = vrot.lane.b32.xlu0 %v485, 8
      %v820 = vpop.permute.xlu0 %819
      %823 = vrot.lane.b32.xlu0 %v650, 16
      %v824 = vpop.permute.xlu0 %823
      %827 = vrot.lane.b32.xlu0 %v815, 24
      %v828 = vpop.permute.xlu0 %827
      %v830 = vsel %vm159, %v320, %v820
      %vm831 = vcmask 130048
      %v832 = vsel %vm831, %v830, %v824
      %vm833 = vcmask 195584
      %v834 = vsel %vm833, %v832, %v828
      %vm835 = vcmask 261120
      %836 = vst.msk [vmem:[%s155] sm:$0xff] %vm835, %v834
      %p837 = scmp.lt.s32.totalorder %s13, 1
      %s838 = scalar_select %p837, %s13, 1
      %s839 = smul.addr %s838, 8
      %s840 = scalar_lea.vmem %s2, %s839
      // Predicated region
      $region29: #{decoder_forward.23} parent=27 // pred_check
        %p841 = pneg %p83
      $region30: #{decoder_forward.23} parent=27 // pred_check_branch
        %843 = sbr.rel (%p841) target = $region32
      $region31: #{decoder_forward.23} parent=27 // pred_region
        _
      $region32: #{decoder_forward.23} parent=27 // pred_fallthru
        _
    $region28: #{decoder_forward.23} parent=5 // pred_fallthru
      _
    %p844 = scmp.le.s32.totalorder 2, %s8
    // Predicated region
    $region33: #{decoder_forward.23} parent=5 // pred_check
      %p845 = pneg %p844
    $region34: #{decoder_forward.23} parent=5 // pred_check_branch
      %847 = sbr.rel (%p845) target = $region36
    $region35: #{decoder_forward.23} parent=5 // pred_region
      %s848 = ssub.s32 %s8, 2
      // Predicated region
      $region37: #{decoder_forward.23} parent=35 // pred_check
        %p849 = pneg %p89
      $region38: #{decoder_forward.23} parent=35 // pred_check_branch
        %851 = sbr.rel (%p849) target = $region40
      $region39: #{decoder_forward.23} parent=35 // pred_region
        %p852 = scmp.lt.s32.totalorder %s14, 1
        %s853 = scalar_select %p852, %s14, 1
        %s854 = smul.addr %s853, 8
        %s855 = scalar_lea.vmem %s2, %s854
      $region40: #{decoder_forward.23} parent=35 // pred_fallthru
        _
    $region36: #{decoder_forward.23} parent=5 // pred_fallthru
      _
  $region6: #{decoder_forward.23} parent=0 // loop_footer
    %s12 = sadd.s32 1, %s8
  $region7: #{decoder_forward.23} parent=0 // loop_footer_branch
    %7 = sbr.rel target = $region3
  $region8: #{decoder_forward.23} parent=0 // loop_exit
    _

// kernel: decoder_forward.35
$region0: #{decoder_forward.35}
  #allocation0 [shape = 'u32[]', space=smem, size = 0x4, offset = 0x4, fixed_abs, tag = 'smem constant byte address 0x4 - core index']
  #allocation1 [shape = 'u32[144,128]{1,0:T(1,128)}', space=vmem, size = 0x12000, scoped, tag = 'internal scratch']
  #allocation2 [shape = 'f32[16,32]{1,0:T(8,128)}', space=vmem, size = 0x2000, scoped, tag = 'scratch operand']
  %s0 = inlined_call_operand.vmem [shape: f32[16,64], index: 0, kind: input, shape index: {}]
  %s1 = inlined_call_operand.vmem [shape: f32[64,32], index: 1, kind: input, shape index: {}]
  %s2 = inlined_call_operand.vmem [shape: f32[1,32], index: 2, kind: input, shape index: {}]
  %s3 = inlined_call_operand.vmem [shape: f32[16,32], index: 3, kind: input, shape index: {}]
  %s4 = inlined_call_operand.vmem [shape: f32[1,32], index: 4, kind: input, shape index: {}]
  %s5 = inlined_call_operand.vmem [shape: f32[1,32], index: 5, kind: input, shape index: {}]
  %s6 = inlined_call_operand.hbm [shape: f32[16,32], index: 6, kind: output, shape index: {}]
  %s7 = sld [smem:[#allocation0]]
  $region42: #{decoder_forward.35} parent=0
    _
  %s9 = ssub.s32 1, %s7
  %s10 = scalar_select 0, %s9, %s7
  $region1: #{decoder_forward.35} parent=0
    #allocation3 [shape = 'u8[8192]{0}', space=vmem, size = 0x2000, scoped, tag = 'output window, operand 0, single buffered']
    #allocation4 [shape = 's32[1]{0}', space=sflag, size = 0x4, scoped, tag = 'scoped memory for decoder_forward.35']
    %11 = vsyncpa [#allocation4], 0
    // Predicated region
    $region2: #{decoder_forward.35} parent=1 // pred_check
      _
    $region3: #{decoder_forward.35} parent=1 // pred_check_branch
      %13 = sbr.rel (0) target = $region5
    $region4: #{decoder_forward.35} parent=1 // pred_region
      _
    $region5: #{decoder_forward.35} parent=1 // pred_fallthru
      _
    // Predicated region
    $region6: #{decoder_forward.35} parent=1 // pred_check
      _
    $region7: #{decoder_forward.35} parent=1 // pred_check_branch
      %15 = sbr.rel (0) target = $region9
    $region8: #{decoder_forward.35} parent=1 // pred_region
      _
    $region9: #{decoder_forward.35} parent=1 // pred_fallthru
      _
    // Predicated region
    $region10: #{decoder_forward.35} parent=1 // pred_check
      _
    $region11: #{decoder_forward.35} parent=1 // pred_check_branch
      %17 = sbr.rel (0) target = $region13
    $region12: #{decoder_forward.35} parent=1 // pred_region
      _
    $region13: #{decoder_forward.35} parent=1 // pred_fallthru
      _
    // Predicated region
    $region14: #{decoder_forward.35} parent=1 // pred_check
      _
    $region15: #{decoder_forward.35} parent=1 // pred_check_branch
      %19 = sbr.rel (0) target = $region17
    $region16: #{decoder_forward.35} parent=1 // pred_region
      _
    $region17: #{decoder_forward.35} parent=1 // pred_fallthru
      _
    // Predicated region
    $region18: #{decoder_forward.35} parent=1 // pred_check
      _
    $region19: #{decoder_forward.35} parent=1 // pred_check_branch
      %21 = sbr.rel (0) target = $region21
    $region20: #{decoder_forward.35} parent=1 // pred_region
      _
    $region21: #{decoder_forward.35} parent=1 // pred_fallthru
      _
    // Predicated region
    $region22: #{decoder_forward.35} parent=1 // pred_check
      _
    $region23: #{decoder_forward.35} parent=1 // pred_check_branch
      %23 = sbr.rel (0) target = $region25
    $region24: #{decoder_forward.35} parent=1 // pred_region
      _
    $region25: #{decoder_forward.35} parent=1 // pred_fallthru
      _
    %p24 = scmp.eq.s32.totalorder 0, 0
    // Predicated region
    $region26: #{decoder_forward.35} parent=1 // pred_check
      %p25 = pneg %p24
    $region27: #{decoder_forward.35} parent=1 // pred_check_branch
      %27 = sbr.rel (%p25) target = $region29
    $region28: #{decoder_forward.35} parent=1 // pred_region
      %vm28 = vcmask 261120
      %29 = vst.msk [vmem:[#allocation2] sm:$0xff] %vm28, 0.0
      %30 = vst.msk [vmem:[#allocation2 + $0x8] sm:$0xff] %vm28, 0.0
    $region29: #{decoder_forward.35} parent=1 // pred_fallthru
      _
    %v31 = vld [vmem:[#allocation2] sm:$0xff]
    %v32 = vld [vmem:[#allocation2 + $0x8] sm:$0xff]
    %v33 = vld [vmem:[%s0] sm:$0xff]
    %v34 = vld [vmem:[%s0 + $0x8] sm:$0xff]
    %v35 = vld [vmem:[%s1] sm:$0xff]
    %v36 = vld [vmem:[%s1 + $0x8] sm:$0xff]
    %v37 = vld [vmem:[%s1 + $0x10] sm:$0xff]
    %v38 = vld [vmem:[%s1 + $0x18] sm:$0xff]
    %v39 = vld [vmem:[%s1 + $0x20] sm:$0xff]
    %v40 = vld [vmem:[%s1 + $0x28] sm:$0xff]
    %v41 = vld [vmem:[%s1 + $0x30] sm:$0xff]
    %v42 = vld [vmem:[%s1 + $0x38] sm:$0xff]
    %vm43 = vcmask 523264
    %v45 = vsel %vm43, %v33, 0
    %v48 = vsel %vm43, %v34, 0
    %50 = vmatprep.subr.mxu0 0.0
    %51 = vmatpush1.msra.mxu0 %v35
    %52 = vmatprep.subr.mxu0 0.0
    %53 = vmatpush1.msra.mxu0 %v36
    %54 = vmatprep.subr.mxu0 0.0
    %55 = vmatpush1.msra.mxu0 %v37
    %56 = vmatprep.subr.mxu0 0.0
    %57 = vmatpush1.msra.mxu0 %v38
    %58 = vmatprep.subr.mxu0 0.0
    %59 = vmatpush1.msra.mxu0 %v39
    %60 = vmatprep.subr.mxu0 0.0
    %61 = vmatpush1.msra.mxu0 %v40
    %62 = vmatprep.subr.mxu0 0.0
    %63 = vmatpush1.msra.mxu0 %v41
    %64 = vmatprep.subr.mxu0 0.0
    %65 = vmatpush1.msra.mxu0 %v42
    %66 = vmatprep.subr.mxu0 0.0
    %67 = vmatpush1.msra.mxu0 0.0
    %68 = vmatprep.subr.mxu0 0.0
    %69 = vmatpush1.msra.mxu0 0.0
    %70 = vmatprep.subr.mxu0 0.0
    %71 = vmatpush1.msra.mxu0 0.0
    %72 = vmatprep.subr.mxu0 0.0
    %73 = vmatpush1.msra.mxu0 0.0
    %74 = vmatprep.subr.mxu0 0.0
    %75 = vmatpush1.msra.mxu0 0.0
    %76 = vmatprep.subr.mxu0 0.0
    %77 = vmatpush1.msra.mxu0 0.0
    %78 = vmatprep.subr.mxu0 0.0
    %79 = vmatpush1.msra.mxu0 0.0
    %80 = vmatprep.subr.mxu0 0.0
    %81 = vmatpush1.msra.mxu0 0.0
    %82 = vmatprep.subr.mxu0 0.0
    %83 = vmatpush1.msra.mxu0 0.0
    %84 = vmatprep.subr.mxu0 0.0
    %85 = vmatpush1.msra.mxu0 0.0
    %86 = vmatprep.subr.mxu0 0.0
    %87 = vmatpush1.msra.mxu0 0.0
    %88 = vmatprep.subr.mxu0 0.0
    %89 = vmatpush1.msra.mxu0 0.0
    %90 = vmatprep.subr.mxu0 0.0
    %91 = vmatpush1.msra.mxu0 0.0
    %92 = vmatprep.subr.mxu0 0.0
    %93 = vmatpush1.msra.mxu0 0.0
    %94 = vmatprep.subr.mxu0 0.0
    %95 = vmatpush1.msra.mxu0 0.0
    %96 = vmatprep.subr.mxu0 0.0
    %97 = vmatpush1.msra.mxu0 0.0
    %98 = vmatprep.subr.mxu0 0.0
    %99 = vmatpush1.msra.mxu0 0.0
    %100 = vmatprep.subr.mxu0 0.0
    %101 = vmatpush1.msra.mxu0 0.0
    %102 = vmatprep.subr.mxu0 0.0
    %103 = vmatpush1.msra.mxu0 0.0
    %104 = vmatprep.subr.mxu0 0.0
    %105 = vmatpush1.msra.mxu0 0.0
    %106 = vmatprep.subr.mxu0 0.0
    %107 = vmatpush1.msra.mxu0 0.0
    %108 = vmatprep.subr.mxu0 0.0
    %109 = vmatpush1.msra.mxu0 0.0
    %110 = vmatprep.subr.mxu0 0.0
    %111 = vmatpush1.msra.mxu0 0.0
    %112 = vmatprep.subr.mxu0 0.0
    %113 = vmatpush1.msra.mxu0 0.0
    %114 = vmatprep.mubr.f32.mxu0 0.0
    %115 = vmatmul.mubr.f32.gmra.mrb[0].mxu0 %v45
    %v116 = vpop.f32.mrb[0].mxu0
    %v117 = vadd.f32 0.0, %v116
    %v118 = vpop.f32.mrb[0].mxu0
    %119 = vmatprep.mubr.f32.mxu0 0.0
    %120 = vmatmul.mubr.f32.gmra.mrb[0].mxu0 %v48
    %v121 = vpop.f32.mrb[0].mxu0
    %v122 = vadd.f32 0.0, %v121
    %v123 = vpop.f32.mrb[0].mxu0
    %124 = vdwg.mxu0
    %v125 = vadd.f32 %v31, %v117
    %v126 = vadd.f32 %v32, %v122
    %vm127 = vcmask 261120
    %128 = vst.msk [vmem:[#allocation2] sm:$0xff] %vm127, %v125
    %129 = vst.msk [vmem:[#allocation2 + $0x8] sm:$0xff] %vm127, %v126
    // Predicated region
    $region30: #{decoder_forward.35} parent=1 // pred_check
      %p130 = pneg %p24
    $region31: #{decoder_forward.35} parent=1 // pred_check_branch
      %132 = sbr.rel (%p130) target = $region33
    $region32: #{decoder_forward.35} parent=1 // pred_region
      %v133 = vld [vmem:[#allocation2] sm:$0xff]
      %v134 = vld [vmem:[#allocation2 + $0x8] sm:$0xff]
      %v135 = vld [vmem:[%s2] sm:$0x1]
      %v137 = vlaneseq
      %v138 = vshrl.u32 %v137, 7
      %v139 = vsub.s32 0, %v138
      %v140 = vrot.slane %v135, %v139
      %v142 = vadd.f32 %v133, %v140
      %v143 = vadd.f32 %v134, %v140
      %v144 = vld [vmem:[%s3] sm:$0xff]
      %v145 = vld [vmem:[%s3 + $0x8] sm:$0xff]
      %v146 = vadd.f32 %v142, %v144
      %v147 = vadd.f32 %v143, %v145
      %v148 = vsel %vm127, %v146, 0.0
      %149 = vadd.xlane.f32.xlu0 %v148
      %v150 = vpop.xlane.xlu0 %149
      %v151 = vsel %vm127, %v147, 0.0
      %152 = vadd.xlane.f32.xlu0 %v151
      %v153 = vpop.xlane.xlu0 %152
      %v154 = vrcp.pop 32.0
      %v155 = vmul.f32 %v150, %v154
      %v156 = vmul.f32 %v153, %v154
      %v157 = vsub.f32 %v146, %v155
      %v158 = vsub.f32 %v147, %v156
      %v159 = vmul.f32 %v157, %v157
      %v160 = vmul.f32 %v158, %v158
      %v161 = vsel %vm127, %v159, 0.0
      %162 = vadd.xlane.f32.xlu0 %v161
      %v163 = vpop.xlane.xlu0 %162
      %v164 = vsel %vm127, %v160, 0.0
      %165 = vadd.xlane.f32.xlu0 %v164
      %v166 = vpop.xlane.xlu0 %165
      %v167 = vmul.f32 %v163, %v154
      %v168 = vmul.f32 %v166, %v154
      %v169 = vadd.f32 %v167, 1e-05
      %v170 = vadd.f32 %v168, 1e-05
      %v171 = vrsqrt.pop %v169
      %v172 = vrsqrt.pop %v170
      %v173 = vmul.f32 %v157, %v171
      %v174 = vmul.f32 %v158, %v172
      %v175 = vld [vmem:[%s4] sm:$0x1]
      %v177 = vlaneseq
      %v178 = vshrl.u32 %v177, 7
      %v179 = vsub.s32 0, %v178
      %v180 = vrot.slane %v175, %v179
      %v182 = vmul.f32 %v173, %v180
      %v183 = vmul.f32 %v174, %v180
      %v184 = vld [vmem:[%s5] sm:$0x1]
      %v186 = vlaneseq
      %v187 = vshrl.u32 %v186, 7
      %v188 = vsub.s32 0, %v187
      %v189 = vrot.slane %v184, %v188
      %v191 = vadd.f32 %v182, %v189
      %v192 = vadd.f32 %v183, %v189
      %193 = vst.msk [vmem:[#allocation3] sm:$0xff] %vm127, %v191
      %194 = vst.msk [vmem:[#allocation3 + $0x8] sm:$0xff] %vm127, %v192
    $region33: #{decoder_forward.35} parent=1 // pred_fallthru
      _
    // Predicated region
    $region34: #{decoder_forward.35} parent=1 // pred_check
      _
    $region35: #{decoder_forward.35} parent=1 // pred_check_branch
      %196 = sbr.rel (0) target = $region37
    $region36: #{decoder_forward.35} parent=1 // pred_region
      %s198 = ssub.s32 256, 256
      %199 = vsyncadd [#allocation4], %s198
      %s200 = sshll.u32 [#allocation3], 4
      %s201 = int_to_ptr.vmem [resolvable:$true] %s200
      %206 = dma.vmem_to_hbm [thread:$0]  %s201, 256, %s6, [#allocation4], 128, 128, 8
    $region37: #{decoder_forward.35} parent=1 // pred_fallthru
      _
    // Predicated region
    $region38: #{decoder_forward.35} parent=1 // pred_check
      _
    $region39: #{decoder_forward.35} parent=1 // pred_check_branch
      %208 = sbr.rel (0) target = $region41
    $region40: #{decoder_forward.35} parent=1 // pred_region
      %209 = dma.done [#allocation4], 256
    $region41: #{decoder_forward.35} parent=1 // pred_fallthru
      _
    %210 = vsyncpa [#allocation4], 1

</llo_original>
